<compile_context>
chip_gen: v7x
topology: tpu7x:2x2x1
jax: 0.10.0
libtpu: 0.0.40
codegen_flags: <defaults>
</compile_context>

<pallas_src>
import jax
import jax.numpy as jnp
from jax.experimental import pallas as pl
from jax.experimental.pallas import tpu as pltpu


def subword_emb_kernel(ids_ref, lens_ref, wemb_ref, tsum_ref, t0_ref, t2_ref,
                       bias_ref, out_ref):
    TV, L = ids_ref.shape
    Nsw = t0_ref.shape[0]

    ids = ids_ref[...]                          # (TV, L) int32
    lens = lens_ref[...]                        # (TV, 1) f32 (exact small ints)
    lens_i = lens.astype(jnp.int32)             # (TV, 1) int32

    # 1-row iota over the subword vocabulary (1 vreg of live state).
    iota_n = jax.lax.broadcasted_iota(jnp.int32, (1, Nsw), 1)

    # Sentinel-mask padded subword positions once: positions s >= len get id Nsw
    # (out of iota range), so the count loop needs no per-step mask multiply.
    pos_l = jax.lax.broadcasted_iota(jnp.int32, (1, L), 1)
    ids_m = jnp.where(pos_l < lens_i, ids, Nsw)                     # (TV, L)

    # Centre tap (dk = 0): c1[i, n] = #{ s < len[i] : ids[i, s] == n }.
    # Single (TV, Nsw) accumulator live across the unrolled loop.
    c1 = jnp.zeros((TV, Nsw), jnp.float32)
    for s in range(L):
        c1 = c1 + (ids_m[:, s:s + 1] == iota_n).astype(jnp.float32)

    # Boundary ids for the other two taps:
    #   last_id = ids[i, len-1]  (len >= 1 always)
    #   next_id = ids[i, len]    (only used when len < L)
    last_id = ids[:, 0:1]
    next_id = jnp.zeros((TV, 1), jnp.int32)
    for s in range(1, L):
        sid = ids[:, s:s + 1]
        last_id = jnp.where(lens_i > s, sid, last_id)
        next_id = jnp.where(lens_i == s, sid, next_id)
    has_next = (lens_i < L).astype(jnp.float32)                     # (TV, 1)

    # acc = c0 @ T0 + c1 @ T1 + c2 @ T2
    #     = c1 @ (T0+T1+T2) - onehot(last) @ T0
    #       - (onehot(first) - has_next * onehot(next)) @ T2
    # Each correction one-hot dies immediately after its dot (low live state).
    acc = jnp.dot(c1, tsum_ref[...], preferred_element_type=jnp.float32)
    oh_last = (last_id == iota_n).astype(jnp.float32)
    acc = acc - jnp.dot(oh_last, t0_ref[...], preferred_element_type=jnp.float32)
    oh_c2 = ((ids[:, 0:1] == iota_n).astype(jnp.float32)
             - has_next * (next_id == iota_n).astype(jnp.float32))
    acc = acc - jnp.dot(oh_c2, t2_ref[...], preferred_element_type=jnp.float32)

    # (sum_t mask_t * conv_t) / len  ==  acc / len + bias   (len * bias cancels)
    inv_len = pl.reciprocal(lens, approx=False)                     # (TV,1), cheap
    sw = acc * inv_len + bias_ref[...]                              # (1,E) broadcast
    # TODO(synk): nn.Dropout on sw_emb / word_emb is identity in eval mode.
    out_ref[...] = (wemb_ref[...] + sw).astype(out_ref.dtype)


def subword_embedding(ids, lens_f, word_emb, sw_table, conv_w, conv_b, *, tv=256):
    """ids:(V,L) int32, lens_f:(V,1) f32, word_emb:(V,E), sw_table:(Nsw,E),
    conv_w:(E_out,E_in,3) PyTorch Conv1d layout, conv_b:(E,)  ->  (V,E) f32."""
    V, L = ids.shape
    Nsw, E = sw_table.shape

    # Precompute T_k = sw_table @ W_k once (amortized over the whole vocab),
    # plus their sum for the centre-tap matmul.
    hp = jax.lax.Precision.HIGHEST
    w3 = jnp.transpose(conv_w, (2, 1, 0)).astype(jnp.float32)       # (3, E_in, E_out)
    t0 = jnp.dot(sw_table, w3[0], precision=hp)                     # (Nsw, E)
    t1 = jnp.dot(sw_table, w3[1], precision=hp)
    t2 = jnp.dot(sw_table, w3[2], precision=hp)
    tsum = t0 + t1 + t2
    bias2d = conv_b.reshape(1, E).astype(jnp.float32)

    # No padding of word_emb / output: grid = cdiv(V, tv), the last tile is a
    # partial block (OOB reads land in dropped rows, OOB writes are discarded),
    # so large vocabs avoid full (V,E) HBM->HBM pad/slice copies.
    n_tiles = pl.cdiv(V, tv)

    # TODO(synk): for a realistic subword vocab (Nsw >~ 1-2k, esp. on v7x's
    # 64 MiB VMEM) keep the tables in HBM (memory_space=pl.ANY) and switch to a
    # DMA row-gather per word tile; also single-buffer the grid-invariant table
    # specs (pipeline_mode=pl.Buffered(1)) and set vmem_limit_bytes for the
    # production shapes.
    out = pl.pallas_call(
        subword_emb_kernel,
        out_shape=jax.ShapeDtypeStruct((V, E), jnp.float32),
        grid_spec=pltpu.PrefetchScalarGridSpec(
            num_scalar_prefetch=0,
            grid=(n_tiles,),
            in_specs=[
                pl.BlockSpec((tv, L), lambda i: (i, 0)),        # subword-id tile
                pl.BlockSpec((tv, 1), lambda i: (i, 0)),        # lengths tile
                pl.BlockSpec((tv, E), lambda i: (i, 0)),        # word-emb tile
                pl.BlockSpec((Nsw, E), lambda i: (0, 0)),       # T0+T1+T2 (resident)
                pl.BlockSpec((Nsw, E), lambda i: (0, 0)),       # T0 (resident)
                pl.BlockSpec((Nsw, E), lambda i: (0, 0)),       # T2 (resident)
                pl.BlockSpec((1, E), lambda i: (0, 0)),         # conv bias
            ],
            out_specs=pl.BlockSpec((tv, E), lambda i: (i, 0)),
        ),
        compiler_params=pltpu.CompilerParams(
            dimension_semantics=("parallel",)),
    )(ids, lens_f, word_emb, tsum, t0, t2, bias2d)
    return out


def reference(ids, lens, word_emb, sw_table, conv_w, conv_b):
    """Plain-JAX mirror of the PyTorch forward (share_vocab == 4, eval)."""
    V, L = ids.shape
    sw = sw_table[ids]                                   # (V, L, E)
    x = jnp.transpose(sw, (0, 2, 1))                     # (V, E, L)  == NCL
    y = jax.lax.conv_general_dilated(
        x, conv_w, window_strides=(1,), padding=((1, 1),),
        dimension_numbers=("NCH", "OIH", "NCH"),
        precision=jax.lax.Precision.HIGHEST)
    y = y + conv_b[None, :, None]
    y = jnp.transpose(y, (0, 2, 1))                      # (V, L, E)
    mask = (jnp.arange(L)[None, :, None] < lens[:, None, None]).astype(jnp.float32)
    y = (y * mask).sum(axis=1)
    y = y / lens[:, None].astype(jnp.float32)
    return word_emb + y


if __name__ == "__main__":
    # V deliberately NOT a multiple of the vocab tile -> exercises the partial
    # boundary block (no wrapper-side padding / copies of the embedding).
    V, L, E, Nsw = 300, 8, 128, 128     # vocab, max subwords/word, emb size, #subword types
    key = jax.random.PRNGKey(0)
    k1, k2, k3, k4, k5, k6 = jax.random.split(key, 6)

    # word -> subword-id table, padded with id 0 past each word's length (as in PyTorch code)
    lens = jax.random.randint(k1, (V,), 1, L + 1)
    raw_ids = jax.random.randint(k2, (V, L), 0, Nsw)
    pad_mask = jnp.arange(L)[None, :] < lens[:, None]
    ids = jnp.where(pad_mask, raw_ids, 0).astype(jnp.int32)
    lens_f = lens.astype(jnp.float32).reshape(V, 1)

    # deterministic "parameters"
    word_emb = jax.random.normal(k3, (V, E), jnp.float32) * 0.1
    sw_table = jax.random.normal(k4, (Nsw, E), jnp.float32) * 0.1
    conv_w = jax.random.normal(k5, (E, E, 3), jnp.float32) * 0.05   # Conv1d weight (out, in, k)
    conv_b = jax.random.normal(k6, (E,), jnp.float32) * 0.01

    out = subword_embedding(ids, lens_f, word_emb, sw_table, conv_w, conv_b)
    out = jax.block_until_ready(out)

    ref = reference(ids, lens, word_emb, sw_table, conv_w, conv_b)
    assert out.shape == (V, E)
    assert jnp.allclose(out, ref, atol=1e-3, rtol=1e-3), float(jnp.abs(out - ref).max())

    print("KERNEL_OK")
</pallas_src>

<mosaic_0001>
module attributes {stable_mosaic.version = 11 : i64} {
  func.func @subword_emb_kernel(%arg0: i32, %arg1: memref<256x8xi32, #tpu.memory_space<vmem>>, %arg2: memref<256x1xf32, #tpu.memory_space<vmem>>, %arg3: memref<256x128xf32, #tpu.memory_space<vmem>>, %arg4: memref<128x128xf32, #tpu.memory_space<vmem>>, %arg5: memref<128x128xf32, #tpu.memory_space<vmem>>, %arg6: memref<128x128xf32, #tpu.memory_space<vmem>>, %arg7: memref<1x128xf32, #tpu.memory_space<vmem>>, %arg8: memref<256x128xf32, #tpu.memory_space<vmem>>) attributes {dimension_semantics = [#tpu.dimension_semantics<parallel>], iteration_bounds = array<i64: 2>, scalar_prefetch = 0 : i64, scratch_operands = 0 : i64, tpu.core_type = #tpu.core_type<tc>, window_params = [{transform_indices = @transform_0, window_bounds = array<i64: 256, 8>}, {transform_indices = @transform_1, window_bounds = array<i64: 256, 1>}, {transform_indices = @transform_2, window_bounds = array<i64: 256, 128>}, {pipeline_mode = #tpu.pipeline_mode<synchronous>, transform_indices = @transform_3, window_bounds = array<i64: 128, 128>}, {pipeline_mode = #tpu.pipeline_mode<synchronous>, transform_indices = @transform_4, window_bounds = array<i64: 128, 128>}, {pipeline_mode = #tpu.pipeline_mode<synchronous>, transform_indices = @transform_5, window_bounds = array<i64: 128, 128>}, {pipeline_mode = #tpu.pipeline_mode<synchronous>, transform_indices = @transform_6, window_bounds = array<i64: 1, 128>}, {transform_indices = @transform_7, window_bounds = array<i64: 256, 128>}]} {
    %c0 = arith.constant 0 : index
    %c0_0 = arith.constant 0 : index
    %0 = vector.load %arg1[%c0, %c0_0] : memref<256x8xi32, #tpu.memory_space<vmem>>, vector<256x8xi32>
    %c0_1 = arith.constant 0 : index
    %c0_2 = arith.constant 0 : index
    %1 = vector.load %arg2[%c0_1, %c0_2] : memref<256x1xf32, #tpu.memory_space<vmem>>, vector<256x1xf32>
    %2 = arith.fptosi %1 : vector<256x1xf32> to vector<256x1xi32>
    %3 = tpu.iota {dimensions = array<i32: 1>} : vector<1x128xi32>
    %4 = tpu.iota {dimensions = array<i32: 1>} : vector<1x8xi32>
    %5 = vector.broadcast %4 : vector<1x8xi32> to vector<256x8xi32>
    %6 = vector.broadcast %2 : vector<256x1xi32> to vector<256x8xi32>
    %7 = arith.cmpi slt, %5, %6 : vector<256x8xi32>
    %c128_i32 = arith.constant 128 : i32
    %8 = vector.broadcast %c128_i32 : i32 to vector<256x8xi32>
    %9 = arith.select %7, %0, %8 : vector<256x8xi1>, vector<256x8xi32>
    %cst = arith.constant 0.000000e+00 : f32
    %10 = vector.broadcast %cst : f32 to vector<256x128xf32>
    %11 = vector.extract_strided_slice %9 {offsets = [0, 0], sizes = [256, 1], strides = [1, 1]} : vector<256x8xi32> to vector<256x1xi32>
    %12 = vector.broadcast %11 : vector<256x1xi32> to vector<256x128xi32>
    %13 = vector.broadcast %3 : vector<1x128xi32> to vector<256x128xi32>
    %14 = arith.cmpi eq, %12, %13 : vector<256x128xi32>
    %15 = arith.extui %14 : vector<256x128xi1> to vector<256x128xi32>
    %16 = arith.sitofp %15 : vector<256x128xi32> to vector<256x128xf32>
    %17 = arith.addf %10, %16 : vector<256x128xf32>
    %18 = vector.extract_strided_slice %9 {offsets = [0, 1], sizes = [256, 1], strides = [1, 1]} : vector<256x8xi32> to vector<256x1xi32>
    %19 = vector.broadcast %18 : vector<256x1xi32> to vector<256x128xi32>
    %20 = vector.broadcast %3 : vector<1x128xi32> to vector<256x128xi32>
    %21 = arith.cmpi eq, %19, %20 : vector<256x128xi32>
    %22 = arith.extui %21 : vector<256x128xi1> to vector<256x128xi32>
    %23 = arith.sitofp %22 : vector<256x128xi32> to vector<256x128xf32>
    %24 = arith.addf %17, %23 : vector<256x128xf32>
    %25 = vector.extract_strided_slice %9 {offsets = [0, 2], sizes = [256, 1], strides = [1, 1]} : vector<256x8xi32> to vector<256x1xi32>
    %26 = vector.broadcast %25 : vector<256x1xi32> to vector<256x128xi32>
    %27 = vector.broadcast %3 : vector<1x128xi32> to vector<256x128xi32>
    %28 = arith.cmpi eq, %26, %27 : vector<256x128xi32>
    %29 = arith.extui %28 : vector<256x128xi1> to vector<256x128xi32>
    %30 = arith.sitofp %29 : vector<256x128xi32> to vector<256x128xf32>
    %31 = arith.addf %24, %30 : vector<256x128xf32>
    %32 = vector.extract_strided_slice %9 {offsets = [0, 3], sizes = [256, 1], strides = [1, 1]} : vector<256x8xi32> to vector<256x1xi32>
    %33 = vector.broadcast %32 : vector<256x1xi32> to vector<256x128xi32>
    %34 = vector.broadcast %3 : vector<1x128xi32> to vector<256x128xi32>
    %35 = arith.cmpi eq, %33, %34 : vector<256x128xi32>
    %36 = arith.extui %35 : vector<256x128xi1> to vector<256x128xi32>
    %37 = arith.sitofp %36 : vector<256x128xi32> to vector<256x128xf32>
    %38 = arith.addf %31, %37 : vector<256x128xf32>
    %39 = vector.extract_strided_slice %9 {offsets = [0, 4], sizes = [256, 1], strides = [1, 1]} : vector<256x8xi32> to vector<256x1xi32>
    %40 = vector.broadcast %39 : vector<256x1xi32> to vector<256x128xi32>
    %41 = vector.broadcast %3 : vector<1x128xi32> to vector<256x128xi32>
    %42 = arith.cmpi eq, %40, %41 : vector<256x128xi32>
    %43 = arith.extui %42 : vector<256x128xi1> to vector<256x128xi32>
    %44 = arith.sitofp %43 : vector<256x128xi32> to vector<256x128xf32>
    %45 = arith.addf %38, %44 : vector<256x128xf32>
    %46 = vector.extract_strided_slice %9 {offsets = [0, 5], sizes = [256, 1], strides = [1, 1]} : vector<256x8xi32> to vector<256x1xi32>
    %47 = vector.broadcast %46 : vector<256x1xi32> to vector<256x128xi32>
    %48 = vector.broadcast %3 : vector<1x128xi32> to vector<256x128xi32>
    %49 = arith.cmpi eq, %47, %48 : vector<256x128xi32>
    %50 = arith.extui %49 : vector<256x128xi1> to vector<256x128xi32>
    %51 = arith.sitofp %50 : vector<256x128xi32> to vector<256x128xf32>
    %52 = arith.addf %45, %51 : vector<256x128xf32>
    %53 = vector.extract_strided_slice %9 {offsets = [0, 6], sizes = [256, 1], strides = [1, 1]} : vector<256x8xi32> to vector<256x1xi32>
    %54 = vector.broadcast %53 : vector<256x1xi32> to vector<256x128xi32>
    %55 = vector.broadcast %3 : vector<1x128xi32> to vector<256x128xi32>
    %56 = arith.cmpi eq, %54, %55 : vector<256x128xi32>
    %57 = arith.extui %56 : vector<256x128xi1> to vector<256x128xi32>
    %58 = arith.sitofp %57 : vector<256x128xi32> to vector<256x128xf32>
    %59 = arith.addf %52, %58 : vector<256x128xf32>
    %60 = vector.extract_strided_slice %9 {offsets = [0, 7], sizes = [256, 1], strides = [1, 1]} : vector<256x8xi32> to vector<256x1xi32>
    %61 = vector.broadcast %60 : vector<256x1xi32> to vector<256x128xi32>
    %62 = vector.broadcast %3 : vector<1x128xi32> to vector<256x128xi32>
    %63 = arith.cmpi eq, %61, %62 : vector<256x128xi32>
    %64 = arith.extui %63 : vector<256x128xi1> to vector<256x128xi32>
    %65 = arith.sitofp %64 : vector<256x128xi32> to vector<256x128xf32>
    %66 = arith.addf %59, %65 : vector<256x128xf32>
    %67 = vector.extract_strided_slice %0 {offsets = [0, 0], sizes = [256, 1], strides = [1, 1]} : vector<256x8xi32> to vector<256x1xi32>
    %c0_i32 = arith.constant 0 : i32
    %68 = vector.broadcast %c0_i32 : i32 to vector<256x1xi32>
    %69 = vector.extract_strided_slice %0 {offsets = [0, 1], sizes = [256, 1], strides = [1, 1]} : vector<256x8xi32> to vector<256x1xi32>
    %c1_i32 = arith.constant 1 : i32
    %70 = vector.broadcast %c1_i32 : i32 to vector<256x1xi32>
    %71 = arith.cmpi sgt, %2, %70 : vector<256x1xi32>
    %72 = arith.select %71, %69, %67 : vector<256x1xi1>, vector<256x1xi32>
    %c1_i32_3 = arith.constant 1 : i32
    %73 = vector.broadcast %c1_i32_3 : i32 to vector<256x1xi32>
    %74 = arith.cmpi eq, %2, %73 : vector<256x1xi32>
    %75 = arith.select %74, %69, %68 : vector<256x1xi1>, vector<256x1xi32>
    %76 = vector.extract_strided_slice %0 {offsets = [0, 2], sizes = [256, 1], strides = [1, 1]} : vector<256x8xi32> to vector<256x1xi32>
    %c2_i32 = arith.constant 2 : i32
    %77 = vector.broadcast %c2_i32 : i32 to vector<256x1xi32>
    %78 = arith.cmpi sgt, %2, %77 : vector<256x1xi32>
    %79 = arith.select %78, %76, %72 : vector<256x1xi1>, vector<256x1xi32>
    %c2_i32_4 = arith.constant 2 : i32
    %80 = vector.broadcast %c2_i32_4 : i32 to vector<256x1xi32>
    %81 = arith.cmpi eq, %2, %80 : vector<256x1xi32>
    %82 = arith.select %81, %76, %75 : vector<256x1xi1>, vector<256x1xi32>
    %83 = vector.extract_strided_slice %0 {offsets = [0, 3], sizes = [256, 1], strides = [1, 1]} : vector<256x8xi32> to vector<256x1xi32>
    %c3_i32 = arith.constant 3 : i32
    %84 = vector.broadcast %c3_i32 : i32 to vector<256x1xi32>
    %85 = arith.cmpi sgt, %2, %84 : vector<256x1xi32>
    %86 = arith.select %85, %83, %79 : vector<256x1xi1>, vector<256x1xi32>
    %c3_i32_5 = arith.constant 3 : i32
    %87 = vector.broadcast %c3_i32_5 : i32 to vector<256x1xi32>
    %88 = arith.cmpi eq, %2, %87 : vector<256x1xi32>
    %89 = arith.select %88, %83, %82 : vector<256x1xi1>, vector<256x1xi32>
    %90 = vector.extract_strided_slice %0 {offsets = [0, 4], sizes = [256, 1], strides = [1, 1]} : vector<256x8xi32> to vector<256x1xi32>
    %c4_i32 = arith.constant 4 : i32
    %91 = vector.broadcast %c4_i32 : i32 to vector<256x1xi32>
    %92 = arith.cmpi sgt, %2, %91 : vector<256x1xi32>
    %93 = arith.select %92, %90, %86 : vector<256x1xi1>, vector<256x1xi32>
    %c4_i32_6 = arith.constant 4 : i32
    %94 = vector.broadcast %c4_i32_6 : i32 to vector<256x1xi32>
    %95 = arith.cmpi eq, %2, %94 : vector<256x1xi32>
    %96 = arith.select %95, %90, %89 : vector<256x1xi1>, vector<256x1xi32>
    %97 = vector.extract_strided_slice %0 {offsets = [0, 5], sizes = [256, 1], strides = [1, 1]} : vector<256x8xi32> to vector<256x1xi32>
    %c5_i32 = arith.constant 5 : i32
    %98 = vector.broadcast %c5_i32 : i32 to vector<256x1xi32>
    %99 = arith.cmpi sgt, %2, %98 : vector<256x1xi32>
    %100 = arith.select %99, %97, %93 : vector<256x1xi1>, vector<256x1xi32>
    %c5_i32_7 = arith.constant 5 : i32
    %101 = vector.broadcast %c5_i32_7 : i32 to vector<256x1xi32>
    %102 = arith.cmpi eq, %2, %101 : vector<256x1xi32>
    %103 = arith.select %102, %97, %96 : vector<256x1xi1>, vector<256x1xi32>
    %104 = vector.extract_strided_slice %0 {offsets = [0, 6], sizes = [256, 1], strides = [1, 1]} : vector<256x8xi32> to vector<256x1xi32>
    %c6_i32 = arith.constant 6 : i32
    %105 = vector.broadcast %c6_i32 : i32 to vector<256x1xi32>
    %106 = arith.cmpi sgt, %2, %105 : vector<256x1xi32>
    %107 = arith.select %106, %104, %100 : vector<256x1xi1>, vector<256x1xi32>
    %c6_i32_8 = arith.constant 6 : i32
    %108 = vector.broadcast %c6_i32_8 : i32 to vector<256x1xi32>
    %109 = arith.cmpi eq, %2, %108 : vector<256x1xi32>
    %110 = arith.select %109, %104, %103 : vector<256x1xi1>, vector<256x1xi32>
    %111 = vector.extract_strided_slice %0 {offsets = [0, 7], sizes = [256, 1], strides = [1, 1]} : vector<256x8xi32> to vector<256x1xi32>
    %c7_i32 = arith.constant 7 : i32
    %112 = vector.broadcast %c7_i32 : i32 to vector<256x1xi32>
    %113 = arith.cmpi sgt, %2, %112 : vector<256x1xi32>
    %114 = arith.select %113, %111, %107 : vector<256x1xi1>, vector<256x1xi32>
    %c7_i32_9 = arith.constant 7 : i32
    %115 = vector.broadcast %c7_i32_9 : i32 to vector<256x1xi32>
    %116 = arith.cmpi eq, %2, %115 : vector<256x1xi32>
    %117 = arith.select %116, %111, %110 : vector<256x1xi1>, vector<256x1xi32>
    %c8_i32 = arith.constant 8 : i32
    %118 = vector.broadcast %c8_i32 : i32 to vector<256x1xi32>
    %119 = arith.cmpi slt, %2, %118 : vector<256x1xi32>
    %120 = arith.extui %119 : vector<256x1xi1> to vector<256x1xi32>
    %121 = arith.sitofp %120 : vector<256x1xi32> to vector<256x1xf32>
    %c0_10 = arith.constant 0 : index
    %c0_11 = arith.constant 0 : index
    %122 = vector.load %arg4[%c0_10, %c0_11] : memref<128x128xf32, #tpu.memory_space<vmem>>, vector<128x128xf32>
    %cst_12 = arith.constant dense<0.000000e+00> : vector<256x128xf32>
    %123 = tpu.matmul %66, %122, %cst_12 {dimension_numbers = #tpu.dot_dimension_numbers<[1], [0], [0], [1], [0, 0, 1, 1], [], []>} : vector<256x128xf32>, vector<128x128xf32>, vector<256x128xf32> -> vector<256x128xf32>
    %124 = vector.broadcast %114 : vector<256x1xi32> to vector<256x128xi32>
    %125 = vector.broadcast %3 : vector<1x128xi32> to vector<256x128xi32>
    %126 = arith.cmpi eq, %124, %125 : vector<256x128xi32>
    %127 = arith.extui %126 : vector<256x128xi1> to vector<256x128xi32>
    %128 = arith.sitofp %127 : vector<256x128xi32> to vector<256x128xf32>
    %c0_13 = arith.constant 0 : index
    %c0_14 = arith.constant 0 : index
    %129 = vector.load %arg5[%c0_13, %c0_14] : memref<128x128xf32, #tpu.memory_space<vmem>>, vector<128x128xf32>
    %cst_15 = arith.constant dense<0.000000e+00> : vector<256x128xf32>
    %130 = tpu.matmul %128, %129, %cst_15 {dimension_numbers = #tpu.dot_dimension_numbers<[1], [0], [0], [1], [0, 0, 1, 1], [], []>} : vector<256x128xf32>, vector<128x128xf32>, vector<256x128xf32> -> vector<256x128xf32>
    %131 = arith.subf %123, %130 : vector<256x128xf32>
    %132 = vector.extract_strided_slice %0 {offsets = [0, 0], sizes = [256, 1], strides = [1, 1]} : vector<256x8xi32> to vector<256x1xi32>
    %133 = vector.broadcast %132 : vector<256x1xi32> to vector<256x128xi32>
    %134 = vector.broadcast %3 : vector<1x128xi32> to vector<256x128xi32>
    %135 = arith.cmpi eq, %133, %134 : vector<256x128xi32>
    %136 = arith.extui %135 : vector<256x128xi1> to vector<256x128xi32>
    %137 = arith.sitofp %136 : vector<256x128xi32> to vector<256x128xf32>
    %138 = vector.broadcast %117 : vector<256x1xi32> to vector<256x128xi32>
    %139 = vector.broadcast %3 : vector<1x128xi32> to vector<256x128xi32>
    %140 = arith.cmpi eq, %138, %139 : vector<256x128xi32>
    %141 = arith.extui %140 : vector<256x128xi1> to vector<256x128xi32>
    %142 = arith.sitofp %141 : vector<256x128xi32> to vector<256x128xf32>
    %143 = vector.broadcast %121 : vector<256x1xf32> to vector<256x128xf32>
    %144 = arith.mulf %143, %142 : vector<256x128xf32>
    %145 = arith.subf %137, %144 : vector<256x128xf32>
    %c0_16 = arith.constant 0 : index
    %c0_17 = arith.constant 0 : index
    %146 = vector.load %arg6[%c0_16, %c0_17] : memref<128x128xf32, #tpu.memory_space<vmem>>, vector<128x128xf32>
    %cst_18 = arith.constant dense<0.000000e+00> : vector<256x128xf32>
    %147 = tpu.matmul %145, %146, %cst_18 {dimension_numbers = #tpu.dot_dimension_numbers<[1], [0], [0], [1], [0, 0, 1, 1], [], []>} : vector<256x128xf32>, vector<128x128xf32>, vector<256x128xf32> -> vector<256x128xf32>
    %148 = arith.subf %131, %147 : vector<256x128xf32>
    %149 = tpu.reciprocal %1 : vector<256x1xf32> -> vector<256x1xf32>
    %150 = vector.broadcast %149 : vector<256x1xf32> to vector<256x128xf32>
    %151 = arith.mulf %148, %150 : vector<256x128xf32>
    %c0_19 = arith.constant 0 : index
    %c0_20 = arith.constant 0 : index
    %152 = vector.load %arg7[%c0_19, %c0_20] : memref<1x128xf32, #tpu.memory_space<vmem>>, vector<1x128xf32>
    %153 = vector.broadcast %152 : vector<1x128xf32> to vector<256x128xf32>
    %154 = arith.addf %151, %153 : vector<256x128xf32>
    %c0_21 = arith.constant 0 : index
    %c0_22 = arith.constant 0 : index
    %155 = vector.load %arg3[%c0_21, %c0_22] : memref<256x128xf32, #tpu.memory_space<vmem>>, vector<256x128xf32>
    %156 = arith.addf %155, %154 : vector<256x128xf32>
    %c0_23 = arith.constant 0 : index
    %c0_24 = arith.constant 0 : index
    %157 = vector.load %arg8[%c0_23, %c0_24] : memref<256x128xf32, #tpu.memory_space<vmem>>, vector<256x128xf32>
    tpu.vector_store %arg8[%c0_23, %c0_24], %156 {strides = array<i32>} : memref<256x128xf32, #tpu.memory_space<vmem>>, vector<256x128xf32>,
    return
  }
  func.func @transform_0(%arg0: i32) -> (i32, i32) {
    %c0_i32 = arith.constant 0 : i32
    %c0_i32_0 = arith.constant 0 : i32
    return %arg0, %c0_i32 : i32, i32
  }
  func.func @transform_1(%arg0: i32) -> (i32, i32) {
    %c0_i32 = arith.constant 0 : i32
    %c0_i32_0 = arith.constant 0 : i32
    return %arg0, %c0_i32 : i32, i32
  }
  func.func @transform_2(%arg0: i32) -> (i32, i32) {
    %c0_i32 = arith.constant 0 : i32
    %c0_i32_0 = arith.constant 0 : i32
    return %arg0, %c0_i32 : i32, i32
  }
  func.func @transform_3(%arg0: i32) -> (i32, i32) {
    %c0_i32 = arith.constant 0 : i32
    %c0_i32_0 = arith.constant 0 : i32
    %c0_i32_1 = arith.constant 0 : i32
    return %c0_i32, %c0_i32_0 : i32, i32
  }
  func.func @transform_4(%arg0: i32) -> (i32, i32) {
    %c0_i32 = arith.constant 0 : i32
    %c0_i32_0 = arith.constant 0 : i32
    %c0_i32_1 = arith.constant 0 : i32
    return %c0_i32, %c0_i32_0 : i32, i32
  }
  func.func @transform_5(%arg0: i32) -> (i32, i32) {
    %c0_i32 = arith.constant 0 : i32
    %c0_i32_0 = arith.constant 0 : i32
    %c0_i32_1 = arith.constant 0 : i32
    return %c0_i32, %c0_i32_0 : i32, i32
  }
  func.func @transform_6(%arg0: i32) -> (i32, i32) {
    %c0_i32 = arith.constant 0 : i32
    %c0_i32_0 = arith.constant 0 : i32
    %c0_i32_1 = arith.constant 0 : i32
    return %c0_i32, %c0_i32_0 : i32, i32
  }
  func.func @transform_7(%arg0: i32) -> (i32, i32) {
    %c0_i32 = arith.constant 0 : i32
    %c0_i32_0 = arith.constant 0 : i32
    return %arg0, %c0_i32 : i32, i32
  }
}

</mosaic_0001>

<llo_original>
// kernel: tpu_custom_call.1
$region0: #{tpu_custom_call.1}
  #allocation0 [shape = 'u32[]', space=smem, size = 0x4, offset = 0x4, fixed_abs, tag = 'smem constant byte address 0x4 - core index']
  #allocation1 [shape = 'u32[144,128]{1,0:T(1,128)}', space=vmem, size = 0x12000, scoped, tag = 'internal scratch']
  %s0 = inlined_call_operand.vmem [shape: s32[300,8], index: 0, kind: input, shape index: {}]
  %s1 = inlined_call_operand.vmem [shape: f32[300,1], index: 1, kind: input, shape index: {}]
  %s2 = inlined_call_operand.vmem [shape: f32[300,128], index: 2, kind: input, shape index: {}]
  %s3 = inlined_call_operand.vmem [shape: f32[128,128], index: 3, kind: input, shape index: {}]
  %s4 = inlined_call_operand.vmem [shape: f32[128,128], index: 4, kind: input, shape index: {}]
  %s5 = inlined_call_operand.hbm [shape: f32[128,128], index: 5, kind: input, shape index: {}]
  %s6 = inlined_call_operand.vmem [shape: f32[1,128], index: 6, kind: input, shape index: {}]
  %s7 = inlined_call_operand.hbm [shape: f32[300,128], index: 7, kind: output, shape index: {}]
  %s8 = sld [smem:[#allocation0]]
  $region65: #{tpu_custom_call.1} parent=0
    _
  %s10 = ssub.s32 1, %s8
  %s11 = scalar_select 0, %s10, %s8
  $region1: #{tpu_custom_call.1} parent=0
    #allocation2 [shape = 'u8[65536]{0}', space=vmem, size = 0x10000, scoped, tag = 'input window, operand 5, single buffered']
    #allocation3 [shape = 's32[2]{0}', space=sflag, size = 0x8, scoped, tag = 'scoped memory for tpu_custom_call.1']
    #allocation4 [shape = 's32[2]{0}', space=sflag, size = 0x8, scoped, tag = 'scoped memory for tpu_custom_call.1']
    #allocation5 [shape = 'u8[262144]{0}', space=vmem, size = 0x40000, scoped, tag = 'output window, operand 0']
    %12 = vsyncpa [#allocation3], 0
    %13 = vsyncpa [#allocation4], 0
    %s14 = scalar_lea.sflag [#allocation4], 1
    %15 = vsyncpa %s14, 0
    loop: start=0, step=1, limit=4
    $region2: #{tpu_custom_call.1} parent=1 // loop_pre_header
      _
    $region3: #{tpu_custom_call.1} parent=1 // loop_header
      %s17 = sphi 0, %s21
      %p18 = scmp.ge.s32.totalorder %s17, 4
      %s27 = sphi 0, %s29
      %s30 = sphi 0, %s27
      %s31 = sphi 0, %s30
      %s47 = sphi 0, %s31
      %s53 = sphi 0, %s55
      %s56 = sphi 0, %s53
      %s57 = sphi 0, %s56
      %s73 = sphi 0, %s57
      %s79 = sphi 0, %s81
      %s82 = sphi 0, %s79
      %s83 = sphi 0, %s82
      %s99 = sphi 0, %s83
      %s103 = sphi 0, %s103
      %s105 = sphi 0, %s103
      %s106 = sphi 0, %s105
      %s120 = sphi 0, %s106
      %s124 = sphi 0, %s124
      %s126 = sphi 0, %s124
      %s127 = sphi 0, %s126
      %s141 = sphi 0, %s127
      %s145 = sphi 0, %s145
      %s147 = sphi 0, %s145
      %s148 = sphi 0, %s147
      %s162 = sphi 0, %s148
      %s166 = sphi 0, %s166
      %s168 = sphi 0, %s166
      %s169 = sphi 0, %s168
      %s183 = sphi 0, %s169
      %s189 = sphi 0, %s191
      %s192 = sphi 0, %s189
      %s193 = sphi 0, %s192
      %s209 = sphi 0, %s193
    $region4: #{tpu_custom_call.1} parent=1 // loop_header_branch
      %20 = sbr.rel (%p18) target = $region8
    $region5: #{tpu_custom_call.1} parent=1 // loop_body
      %s22 = ssub.s32 %s17, 1
      %s23 = ssub.s32 %s17, 2
      %s24 = sadd.s32 %s17, 1
      %s25 = ssub.s32 %s17, %s24
      %p26 = scmp.eq.s32.totalorder %s25, 0
      %s28 = sadd.s32 %s27, 1
      %s29 = scalar_select %p26, %s27, %s28
      %p32 = pneg %p26
      %p33 = scmp.eq.s32.totalorder %s17, 1
      %p34 = por %p32, %p33
      %p35 = scmp.ne.s32.totalorder %s27, %s30
      %p36 = scmp.eq.s32.totalorder %s17, 0
      %p37 = por %p35, %p36
      %p38 = scmp.ne.s32.totalorder %s27, %s30
      %p39 = scmp.eq.s32.totalorder %s22, 1
      %p40 = por %p38, %p39
      %p41 = scmp.ne.s32.totalorder %s30, %s31
      %p42 = scmp.eq.s32.totalorder %s22, 0
      %p43 = por %p41, %p42
      %p44 = scmp.ne.s32.totalorder %s30, %s31
      %p45 = scmp.eq.s32.totalorder %s23, 1
      %p46 = por %p44, %p45
      %p48 = scmp.ne.s32.totalorder %s31, %s47
      %p49 = scmp.eq.s32.totalorder %s23, 0
      %p50 = por %p48, %p49
      %s51 = ssub.s32 %s17, %s24
      %p52 = scmp.eq.s32.totalorder %s51, 0
      %s54 = sadd.s32 %s53, 1
      %s55 = scalar_select %p52, %s53, %s54
      %p58 = pneg %p52
      %p59 = scmp.eq.s32.totalorder %s17, 1
      %p60 = por %p58, %p59
      %p61 = scmp.ne.s32.totalorder %s53, %s56
      %p62 = scmp.eq.s32.totalorder %s17, 0
      %p63 = por %p61, %p62
      %p64 = scmp.ne.s32.totalorder %s53, %s56
      %p65 = scmp.eq.s32.totalorder %s22, 1
      %p66 = por %p64, %p65
      %p67 = scmp.ne.s32.totalorder %s56, %s57
      %p68 = scmp.eq.s32.totalorder %s22, 0
      %p69 = por %p67, %p68
      %p70 = scmp.ne.s32.totalorder %s56, %s57
      %p71 = scmp.eq.s32.totalorder %s23, 1
      %p72 = por %p70, %p71
      %p74 = scmp.ne.s32.totalorder %s57, %s73
      %p75 = scmp.eq.s32.totalorder %s23, 0
      %p76 = por %p74, %p75
      %s77 = ssub.s32 %s17, %s24
      %p78 = scmp.eq.s32.totalorder %s77, 0
      %s80 = sadd.s32 %s79, 1
      %s81 = scalar_select %p78, %s79, %s80
      %p84 = pneg %p78
      %p85 = scmp.eq.s32.totalorder %s17, 1
      %p86 = por %p84, %p85
      %p87 = scmp.ne.s32.totalorder %s79, %s82
      %p88 = scmp.eq.s32.totalorder %s17, 0
      %p89 = por %p87, %p88
      %p90 = scmp.ne.s32.totalorder %s79, %s82
      %p91 = scmp.eq.s32.totalorder %s22, 1
      %p92 = por %p90, %p91
      %p93 = scmp.ne.s32.totalorder %s82, %s83
      %p94 = scmp.eq.s32.totalorder %s22, 0
      %p95 = por %p93, %p94
      %p96 = scmp.ne.s32.totalorder %s82, %s83
      %p97 = scmp.eq.s32.totalorder %s23, 1
      %p98 = por %p96, %p97
      %p100 = scmp.ne.s32.totalorder %s83, %s99
      %p101 = scmp.eq.s32.totalorder %s23, 0
      %p102 = por %p100, %p101
      %s104 = sadd.s32 %s103, 1
      %p107 = scmp.eq.s32.totalorder %s17, 1
      %p108 = scmp.ne.s32.totalorder %s103, %s105
      %p109 = scmp.eq.s32.totalorder %s17, 0
      %p110 = por %p108, %p109
      %p111 = scmp.ne.s32.totalorder %s103, %s105
      %p112 = scmp.eq.s32.totalorder %s22, 1
      %p113 = por %p111, %p112
      %p114 = scmp.ne.s32.totalorder %s105, %s106
      %p115 = scmp.eq.s32.totalorder %s22, 0
      %p116 = por %p114, %p115
      %p117 = scmp.ne.s32.totalorder %s105, %s106
      %p118 = scmp.eq.s32.totalorder %s23, 1
      %p119 = por %p117, %p118
      %p121 = scmp.ne.s32.totalorder %s106, %s120
      %p122 = scmp.eq.s32.totalorder %s23, 0
      %p123 = por %p121, %p122
      %s125 = sadd.s32 %s124, 1
      %p128 = scmp.eq.s32.totalorder %s17, 1
      %p129 = scmp.ne.s32.totalorder %s124, %s126
      %p130 = scmp.eq.s32.totalorder %s17, 0
      %p131 = por %p129, %p130
      %p132 = scmp.ne.s32.totalorder %s124, %s126
      %p133 = scmp.eq.s32.totalorder %s22, 1
      %p134 = por %p132, %p133
      %p135 = scmp.ne.s32.totalorder %s126, %s127
      %p136 = scmp.eq.s32.totalorder %s22, 0
      %p137 = por %p135, %p136
      %p138 = scmp.ne.s32.totalorder %s126, %s127
      %p139 = scmp.eq.s32.totalorder %s23, 1
      %p140 = por %p138, %p139
      %p142 = scmp.ne.s32.totalorder %s127, %s141
      %p143 = scmp.eq.s32.totalorder %s23, 0
      %p144 = por %p142, %p143
      %s146 = sadd.s32 %s145, 1
      %p149 = scmp.eq.s32.totalorder %s17, 1
      %p150 = scmp.ne.s32.totalorder %s145, %s147
      %p151 = scmp.eq.s32.totalorder %s17, 0
      %p152 = por %p150, %p151
      %p153 = scmp.ne.s32.totalorder %s145, %s147
      %p154 = scmp.eq.s32.totalorder %s22, 1
      %p155 = por %p153, %p154
      %p156 = scmp.ne.s32.totalorder %s147, %s148
      %p157 = scmp.eq.s32.totalorder %s22, 0
      %p158 = por %p156, %p157
      %p159 = scmp.ne.s32.totalorder %s147, %s148
      %p160 = scmp.eq.s32.totalorder %s23, 1
      %p161 = por %p159, %p160
      %p163 = scmp.ne.s32.totalorder %s148, %s162
      %p164 = scmp.eq.s32.totalorder %s23, 0
      %p165 = por %p163, %p164
      %s167 = sadd.s32 %s166, 1
      %p170 = scmp.eq.s32.totalorder %s17, 1
      %p171 = scmp.ne.s32.totalorder %s166, %s168
      %p172 = scmp.eq.s32.totalorder %s17, 0
      %p173 = por %p171, %p172
      %p174 = scmp.ne.s32.totalorder %s166, %s168
      %p175 = scmp.eq.s32.totalorder %s22, 1
      %p176 = por %p174, %p175
      %p177 = scmp.ne.s32.totalorder %s168, %s169
      %p178 = scmp.eq.s32.totalorder %s22, 0
      %p179 = por %p177, %p178
      %p180 = scmp.ne.s32.totalorder %s168, %s169
      %p181 = scmp.eq.s32.totalorder %s23, 1
      %p182 = por %p180, %p181
      %p184 = scmp.ne.s32.totalorder %s169, %s183
      %p185 = scmp.eq.s32.totalorder %s23, 0
      %p186 = por %p184, %p185
      %s187 = ssub.s32 %s17, %s24
      %p188 = scmp.eq.s32.totalorder %s187, 0
      %s190 = sadd.s32 %s189, 1
      %s191 = scalar_select %p188, %s189, %s190
      %p194 = pneg %p188
      %p195 = scmp.eq.s32.totalorder %s17, 1
      %p196 = por %p194, %p195
      %p197 = scmp.ne.s32.totalorder %s189, %s192
      %p198 = scmp.eq.s32.totalorder %s17, 0
      %p199 = por %p197, %p198
      %p200 = scmp.ne.s32.totalorder %s189, %s192
      %p201 = scmp.eq.s32.totalorder %s22, 1
      %p202 = por %p200, %p201
      %p203 = scmp.ne.s32.totalorder %s192, %s193
      %p204 = scmp.eq.s32.totalorder %s22, 0
      %p205 = por %p203, %p204
      %p206 = scmp.ne.s32.totalorder %s192, %s193
      %p207 = scmp.eq.s32.totalorder %s23, 1
      %p208 = por %p206, %p207
      %p210 = scmp.ne.s32.totalorder %s193, %s209
      %p211 = scmp.eq.s32.totalorder %s23, 0
      %p212 = por %p210, %p211
      %p213 = scmp.le.s32.totalorder 1, %s17
      %p214 = scmp.lt.s32.totalorder %s17, 3
      %p215 = pnand %p213, %p214
      %p216 = pneg %p215
      // Predicated region
      $region9: #{tpu_custom_call.1} parent=5 // pred_check
        _
      $region10: #{tpu_custom_call.1} parent=5 // pred_check_branch
        %218 = sbr.rel (%p215) target = $region12
      $region11: #{tpu_custom_call.1} parent=5 // pred_region
        %s219 = ssub.s32 %s17, 1
        // Predicated region
        $region13: #{tpu_custom_call.1} parent=11 // pred_check
          %p220 = pneg %p116
        $region14: #{tpu_custom_call.1} parent=11 // pred_check_branch
          %222 = sbr.rel (%p220) target = $region16
        $region15: #{tpu_custom_call.1} parent=11 // pred_region
          _
        $region16: #{tpu_custom_call.1} parent=11 // pred_fallthru
          _
        // Predicated region
        $region17: #{tpu_custom_call.1} parent=11 // pred_check
          %p223 = pneg %p137
        $region18: #{tpu_custom_call.1} parent=11 // pred_check_branch
          %225 = sbr.rel (%p223) target = $region20
        $region19: #{tpu_custom_call.1} parent=11 // pred_region
          _
        $region20: #{tpu_custom_call.1} parent=11 // pred_fallthru
          _
        // Predicated region
        $region21: #{tpu_custom_call.1} parent=11 // pred_check
          %p226 = pneg %p158
        $region22: #{tpu_custom_call.1} parent=11 // pred_check_branch
          %228 = sbr.rel (%p226) target = $region24
        $region23: #{tpu_custom_call.1} parent=11 // pred_region
          %s230 = ssub.s32 2048, 2048
          %231 = vsyncadd [#allocation3], %s230
          %s232 = sshll.u32 [#allocation2], 4
          %s233 = int_to_ptr.vmem [resolvable:$true] %s232
          %238 = dma.hbm_to_vmem [thread:$0]  %s5, 2048, %s233, [#allocation3], 128, 128, 8
        $region24: #{tpu_custom_call.1} parent=11 // pred_fallthru
          _
        // Predicated region
        $region25: #{tpu_custom_call.1} parent=11 // pred_check
          %p239 = pneg %p179
        $region26: #{tpu_custom_call.1} parent=11 // pred_check_branch
          %241 = sbr.rel (%p239) target = $region28
        $region27: #{tpu_custom_call.1} parent=11 // pred_region
          _
        $region28: #{tpu_custom_call.1} parent=11 // pred_fallthru
          _
      $region12: #{tpu_custom_call.1} parent=5 // pred_fallthru
        _
      %p242 = scmp.lt.s32.totalorder %s17, 2
      // Predicated region
      $region29: #{tpu_custom_call.1} parent=5 // pred_check
        %p243 = pneg %p242
      $region30: #{tpu_custom_call.1} parent=5 // pred_check_branch
        %245 = sbr.rel (%p243) target = $region32
      $region31: #{tpu_custom_call.1} parent=5 // pred_region
        // Predicated region
        $region33: #{tpu_custom_call.1} parent=31 // pred_check
          %p246 = pneg %p37
        $region34: #{tpu_custom_call.1} parent=31 // pred_check_branch
          %248 = sbr.rel (%p246) target = $region36
        $region35: #{tpu_custom_call.1} parent=31 // pred_region
          %s249 = smul.u32 32, %s17
          %s250 = ssub.s32 38, %s249
          %p251 = scmp.lt.s32.totalorder %s250, 32
          %s252 = scalar_select %p251, %s250, 32
          %s253 = smul.u32 128, %s252
          %p254 = scmp.lt.s32.totalorder %s249, 37
          %s255 = scalar_select %p254, %s249, 37
          %s256 = smul.addr %s255, 8
          %s257 = scalar_lea.vmem %s0, %s256
          %s258 = smul.u32 32, %s17
          %s259 = ssub.s32 38, %s258
          %p260 = scmp.lt.s32.totalorder %s259, 32
          %s261 = scalar_select %p260, %s259, 32
          %s262 = smul.u32 128, %s261
        $region36: #{tpu_custom_call.1} parent=31 // pred_fallthru
          _
        // Predicated region
        $region37: #{tpu_custom_call.1} parent=31 // pred_check
          %p263 = pneg %p63
        $region38: #{tpu_custom_call.1} parent=31 // pred_check_branch
          %265 = sbr.rel (%p263) target = $region40
        $region39: #{tpu_custom_call.1} parent=31 // pred_region
          %s266 = smul.u32 32, %s17
          %s267 = ssub.s32 38, %s266
          %p268 = scmp.lt.s32.totalorder %s267, 32
          %s269 = scalar_select %p268, %s267, 32
          %s270 = smul.u32 128, %s269
          %p271 = scmp.lt.s32.totalorder %s266, 37
          %s272 = scalar_select %p271, %s266, 37
          %s273 = smul.addr %s272, 8
          %s274 = scalar_lea.vmem %s1, %s273
          %s275 = smul.u32 32, %s17
          %s276 = ssub.s32 38, %s275
          %p277 = scmp.lt.s32.totalorder %s276, 32
          %s278 = scalar_select %p277, %s276, 32
          %s279 = smul.u32 128, %s278
        $region40: #{tpu_custom_call.1} parent=31 // pred_fallthru
          _
        // Predicated region
        $region41: #{tpu_custom_call.1} parent=31 // pred_check
          %p280 = pneg %p89
        $region42: #{tpu_custom_call.1} parent=31 // pred_check_branch
          %282 = sbr.rel (%p280) target = $region44
        $region43: #{tpu_custom_call.1} parent=31 // pred_region
          %s283 = smul.u32 32, %s17
          %s284 = ssub.s32 38, %s283
          %p285 = scmp.lt.s32.totalorder %s284, 32
          %s286 = scalar_select %p285, %s284, 32
          %s287 = smul.u32 128, %s286
          %p288 = scmp.lt.s32.totalorder %s283, 37
          %s289 = scalar_select %p288, %s283, 37
          %s290 = smul.addr %s289, 8
          %s291 = scalar_lea.vmem %s2, %s290
          %s292 = smul.u32 32, %s17
          %s293 = ssub.s32 38, %s292
          %p294 = scmp.lt.s32.totalorder %s293, 32
          %s295 = scalar_select %p294, %s293, 32
          %s296 = smul.u32 128, %s295
        $region44: #{tpu_custom_call.1} parent=31 // pred_fallthru
          _
      $region32: #{tpu_custom_call.1} parent=5 // pred_fallthru
        _
      %p297 = scmp.le.s32.totalorder 1, %s17
      %p298 = scmp.lt.s32.totalorder %s17, 3
      %p299 = pnand %p297, %p298
      %p300 = pneg %p299
      // Predicated region
      $region45: #{tpu_custom_call.1} parent=5 // pred_check
        _
      $region46: #{tpu_custom_call.1} parent=5 // pred_check_branch
        %302 = sbr.rel (%p299) target = $region48
      $region47: #{tpu_custom_call.1} parent=5 // pred_region
        %s303 = ssub.s32 %s17, 1
        // Predicated region
        $region49: #{tpu_custom_call.1} parent=47 // pred_check
          %p304 = pneg %p158
        $region50: #{tpu_custom_call.1} parent=47 // pred_check_branch
          %306 = sbr.rel (%p304) target = $region52
        $region51: #{tpu_custom_call.1} parent=47 // pred_region
          %307 = dma.done [#allocation3], 2048
        $region52: #{tpu_custom_call.1} parent=47 // pred_fallthru
          _
        %s308 = smul.u32 32, %s22
        %s309 = ssub.s32 38, %s308
        %p310 = scmp.lt.s32.totalorder %s309, 32
        %s311 = scalar_select %p310, %s309, 32
        %s312 = smul.u32 128, %s311
        %p313 = scmp.lt.s32.totalorder %s308, 37
        %s314 = scalar_select %p313, %s308, 37
        %s315 = smul.addr %s314, 8
        %s316 = scalar_lea.vmem %s0, %s315
        %p317 = pneg %p43
        %p318 = pneg %p40
        %s319 = smul.u32 32, %s22
        %s320 = ssub.s32 38, %s319
        %p321 = scmp.lt.s32.totalorder %s320, 32
        %s322 = scalar_select %p321, %s320, 32
        %s323 = smul.u32 128, %s322
        %p324 = scmp.lt.s32.totalorder %s319, 37
        %s325 = scalar_select %p324, %s319, 37
        %s326 = smul.addr %s325, 8
        %s327 = scalar_lea.vmem %s1, %s326
        %p328 = pneg %p69
        %p329 = pneg %p66
        %s330 = smul.u32 32, %s22
        %s331 = ssub.s32 38, %s330
        %p332 = scmp.lt.s32.totalorder %s331, 32
        %s333 = scalar_select %p332, %s331, 32
        %s334 = smul.u32 128, %s333
        %p335 = scmp.lt.s32.totalorder %s330, 37
        %s336 = scalar_select %p335, %s330, 37
        %s337 = smul.addr %s336, 8
        %s338 = scalar_lea.vmem %s2, %s337
        %p339 = pneg %p95
        %p340 = pneg %p92
        %p341 = pneg %p116
        %p342 = pneg %p113
        %p343 = pneg %p137
        %p344 = pneg %p134
        %p345 = pneg %p158
        %p346 = pneg %p155
        %p347 = pneg %p179
        %p348 = pneg %p176
        %p349 = pneg %p205
        %p350 = pneg %p202
        %s351 = sand.u32 %s192, 1
        %s352 = scalar_lea.sflag [#allocation4], %s351
        %s353 = sand.u32 %s192, 1
        %s354 = smul.addr %s353, 256
        %s355 = scalar_lea.vmem [#allocation5], %s354
        %s356 = smul.u32 32, %s22
        %s357 = ssub.s32 38, %s356
        %p358 = scmp.lt.s32.totalorder %s357, 32
        %s359 = scalar_select %p358, %s357, 32
        %s360 = smul.u32 128, %s359
        %p361 = scmp.lt.s32.totalorder %s356, 37
        %s362 = scalar_select %p361, %s356, 37
        %s363 = smul.addr %s362, 8
        %s364 = scalar_lea.vmem %s0, %s363
        %s365 = smul.u32 32, %s22
        %s366 = ssub.s32 38, %s365
        %p367 = scmp.lt.s32.totalorder %s366, 32
        %s368 = scalar_select %p367, %s366, 32
        %s369 = smul.u32 128, %s368
        %s370 = smul.u32 32, %s22
        %s371 = ssub.s32 38, %s370
        %p372 = scmp.lt.s32.totalorder %s371, 32
        %s373 = scalar_select %p372, %s371, 32
        %s374 = smul.u32 128, %s373
        %p375 = scmp.lt.s32.totalorder %s370, 37
        %s376 = scalar_select %p375, %s370, 37
        %s377 = smul.addr %s376, 8
        %s378 = scalar_lea.vmem %s1, %s377
        %s379 = smul.u32 32, %s22
        %s380 = ssub.s32 38, %s379
        %p381 = scmp.lt.s32.totalorder %s380, 32
        %s382 = scalar_select %p381, %s380, 32
        %s383 = smul.u32 128, %s382
        %s384 = smul.u32 32, %s22
        %s385 = ssub.s32 38, %s384
        %p386 = scmp.lt.s32.totalorder %s385, 32
        %s387 = scalar_select %p386, %s385, 32
        %s388 = smul.u32 128, %s387
        %p389 = scmp.lt.s32.totalorder %s384, 37
        %s390 = scalar_select %p389, %s384, 37
        %s391 = smul.addr %s390, 8
        %s392 = scalar_lea.vmem %s2, %s391
        %s393 = smul.u32 32, %s22
        %s394 = ssub.s32 38, %s393
        %p395 = scmp.lt.s32.totalorder %s394, 32
        %s396 = scalar_select %p395, %s394, 32
        %s397 = smul.u32 128, %s396
        %s398 = smul.u32 32, %s22
        %s399 = ssub.s32 38, %s398
        %p400 = scmp.lt.s32.totalorder %s399, 32
        %s401 = scalar_select %p400, %s399, 32
        %s402 = smul.u32 128, %s401
        %v403 = vld [vmem:[%s364] sm:$0xff]
        %v404 = vld [vmem:[%s364 + $0x8] sm:$0xff]
        %v405 = vld [vmem:[%s364 + $0x10] sm:$0xff]
        %v406 = vld [vmem:[%s364 + $0x18] sm:$0xff]
        %v407 = vld [vmem:[%s364 + $0x20] sm:$0xff]
        %v408 = vld [vmem:[%s364 + $0x28] sm:$0xff]
        %v409 = vld [vmem:[%s364 + $0x30] sm:$0xff]
        %v410 = vld [vmem:[%s364 + $0x38] sm:$0xff]
        %v411 = vld [vmem:[%s364 + $0x40] sm:$0xff]
        %v412 = vld [vmem:[%s364 + $0x48] sm:$0xff]
        %v413 = vld [vmem:[%s364 + $0x50] sm:$0xff]
        %v414 = vld [vmem:[%s364 + $0x58] sm:$0xff]
        %v415 = vld [vmem:[%s364 + $0x60] sm:$0xff]
        %v416 = vld [vmem:[%s364 + $0x68] sm:$0xff]
        %v417 = vld [vmem:[%s364 + $0x70] sm:$0xff]
        %v418 = vld [vmem:[%s364 + $0x78] sm:$0xff]
        %v419 = vld [vmem:[%s364 + $0x80] sm:$0xff]
        %v420 = vld [vmem:[%s364 + $0x88] sm:$0xff]
        %v421 = vld [vmem:[%s364 + $0x90] sm:$0xff]
        %v422 = vld [vmem:[%s364 + $0x98] sm:$0xff]
        %v423 = vld [vmem:[%s364 + $0xa0] sm:$0xff]
        %v424 = vld [vmem:[%s364 + $0xa8] sm:$0xff]
        %v425 = vld [vmem:[%s364 + $0xb0] sm:$0xff]
        %v426 = vld [vmem:[%s364 + $0xb8] sm:$0xff]
        %v427 = vld [vmem:[%s364 + $0xc0] sm:$0xff]
        %v428 = vld [vmem:[%s364 + $0xc8] sm:$0xff]
        %v429 = vld [vmem:[%s364 + $0xd0] sm:$0xff]
        %v430 = vld [vmem:[%s364 + $0xd8] sm:$0xff]
        %v431 = vld [vmem:[%s364 + $0xe0] sm:$0xff]
        %v432 = vld [vmem:[%s364 + $0xe8] sm:$0xff]
        %v433 = vld [vmem:[%s364 + $0xf0] sm:$0xff]
        %v434 = vld [vmem:[%s364 + $0xf8] sm:$0xff]
        %v435 = vld [vmem:[%s378] sm:$0xff]
        %v436 = vld [vmem:[%s378 + $0x8] sm:$0xff]
        %v437 = vld [vmem:[%s378 + $0x10] sm:$0xff]
        %v438 = vld [vmem:[%s378 + $0x18] sm:$0xff]
        %v439 = vld [vmem:[%s378 + $0x20] sm:$0xff]
        %v440 = vld [vmem:[%s378 + $0x28] sm:$0xff]
        %v441 = vld [vmem:[%s378 + $0x30] sm:$0xff]
        %v442 = vld [vmem:[%s378 + $0x38] sm:$0xff]
        %v443 = vld [vmem:[%s378 + $0x40] sm:$0xff]
        %v444 = vld [vmem:[%s378 + $0x48] sm:$0xff]
        %v445 = vld [vmem:[%s378 + $0x50] sm:$0xff]
        %v446 = vld [vmem:[%s378 + $0x58] sm:$0xff]
        %v447 = vld [vmem:[%s378 + $0x60] sm:$0xff]
        %v448 = vld [vmem:[%s378 + $0x68] sm:$0xff]
        %v449 = vld [vmem:[%s378 + $0x70] sm:$0xff]
        %v450 = vld [vmem:[%s378 + $0x78] sm:$0xff]
        %v451 = vld [vmem:[%s378 + $0x80] sm:$0xff]
        %v452 = vld [vmem:[%s378 + $0x88] sm:$0xff]
        %v453 = vld [vmem:[%s378 + $0x90] sm:$0xff]
        %v454 = vld [vmem:[%s378 + $0x98] sm:$0xff]
        %v455 = vld [vmem:[%s378 + $0xa0] sm:$0xff]
        %v456 = vld [vmem:[%s378 + $0xa8] sm:$0xff]
        %v457 = vld [vmem:[%s378 + $0xb0] sm:$0xff]
        %v458 = vld [vmem:[%s378 + $0xb8] sm:$0xff]
        %v459 = vld [vmem:[%s378 + $0xc0] sm:$0xff]
        %v460 = vld [vmem:[%s378 + $0xc8] sm:$0xff]
        %v461 = vld [vmem:[%s378 + $0xd0] sm:$0xff]
        %v462 = vld [vmem:[%s378 + $0xd8] sm:$0xff]
        %v463 = vld [vmem:[%s378 + $0xe0] sm:$0xff]
        %v464 = vld [vmem:[%s378 + $0xe8] sm:$0xff]
        %v465 = vld [vmem:[%s378 + $0xf0] sm:$0xff]
        %v466 = vld [vmem:[%s378 + $0xf8] sm:$0xff]
        %v467 = vcvt.f32.s32.to.zero.pseudo %v435
        %v468 = vcvt.f32.s32.to.zero.pseudo %v436
        %v469 = vcvt.f32.s32.to.zero.pseudo %v437
        %v470 = vcvt.f32.s32.to.zero.pseudo %v438
        %v471 = vcvt.f32.s32.to.zero.pseudo %v439
        %v472 = vcvt.f32.s32.to.zero.pseudo %v440
        %v473 = vcvt.f32.s32.to.zero.pseudo %v441
        %v474 = vcvt.f32.s32.to.zero.pseudo %v442
        %v475 = vcvt.f32.s32.to.zero.pseudo %v443
        %v476 = vcvt.f32.s32.to.zero.pseudo %v444
        %v477 = vcvt.f32.s32.to.zero.pseudo %v445
        %v478 = vcvt.f32.s32.to.zero.pseudo %v446
        %v479 = vcvt.f32.s32.to.zero.pseudo %v447
        %v480 = vcvt.f32.s32.to.zero.pseudo %v448
        %v481 = vcvt.f32.s32.to.zero.pseudo %v449
        %v482 = vcvt.f32.s32.to.zero.pseudo %v450
        %v483 = vcvt.f32.s32.to.zero.pseudo %v451
        %v484 = vcvt.f32.s32.to.zero.pseudo %v452
        %v485 = vcvt.f32.s32.to.zero.pseudo %v453
        %v486 = vcvt.f32.s32.to.zero.pseudo %v454
        %v487 = vcvt.f32.s32.to.zero.pseudo %v455
        %v488 = vcvt.f32.s32.to.zero.pseudo %v456
        %v489 = vcvt.f32.s32.to.zero.pseudo %v457
        %v490 = vcvt.f32.s32.to.zero.pseudo %v458
        %v491 = vcvt.f32.s32.to.zero.pseudo %v459
        %v492 = vcvt.f32.s32.to.zero.pseudo %v460
        %v493 = vcvt.f32.s32.to.zero.pseudo %v461
        %v494 = vcvt.f32.s32.to.zero.pseudo %v462
        %v495 = vcvt.f32.s32.to.zero.pseudo %v463
        %v496 = vcvt.f32.s32.to.zero.pseudo %v464
        %v497 = vcvt.f32.s32.to.zero.pseudo %v465
        %v498 = vcvt.f32.s32.to.zero.pseudo %v466
        %v499 = vlaneseq
        %v500 = vand.u32 %v499, 127
        %501 = vset.pattern.permute.xlu0 0
        %502 = vperm.xlu0 %501, %v467
        %v503 = vpop.permute.xlu0 %502
        %504 = vset.pattern.permute.xlu0 0
        %505 = vperm.xlu0 %504, %v468
        %v506 = vpop.permute.xlu0 %505
        %507 = vset.pattern.permute.xlu0 0
        %508 = vperm.xlu0 %507, %v469
        %v509 = vpop.permute.xlu0 %508
        %510 = vset.pattern.permute.xlu0 0
        %511 = vperm.xlu0 %510, %v470
        %v512 = vpop.permute.xlu0 %511
        %513 = vset.pattern.permute.xlu0 0
        %514 = vperm.xlu0 %513, %v471
        %v515 = vpop.permute.xlu0 %514
        %516 = vset.pattern.permute.xlu0 0
        %517 = vperm.xlu0 %516, %v472
        %v518 = vpop.permute.xlu0 %517
        %519 = vset.pattern.permute.xlu0 0
        %520 = vperm.xlu0 %519, %v473
        %v521 = vpop.permute.xlu0 %520
        %522 = vset.pattern.permute.xlu0 0
        %523 = vperm.xlu0 %522, %v474
        %v524 = vpop.permute.xlu0 %523
        %525 = vset.pattern.permute.xlu0 0
        %526 = vperm.xlu0 %525, %v475
        %v527 = vpop.permute.xlu0 %526
        %528 = vset.pattern.permute.xlu0 0
        %529 = vperm.xlu0 %528, %v476
        %v530 = vpop.permute.xlu0 %529
        %531 = vset.pattern.permute.xlu0 0
        %532 = vperm.xlu0 %531, %v477
        %v533 = vpop.permute.xlu0 %532
        %534 = vset.pattern.permute.xlu0 0
        %535 = vperm.xlu0 %534, %v478
        %v536 = vpop.permute.xlu0 %535
        %537 = vset.pattern.permute.xlu0 0
        %538 = vperm.xlu0 %537, %v479
        %v539 = vpop.permute.xlu0 %538
        %540 = vset.pattern.permute.xlu0 0
        %541 = vperm.xlu0 %540, %v480
        %v542 = vpop.permute.xlu0 %541
        %543 = vset.pattern.permute.xlu0 0
        %544 = vperm.xlu0 %543, %v481
        %v545 = vpop.permute.xlu0 %544
        %546 = vset.pattern.permute.xlu0 0
        %547 = vperm.xlu0 %546, %v482
        %v548 = vpop.permute.xlu0 %547
        %549 = vset.pattern.permute.xlu0 0
        %550 = vperm.xlu0 %549, %v483
        %v551 = vpop.permute.xlu0 %550
        %552 = vset.pattern.permute.xlu0 0
        %553 = vperm.xlu0 %552, %v484
        %v554 = vpop.permute.xlu0 %553
        %555 = vset.pattern.permute.xlu0 0
        %556 = vperm.xlu0 %555, %v485
        %v557 = vpop.permute.xlu0 %556
        %558 = vset.pattern.permute.xlu0 0
        %559 = vperm.xlu0 %558, %v486
        %v560 = vpop.permute.xlu0 %559
        %561 = vset.pattern.permute.xlu0 0
        %562 = vperm.xlu0 %561, %v487
        %v563 = vpop.permute.xlu0 %562
        %564 = vset.pattern.permute.xlu0 0
        %565 = vperm.xlu0 %564, %v488
        %v566 = vpop.permute.xlu0 %565
        %567 = vset.pattern.permute.xlu0 0
        %568 = vperm.xlu0 %567, %v489
        %v569 = vpop.permute.xlu0 %568
        %570 = vset.pattern.permute.xlu0 0
        %571 = vperm.xlu0 %570, %v490
        %v572 = vpop.permute.xlu0 %571
        %573 = vset.pattern.permute.xlu0 0
        %574 = vperm.xlu0 %573, %v491
        %v575 = vpop.permute.xlu0 %574
        %576 = vset.pattern.permute.xlu0 0
        %577 = vperm.xlu0 %576, %v492
        %v578 = vpop.permute.xlu0 %577
        %579 = vset.pattern.permute.xlu0 0
        %580 = vperm.xlu0 %579, %v493
        %v581 = vpop.permute.xlu0 %580
        %582 = vset.pattern.permute.xlu0 0
        %583 = vperm.xlu0 %582, %v494
        %v584 = vpop.permute.xlu0 %583
        %585 = vset.pattern.permute.xlu0 0
        %586 = vperm.xlu0 %585, %v495
        %v587 = vpop.permute.xlu0 %586
        %588 = vset.pattern.permute.xlu0 0
        %589 = vperm.xlu0 %588, %v496
        %v590 = vpop.permute.xlu0 %589
        %591 = vset.pattern.permute.xlu0 0
        %592 = vperm.xlu0 %591, %v497
        %v593 = vpop.permute.xlu0 %592
        %594 = vset.pattern.permute.xlu0 0
        %595 = vperm.xlu0 %594, %v498
        %v596 = vpop.permute.xlu0 %595
        %vm597 = vcmp.lt.s32.totalorder %v500, %v503
        %vm598 = vcmp.lt.s32.totalorder %v500, %v506
        %vm599 = vcmp.lt.s32.totalorder %v500, %v509
        %vm600 = vcmp.lt.s32.totalorder %v500, %v512
        %vm601 = vcmp.lt.s32.totalorder %v500, %v515
        %vm602 = vcmp.lt.s32.totalorder %v500, %v518
        %vm603 = vcmp.lt.s32.totalorder %v500, %v521
        %vm604 = vcmp.lt.s32.totalorder %v500, %v524
        %vm605 = vcmp.lt.s32.totalorder %v500, %v527
        %vm606 = vcmp.lt.s32.totalorder %v500, %v530
        %vm607 = vcmp.lt.s32.totalorder %v500, %v533
        %vm608 = vcmp.lt.s32.totalorder %v500, %v536
        %vm609 = vcmp.lt.s32.totalorder %v500, %v539
        %vm610 = vcmp.lt.s32.totalorder %v500, %v542
        %vm611 = vcmp.lt.s32.totalorder %v500, %v545
        %vm612 = vcmp.lt.s32.totalorder %v500, %v548
        %vm613 = vcmp.lt.s32.totalorder %v500, %v551
        %vm614 = vcmp.lt.s32.totalorder %v500, %v554
        %vm615 = vcmp.lt.s32.totalorder %v500, %v557
        %vm616 = vcmp.lt.s32.totalorder %v500, %v560
        %vm617 = vcmp.lt.s32.totalorder %v500, %v563
        %vm618 = vcmp.lt.s32.totalorder %v500, %v566
        %vm619 = vcmp.lt.s32.totalorder %v500, %v569
        %vm620 = vcmp.lt.s32.totalorder %v500, %v572
        %vm621 = vcmp.lt.s32.totalorder %v500, %v575
        %vm622 = vcmp.lt.s32.totalorder %v500, %v578
        %vm623 = vcmp.lt.s32.totalorder %v500, %v581
        %vm624 = vcmp.lt.s32.totalorder %v500, %v584
        %vm625 = vcmp.lt.s32.totalorder %v500, %v587
        %vm626 = vcmp.lt.s32.totalorder %v500, %v590
        %vm627 = vcmp.lt.s32.totalorder %v500, %v593
        %vm628 = vcmp.lt.s32.totalorder %v500, %v596
        %v629 = vsel %vm597, %v403, 128
        %v630 = vsel %vm598, %v404, 128
        %v631 = vsel %vm599, %v405, 128
        %v632 = vsel %vm600, %v406, 128
        %v633 = vsel %vm601, %v407, 128
        %v634 = vsel %vm602, %v408, 128
        %v635 = vsel %vm603, %v409, 128
        %v636 = vsel %vm604, %v410, 128
        %v637 = vsel %vm605, %v411, 128
        %v638 = vsel %vm606, %v412, 128
        %v639 = vsel %vm607, %v413, 128
        %v640 = vsel %vm608, %v414, 128
        %v641 = vsel %vm609, %v415, 128
        %v642 = vsel %vm610, %v416, 128
        %v643 = vsel %vm611, %v417, 128
        %v644 = vsel %vm612, %v418, 128
        %v645 = vsel %vm613, %v419, 128
        %v646 = vsel %vm614, %v420, 128
        %v647 = vsel %vm615, %v421, 128
        %v648 = vsel %vm616, %v422, 128
        %v649 = vsel %vm617, %v423, 128
        %v650 = vsel %vm618, %v424, 128
        %v651 = vsel %vm619, %v425, 128
        %v652 = vsel %vm620, %v426, 128
        %v653 = vsel %vm621, %v427, 128
        %v654 = vsel %vm622, %v428, 128
        %v655 = vsel %vm623, %v429, 128
        %v656 = vsel %vm624, %v430, 128
        %v657 = vsel %vm625, %v431, 128
        %v658 = vsel %vm626, %v432, 128
        %v659 = vsel %vm627, %v433, 128
        %v660 = vsel %vm628, %v434, 128
        %661 = vset.pattern.permute.xlu0 0
        %662 = vperm.xlu0 %661, %v629
        %v663 = vpop.permute.xlu0 %662
        %664 = vset.pattern.permute.xlu0 0
        %665 = vperm.xlu0 %664, %v630
        %v666 = vpop.permute.xlu0 %665
        %667 = vset.pattern.permute.xlu0 0
        %668 = vperm.xlu0 %667, %v631
        %v669 = vpop.permute.xlu0 %668
        %670 = vset.pattern.permute.xlu0 0
        %671 = vperm.xlu0 %670, %v632
        %v672 = vpop.permute.xlu0 %671
        %673 = vset.pattern.permute.xlu0 0
        %674 = vperm.xlu0 %673, %v633
        %v675 = vpop.permute.xlu0 %674
        %676 = vset.pattern.permute.xlu0 0
        %677 = vperm.xlu0 %676, %v634
        %v678 = vpop.permute.xlu0 %677
        %679 = vset.pattern.permute.xlu0 0
        %680 = vperm.xlu0 %679, %v635
        %v681 = vpop.permute.xlu0 %680
        %682 = vset.pattern.permute.xlu0 0
        %683 = vperm.xlu0 %682, %v636
        %v684 = vpop.permute.xlu0 %683
        %685 = vset.pattern.permute.xlu0 0
        %686 = vperm.xlu0 %685, %v637
        %v687 = vpop.permute.xlu0 %686
        %688 = vset.pattern.permute.xlu0 0
        %689 = vperm.xlu0 %688, %v638
        %v690 = vpop.permute.xlu0 %689
        %691 = vset.pattern.permute.xlu0 0
        %692 = vperm.xlu0 %691, %v639
        %v693 = vpop.permute.xlu0 %692
        %694 = vset.pattern.permute.xlu0 0
        %695 = vperm.xlu0 %694, %v640
        %v696 = vpop.permute.xlu0 %695
        %697 = vset.pattern.permute.xlu0 0
        %698 = vperm.xlu0 %697, %v641
        %v699 = vpop.permute.xlu0 %698
        %700 = vset.pattern.permute.xlu0 0
        %701 = vperm.xlu0 %700, %v642
        %v702 = vpop.permute.xlu0 %701
        %703 = vset.pattern.permute.xlu0 0
        %704 = vperm.xlu0 %703, %v643
        %v705 = vpop.permute.xlu0 %704
        %706 = vset.pattern.permute.xlu0 0
        %707 = vperm.xlu0 %706, %v644
        %v708 = vpop.permute.xlu0 %707
        %709 = vset.pattern.permute.xlu0 0
        %710 = vperm.xlu0 %709, %v645
        %v711 = vpop.permute.xlu0 %710
        %712 = vset.pattern.permute.xlu0 0
        %713 = vperm.xlu0 %712, %v646
        %v714 = vpop.permute.xlu0 %713
        %715 = vset.pattern.permute.xlu0 0
        %716 = vperm.xlu0 %715, %v647
        %v717 = vpop.permute.xlu0 %716
        %718 = vset.pattern.permute.xlu0 0
        %719 = vperm.xlu0 %718, %v648
        %v720 = vpop.permute.xlu0 %719
        %721 = vset.pattern.permute.xlu0 0
        %722 = vperm.xlu0 %721, %v649
        %v723 = vpop.permute.xlu0 %722
        %724 = vset.pattern.permute.xlu0 0
        %725 = vperm.xlu0 %724, %v650
        %v726 = vpop.permute.xlu0 %725
        %727 = vset.pattern.permute.xlu0 0
        %728 = vperm.xlu0 %727, %v651
        %v729 = vpop.permute.xlu0 %728
        %730 = vset.pattern.permute.xlu0 0
        %731 = vperm.xlu0 %730, %v652
        %v732 = vpop.permute.xlu0 %731
        %733 = vset.pattern.permute.xlu0 0
        %734 = vperm.xlu0 %733, %v653
        %v735 = vpop.permute.xlu0 %734
        %736 = vset.pattern.permute.xlu0 0
        %737 = vperm.xlu0 %736, %v654
        %v738 = vpop.permute.xlu0 %737
        %739 = vset.pattern.permute.xlu0 0
        %740 = vperm.xlu0 %739, %v655
        %v741 = vpop.permute.xlu0 %740
        %742 = vset.pattern.permute.xlu0 0
        %743 = vperm.xlu0 %742, %v656
        %v744 = vpop.permute.xlu0 %743
        %745 = vset.pattern.permute.xlu0 0
        %746 = vperm.xlu0 %745, %v657
        %v747 = vpop.permute.xlu0 %746
        %748 = vset.pattern.permute.xlu0 0
        %749 = vperm.xlu0 %748, %v658
        %v750 = vpop.permute.xlu0 %749
        %751 = vset.pattern.permute.xlu0 0
        %752 = vperm.xlu0 %751, %v659
        %v753 = vpop.permute.xlu0 %752
        %754 = vset.pattern.permute.xlu0 0
        %755 = vperm.xlu0 %754, %v660
        %v756 = vpop.permute.xlu0 %755
        %vm757 = vcmp.eq.s32.totalorder %v663, %v500
        %vm758 = vcmp.eq.s32.totalorder %v666, %v500
        %vm759 = vcmp.eq.s32.totalorder %v669, %v500
        %vm760 = vcmp.eq.s32.totalorder %v672, %v500
        %vm761 = vcmp.eq.s32.totalorder %v675, %v500
        %vm762 = vcmp.eq.s32.totalorder %v678, %v500
        %vm763 = vcmp.eq.s32.totalorder %v681, %v500
        %vm764 = vcmp.eq.s32.totalorder %v684, %v500
        %vm765 = vcmp.eq.s32.totalorder %v687, %v500
        %vm766 = vcmp.eq.s32.totalorder %v690, %v500
        %vm767 = vcmp.eq.s32.totalorder %v693, %v500
        %vm768 = vcmp.eq.s32.totalorder %v696, %v500
        %vm769 = vcmp.eq.s32.totalorder %v699, %v500
        %vm770 = vcmp.eq.s32.totalorder %v702, %v500
        %vm771 = vcmp.eq.s32.totalorder %v705, %v500
        %vm772 = vcmp.eq.s32.totalorder %v708, %v500
        %vm773 = vcmp.eq.s32.totalorder %v711, %v500
        %vm774 = vcmp.eq.s32.totalorder %v714, %v500
        %vm775 = vcmp.eq.s32.totalorder %v717, %v500
        %vm776 = vcmp.eq.s32.totalorder %v720, %v500
        %vm777 = vcmp.eq.s32.totalorder %v723, %v500
        %vm778 = vcmp.eq.s32.totalorder %v726, %v500
        %vm779 = vcmp.eq.s32.totalorder %v729, %v500
        %vm780 = vcmp.eq.s32.totalorder %v732, %v500
        %vm781 = vcmp.eq.s32.totalorder %v735, %v500
        %vm782 = vcmp.eq.s32.totalorder %v738, %v500
        %vm783 = vcmp.eq.s32.totalorder %v741, %v500
        %vm784 = vcmp.eq.s32.totalorder %v744, %v500
        %vm785 = vcmp.eq.s32.totalorder %v747, %v500
        %vm786 = vcmp.eq.s32.totalorder %v750, %v500
        %vm787 = vcmp.eq.s32.totalorder %v753, %v500
        %vm788 = vcmp.eq.s32.totalorder %v756, %v500
        %v789 = vsel %vm757, 1, 0
        %v790 = vsel %vm758, 1, 0
        %v791 = vsel %vm759, 1, 0
        %v792 = vsel %vm760, 1, 0
        %v793 = vsel %vm761, 1, 0
        %v794 = vsel %vm762, 1, 0
        %v795 = vsel %vm763, 1, 0
        %v796 = vsel %vm764, 1, 0
        %v797 = vsel %vm765, 1, 0
        %v798 = vsel %vm766, 1, 0
        %v799 = vsel %vm767, 1, 0
        %v800 = vsel %vm768, 1, 0
        %v801 = vsel %vm769, 1, 0
        %v802 = vsel %vm770, 1, 0
        %v803 = vsel %vm771, 1, 0
        %v804 = vsel %vm772, 1, 0
        %v805 = vsel %vm773, 1, 0
        %v806 = vsel %vm774, 1, 0
        %v807 = vsel %vm775, 1, 0
        %v808 = vsel %vm776, 1, 0
        %v809 = vsel %vm777, 1, 0
        %v810 = vsel %vm778, 1, 0
        %v811 = vsel %vm779, 1, 0
        %v812 = vsel %vm780, 1, 0
        %v813 = vsel %vm781, 1, 0
        %v814 = vsel %vm782, 1, 0
        %v815 = vsel %vm783, 1, 0
        %v816 = vsel %vm784, 1, 0
        %v817 = vsel %vm785, 1, 0
        %v818 = vsel %vm786, 1, 0
        %v819 = vsel %vm787, 1, 0
        %v820 = vsel %vm788, 1, 0
        %v821 = vcvt.s32.f32 %v789
        %v822 = vcvt.s32.f32 %v790
        %v823 = vcvt.s32.f32 %v791
        %v824 = vcvt.s32.f32 %v792
        %v825 = vcvt.s32.f32 %v793
        %v826 = vcvt.s32.f32 %v794
        %v827 = vcvt.s32.f32 %v795
        %v828 = vcvt.s32.f32 %v796
        %v829 = vcvt.s32.f32 %v797
        %v830 = vcvt.s32.f32 %v798
        %v831 = vcvt.s32.f32 %v799
        %v832 = vcvt.s32.f32 %v800
        %v833 = vcvt.s32.f32 %v801
        %v834 = vcvt.s32.f32 %v802
        %v835 = vcvt.s32.f32 %v803
        %v836 = vcvt.s32.f32 %v804
        %v837 = vcvt.s32.f32 %v805
        %v838 = vcvt.s32.f32 %v806
        %v839 = vcvt.s32.f32 %v807
        %v840 = vcvt.s32.f32 %v808
        %v841 = vcvt.s32.f32 %v809
        %v842 = vcvt.s32.f32 %v810
        %v843 = vcvt.s32.f32 %v811
        %v844 = vcvt.s32.f32 %v812
        %v845 = vcvt.s32.f32 %v813
        %v846 = vcvt.s32.f32 %v814
        %v847 = vcvt.s32.f32 %v815
        %v848 = vcvt.s32.f32 %v816
        %v849 = vcvt.s32.f32 %v817
        %v850 = vcvt.s32.f32 %v818
        %v851 = vcvt.s32.f32 %v819
        %v852 = vcvt.s32.f32 %v820
        %v853 = vadd.f32 %v821, 0.0
        %v854 = vadd.f32 %v822, 0.0
        %v855 = vadd.f32 %v823, 0.0
        %v856 = vadd.f32 %v824, 0.0
        %v857 = vadd.f32 %v825, 0.0
        %v858 = vadd.f32 %v826, 0.0
        %v859 = vadd.f32 %v827, 0.0
        %v860 = vadd.f32 %v828, 0.0
        %v861 = vadd.f32 %v829, 0.0
        %v862 = vadd.f32 %v830, 0.0
        %v863 = vadd.f32 %v831, 0.0
        %v864 = vadd.f32 %v832, 0.0
        %v865 = vadd.f32 %v833, 0.0
        %v866 = vadd.f32 %v834, 0.0
        %v867 = vadd.f32 %v835, 0.0
        %v868 = vadd.f32 %v836, 0.0
        %v869 = vadd.f32 %v837, 0.0
        %v870 = vadd.f32 %v838, 0.0
        %v871 = vadd.f32 %v839, 0.0
        %v872 = vadd.f32 %v840, 0.0
        %v873 = vadd.f32 %v841, 0.0
        %v874 = vadd.f32 %v842, 0.0
        %v875 = vadd.f32 %v843, 0.0
        %v876 = vadd.f32 %v844, 0.0
        %v877 = vadd.f32 %v845, 0.0
        %v878 = vadd.f32 %v846, 0.0
        %v879 = vadd.f32 %v847, 0.0
        %v880 = vadd.f32 %v848, 0.0
        %v881 = vadd.f32 %v849, 0.0
        %v882 = vadd.f32 %v850, 0.0
        %v883 = vadd.f32 %v851, 0.0
        %v884 = vadd.f32 %v852, 0.0
        %885 = vset.pattern.permute.xlu0 1
        %886 = vperm.xlu0 %885, %v629
        %v887 = vpop.permute.xlu0 %886
        %888 = vset.pattern.permute.xlu0 1
        %889 = vperm.xlu0 %888, %v630
        %v890 = vpop.permute.xlu0 %889
        %891 = vset.pattern.permute.xlu0 1
        %892 = vperm.xlu0 %891, %v631
        %v893 = vpop.permute.xlu0 %892
        %894 = vset.pattern.permute.xlu0 1
        %895 = vperm.xlu0 %894, %v632
        %v896 = vpop.permute.xlu0 %895
        %897 = vset.pattern.permute.xlu0 1
        %898 = vperm.xlu0 %897, %v633
        %v899 = vpop.permute.xlu0 %898
        %900 = vset.pattern.permute.xlu0 1
        %901 = vperm.xlu0 %900, %v634
        %v902 = vpop.permute.xlu0 %901
        %903 = vset.pattern.permute.xlu0 1
        %904 = vperm.xlu0 %903, %v635
        %v905 = vpop.permute.xlu0 %904
        %906 = vset.pattern.permute.xlu0 1
        %907 = vperm.xlu0 %906, %v636
        %v908 = vpop.permute.xlu0 %907
        %909 = vset.pattern.permute.xlu0 1
        %910 = vperm.xlu0 %909, %v637
        %v911 = vpop.permute.xlu0 %910
        %912 = vset.pattern.permute.xlu0 1
        %913 = vperm.xlu0 %912, %v638
        %v914 = vpop.permute.xlu0 %913
        %915 = vset.pattern.permute.xlu0 1
        %916 = vperm.xlu0 %915, %v639
        %v917 = vpop.permute.xlu0 %916
        %918 = vset.pattern.permute.xlu0 1
        %919 = vperm.xlu0 %918, %v640
        %v920 = vpop.permute.xlu0 %919
        %921 = vset.pattern.permute.xlu0 1
        %922 = vperm.xlu0 %921, %v641
        %v923 = vpop.permute.xlu0 %922
        %924 = vset.pattern.permute.xlu0 1
        %925 = vperm.xlu0 %924, %v642
        %v926 = vpop.permute.xlu0 %925
        %927 = vset.pattern.permute.xlu0 1
        %928 = vperm.xlu0 %927, %v643
        %v929 = vpop.permute.xlu0 %928
        %930 = vset.pattern.permute.xlu0 1
        %931 = vperm.xlu0 %930, %v644
        %v932 = vpop.permute.xlu0 %931
        %933 = vset.pattern.permute.xlu0 1
        %934 = vperm.xlu0 %933, %v645
        %v935 = vpop.permute.xlu0 %934
        %936 = vset.pattern.permute.xlu0 1
        %937 = vperm.xlu0 %936, %v646
        %v938 = vpop.permute.xlu0 %937
        %939 = vset.pattern.permute.xlu0 1
        %940 = vperm.xlu0 %939, %v647
        %v941 = vpop.permute.xlu0 %940
        %942 = vset.pattern.permute.xlu0 1
        %943 = vperm.xlu0 %942, %v648
        %v944 = vpop.permute.xlu0 %943
        %945 = vset.pattern.permute.xlu0 1
        %946 = vperm.xlu0 %945, %v649
        %v947 = vpop.permute.xlu0 %946
        %948 = vset.pattern.permute.xlu0 1
        %949 = vperm.xlu0 %948, %v650
        %v950 = vpop.permute.xlu0 %949
        %951 = vset.pattern.permute.xlu0 1
        %952 = vperm.xlu0 %951, %v651
        %v953 = vpop.permute.xlu0 %952
        %954 = vset.pattern.permute.xlu0 1
        %955 = vperm.xlu0 %954, %v652
        %v956 = vpop.permute.xlu0 %955
        %957 = vset.pattern.permute.xlu0 1
        %958 = vperm.xlu0 %957, %v653
        %v959 = vpop.permute.xlu0 %958
        %960 = vset.pattern.permute.xlu0 1
        %961 = vperm.xlu0 %960, %v654
        %v962 = vpop.permute.xlu0 %961
        %963 = vset.pattern.permute.xlu0 1
        %964 = vperm.xlu0 %963, %v655
        %v965 = vpop.permute.xlu0 %964
        %966 = vset.pattern.permute.xlu0 1
        %967 = vperm.xlu0 %966, %v656
        %v968 = vpop.permute.xlu0 %967
        %969 = vset.pattern.permute.xlu0 1
        %970 = vperm.xlu0 %969, %v657
        %v971 = vpop.permute.xlu0 %970
        %972 = vset.pattern.permute.xlu0 1
        %973 = vperm.xlu0 %972, %v658
        %v974 = vpop.permute.xlu0 %973
        %975 = vset.pattern.permute.xlu0 1
        %976 = vperm.xlu0 %975, %v659
        %v977 = vpop.permute.xlu0 %976
        %978 = vset.pattern.permute.xlu0 1
        %979 = vperm.xlu0 %978, %v660
        %v980 = vpop.permute.xlu0 %979
        %vm981 = vcmp.eq.s32.totalorder %v887, %v500
        %vm982 = vcmp.eq.s32.totalorder %v890, %v500
        %vm983 = vcmp.eq.s32.totalorder %v893, %v500
        %vm984 = vcmp.eq.s32.totalorder %v896, %v500
        %vm985 = vcmp.eq.s32.totalorder %v899, %v500
        %vm986 = vcmp.eq.s32.totalorder %v902, %v500
        %vm987 = vcmp.eq.s32.totalorder %v905, %v500
        %vm988 = vcmp.eq.s32.totalorder %v908, %v500
        %vm989 = vcmp.eq.s32.totalorder %v911, %v500
        %vm990 = vcmp.eq.s32.totalorder %v914, %v500
        %vm991 = vcmp.eq.s32.totalorder %v917, %v500
        %vm992 = vcmp.eq.s32.totalorder %v920, %v500
        %vm993 = vcmp.eq.s32.totalorder %v923, %v500
        %vm994 = vcmp.eq.s32.totalorder %v926, %v500
        %vm995 = vcmp.eq.s32.totalorder %v929, %v500
        %vm996 = vcmp.eq.s32.totalorder %v932, %v500
        %vm997 = vcmp.eq.s32.totalorder %v935, %v500
        %vm998 = vcmp.eq.s32.totalorder %v938, %v500
        %vm999 = vcmp.eq.s32.totalorder %v941, %v500
        %vm1000 = vcmp.eq.s32.totalorder %v944, %v500
        %vm1001 = vcmp.eq.s32.totalorder %v947, %v500
        %vm1002 = vcmp.eq.s32.totalorder %v950, %v500
        %vm1003 = vcmp.eq.s32.totalorder %v953, %v500
        %vm1004 = vcmp.eq.s32.totalorder %v956, %v500
        %vm1005 = vcmp.eq.s32.totalorder %v959, %v500
        %vm1006 = vcmp.eq.s32.totalorder %v962, %v500
        %vm1007 = vcmp.eq.s32.totalorder %v965, %v500
        %vm1008 = vcmp.eq.s32.totalorder %v968, %v500
        %vm1009 = vcmp.eq.s32.totalorder %v971, %v500
        %vm1010 = vcmp.eq.s32.totalorder %v974, %v500
        %vm1011 = vcmp.eq.s32.totalorder %v977, %v500
        %vm1012 = vcmp.eq.s32.totalorder %v980, %v500
        %v1013 = vsel %vm981, 1, 0
        %v1014 = vsel %vm982, 1, 0
        %v1015 = vsel %vm983, 1, 0
        %v1016 = vsel %vm984, 1, 0
        %v1017 = vsel %vm985, 1, 0
        %v1018 = vsel %vm986, 1, 0
        %v1019 = vsel %vm987, 1, 0
        %v1020 = vsel %vm988, 1, 0
        %v1021 = vsel %vm989, 1, 0
        %v1022 = vsel %vm990, 1, 0
        %v1023 = vsel %vm991, 1, 0
        %v1024 = vsel %vm992, 1, 0
        %v1025 = vsel %vm993, 1, 0
        %v1026 = vsel %vm994, 1, 0
        %v1027 = vsel %vm995, 1, 0
        %v1028 = vsel %vm996, 1, 0
        %v1029 = vsel %vm997, 1, 0
        %v1030 = vsel %vm998, 1, 0
        %v1031 = vsel %vm999, 1, 0
        %v1032 = vsel %vm1000, 1, 0
        %v1033 = vsel %vm1001, 1, 0
        %v1034 = vsel %vm1002, 1, 0
        %v1035 = vsel %vm1003, 1, 0
        %v1036 = vsel %vm1004, 1, 0
        %v1037 = vsel %vm1005, 1, 0
        %v1038 = vsel %vm1006, 1, 0
        %v1039 = vsel %vm1007, 1, 0
        %v1040 = vsel %vm1008, 1, 0
        %v1041 = vsel %vm1009, 1, 0
        %v1042 = vsel %vm1010, 1, 0
        %v1043 = vsel %vm1011, 1, 0
        %v1044 = vsel %vm1012, 1, 0
        %v1045 = vcvt.s32.f32 %v1013
        %v1046 = vcvt.s32.f32 %v1014
        %v1047 = vcvt.s32.f32 %v1015
        %v1048 = vcvt.s32.f32 %v1016
        %v1049 = vcvt.s32.f32 %v1017
        %v1050 = vcvt.s32.f32 %v1018
        %v1051 = vcvt.s32.f32 %v1019
        %v1052 = vcvt.s32.f32 %v1020
        %v1053 = vcvt.s32.f32 %v1021
        %v1054 = vcvt.s32.f32 %v1022
        %v1055 = vcvt.s32.f32 %v1023
        %v1056 = vcvt.s32.f32 %v1024
        %v1057 = vcvt.s32.f32 %v1025
        %v1058 = vcvt.s32.f32 %v1026
        %v1059 = vcvt.s32.f32 %v1027
        %v1060 = vcvt.s32.f32 %v1028
        %v1061 = vcvt.s32.f32 %v1029
        %v1062 = vcvt.s32.f32 %v1030
        %v1063 = vcvt.s32.f32 %v1031
        %v1064 = vcvt.s32.f32 %v1032
        %v1065 = vcvt.s32.f32 %v1033
        %v1066 = vcvt.s32.f32 %v1034
        %v1067 = vcvt.s32.f32 %v1035
        %v1068 = vcvt.s32.f32 %v1036
        %v1069 = vcvt.s32.f32 %v1037
        %v1070 = vcvt.s32.f32 %v1038
        %v1071 = vcvt.s32.f32 %v1039
        %v1072 = vcvt.s32.f32 %v1040
        %v1073 = vcvt.s32.f32 %v1041
        %v1074 = vcvt.s32.f32 %v1042
        %v1075 = vcvt.s32.f32 %v1043
        %v1076 = vcvt.s32.f32 %v1044
        %v1077 = vadd.f32 %v853, %v1045
        %v1078 = vadd.f32 %v854, %v1046
        %v1079 = vadd.f32 %v855, %v1047
        %v1080 = vadd.f32 %v856, %v1048
        %v1081 = vadd.f32 %v857, %v1049
        %v1082 = vadd.f32 %v858, %v1050
        %v1083 = vadd.f32 %v859, %v1051
        %v1084 = vadd.f32 %v860, %v1052
        %v1085 = vadd.f32 %v861, %v1053
        %v1086 = vadd.f32 %v862, %v1054
        %v1087 = vadd.f32 %v863, %v1055
        %v1088 = vadd.f32 %v864, %v1056
        %v1089 = vadd.f32 %v865, %v1057
        %v1090 = vadd.f32 %v866, %v1058
        %v1091 = vadd.f32 %v867, %v1059
        %v1092 = vadd.f32 %v868, %v1060
        %v1093 = vadd.f32 %v869, %v1061
        %v1094 = vadd.f32 %v870, %v1062
        %v1095 = vadd.f32 %v871, %v1063
        %v1096 = vadd.f32 %v872, %v1064
        %v1097 = vadd.f32 %v873, %v1065
        %v1098 = vadd.f32 %v874, %v1066
        %v1099 = vadd.f32 %v875, %v1067
        %v1100 = vadd.f32 %v876, %v1068
        %v1101 = vadd.f32 %v877, %v1069
        %v1102 = vadd.f32 %v878, %v1070
        %v1103 = vadd.f32 %v879, %v1071
        %v1104 = vadd.f32 %v880, %v1072
        %v1105 = vadd.f32 %v881, %v1073
        %v1106 = vadd.f32 %v882, %v1074
        %v1107 = vadd.f32 %v883, %v1075
        %v1108 = vadd.f32 %v884, %v1076
        %1109 = vset.pattern.permute.xlu0 2
        %1110 = vperm.xlu0 %1109, %v629
        %v1111 = vpop.permute.xlu0 %1110
        %1112 = vset.pattern.permute.xlu0 2
        %1113 = vperm.xlu0 %1112, %v630
        %v1114 = vpop.permute.xlu0 %1113
        %1115 = vset.pattern.permute.xlu0 2
        %1116 = vperm.xlu0 %1115, %v631
        %v1117 = vpop.permute.xlu0 %1116
        %1118 = vset.pattern.permute.xlu0 2
        %1119 = vperm.xlu0 %1118, %v632
        %v1120 = vpop.permute.xlu0 %1119
        %1121 = vset.pattern.permute.xlu0 2
        %1122 = vperm.xlu0 %1121, %v633
        %v1123 = vpop.permute.xlu0 %1122
        %1124 = vset.pattern.permute.xlu0 2
        %1125 = vperm.xlu0 %1124, %v634
        %v1126 = vpop.permute.xlu0 %1125
        %1127 = vset.pattern.permute.xlu0 2
        %1128 = vperm.xlu0 %1127, %v635
        %v1129 = vpop.permute.xlu0 %1128
        %1130 = vset.pattern.permute.xlu0 2
        %1131 = vperm.xlu0 %1130, %v636
        %v1132 = vpop.permute.xlu0 %1131
        %1133 = vset.pattern.permute.xlu0 2
        %1134 = vperm.xlu0 %1133, %v637
        %v1135 = vpop.permute.xlu0 %1134
        %1136 = vset.pattern.permute.xlu0 2
        %1137 = vperm.xlu0 %1136, %v638
        %v1138 = vpop.permute.xlu0 %1137
        %1139 = vset.pattern.permute.xlu0 2
        %1140 = vperm.xlu0 %1139, %v639
        %v1141 = vpop.permute.xlu0 %1140
        %1142 = vset.pattern.permute.xlu0 2
        %1143 = vperm.xlu0 %1142, %v640
        %v1144 = vpop.permute.xlu0 %1143
        %1145 = vset.pattern.permute.xlu0 2
        %1146 = vperm.xlu0 %1145, %v641
        %v1147 = vpop.permute.xlu0 %1146
        %1148 = vset.pattern.permute.xlu0 2
        %1149 = vperm.xlu0 %1148, %v642
        %v1150 = vpop.permute.xlu0 %1149
        %1151 = vset.pattern.permute.xlu0 2
        %1152 = vperm.xlu0 %1151, %v643
        %v1153 = vpop.permute.xlu0 %1152
        %1154 = vset.pattern.permute.xlu0 2
        %1155 = vperm.xlu0 %1154, %v644
        %v1156 = vpop.permute.xlu0 %1155
        %1157 = vset.pattern.permute.xlu0 2
        %1158 = vperm.xlu0 %1157, %v645
        %v1159 = vpop.permute.xlu0 %1158
        %1160 = vset.pattern.permute.xlu0 2
        %1161 = vperm.xlu0 %1160, %v646
        %v1162 = vpop.permute.xlu0 %1161
        %1163 = vset.pattern.permute.xlu0 2
        %1164 = vperm.xlu0 %1163, %v647
        %v1165 = vpop.permute.xlu0 %1164
        %1166 = vset.pattern.permute.xlu0 2
        %1167 = vperm.xlu0 %1166, %v648
        %v1168 = vpop.permute.xlu0 %1167
        %1169 = vset.pattern.permute.xlu0 2
        %1170 = vperm.xlu0 %1169, %v649
        %v1171 = vpop.permute.xlu0 %1170
        %1172 = vset.pattern.permute.xlu0 2
        %1173 = vperm.xlu0 %1172, %v650
        %v1174 = vpop.permute.xlu0 %1173
        %1175 = vset.pattern.permute.xlu0 2
        %1176 = vperm.xlu0 %1175, %v651
        %v1177 = vpop.permute.xlu0 %1176
        %1178 = vset.pattern.permute.xlu0 2
        %1179 = vperm.xlu0 %1178, %v652
        %v1180 = vpop.permute.xlu0 %1179
        %1181 = vset.pattern.permute.xlu0 2
        %1182 = vperm.xlu0 %1181, %v653
        %v1183 = vpop.permute.xlu0 %1182
        %1184 = vset.pattern.permute.xlu0 2
        %1185 = vperm.xlu0 %1184, %v654
        %v1186 = vpop.permute.xlu0 %1185
        %1187 = vset.pattern.permute.xlu0 2
        %1188 = vperm.xlu0 %1187, %v655
        %v1189 = vpop.permute.xlu0 %1188
        %1190 = vset.pattern.permute.xlu0 2
        %1191 = vperm.xlu0 %1190, %v656
        %v1192 = vpop.permute.xlu0 %1191
        %1193 = vset.pattern.permute.xlu0 2
        %1194 = vperm.xlu0 %1193, %v657
        %v1195 = vpop.permute.xlu0 %1194
        %1196 = vset.pattern.permute.xlu0 2
        %1197 = vperm.xlu0 %1196, %v658
        %v1198 = vpop.permute.xlu0 %1197
        %1199 = vset.pattern.permute.xlu0 2
        %1200 = vperm.xlu0 %1199, %v659
        %v1201 = vpop.permute.xlu0 %1200
        %1202 = vset.pattern.permute.xlu0 2
        %1203 = vperm.xlu0 %1202, %v660
        %v1204 = vpop.permute.xlu0 %1203
        %vm1205 = vcmp.eq.s32.totalorder %v1111, %v500
        %vm1206 = vcmp.eq.s32.totalorder %v1114, %v500
        %vm1207 = vcmp.eq.s32.totalorder %v1117, %v500
        %vm1208 = vcmp.eq.s32.totalorder %v1120, %v500
        %vm1209 = vcmp.eq.s32.totalorder %v1123, %v500
        %vm1210 = vcmp.eq.s32.totalorder %v1126, %v500
        %vm1211 = vcmp.eq.s32.totalorder %v1129, %v500
        %vm1212 = vcmp.eq.s32.totalorder %v1132, %v500
        %vm1213 = vcmp.eq.s32.totalorder %v1135, %v500
        %vm1214 = vcmp.eq.s32.totalorder %v1138, %v500
        %vm1215 = vcmp.eq.s32.totalorder %v1141, %v500
        %vm1216 = vcmp.eq.s32.totalorder %v1144, %v500
        %vm1217 = vcmp.eq.s32.totalorder %v1147, %v500
        %vm1218 = vcmp.eq.s32.totalorder %v1150, %v500
        %vm1219 = vcmp.eq.s32.totalorder %v1153, %v500
        %vm1220 = vcmp.eq.s32.totalorder %v1156, %v500
        %vm1221 = vcmp.eq.s32.totalorder %v1159, %v500
        %vm1222 = vcmp.eq.s32.totalorder %v1162, %v500
        %vm1223 = vcmp.eq.s32.totalorder %v1165, %v500
        %vm1224 = vcmp.eq.s32.totalorder %v1168, %v500
        %vm1225 = vcmp.eq.s32.totalorder %v1171, %v500
        %vm1226 = vcmp.eq.s32.totalorder %v1174, %v500
        %vm1227 = vcmp.eq.s32.totalorder %v1177, %v500
        %vm1228 = vcmp.eq.s32.totalorder %v1180, %v500
        %vm1229 = vcmp.eq.s32.totalorder %v1183, %v500
        %vm1230 = vcmp.eq.s32.totalorder %v1186, %v500
        %vm1231 = vcmp.eq.s32.totalorder %v1189, %v500
        %vm1232 = vcmp.eq.s32.totalorder %v1192, %v500
        %vm1233 = vcmp.eq.s32.totalorder %v1195, %v500
        %vm1234 = vcmp.eq.s32.totalorder %v1198, %v500
        %vm1235 = vcmp.eq.s32.totalorder %v1201, %v500
        %vm1236 = vcmp.eq.s32.totalorder %v1204, %v500
        %v1237 = vsel %vm1205, 1, 0
        %v1238 = vsel %vm1206, 1, 0
        %v1239 = vsel %vm1207, 1, 0
        %v1240 = vsel %vm1208, 1, 0
        %v1241 = vsel %vm1209, 1, 0
        %v1242 = vsel %vm1210, 1, 0
        %v1243 = vsel %vm1211, 1, 0
        %v1244 = vsel %vm1212, 1, 0
        %v1245 = vsel %vm1213, 1, 0
        %v1246 = vsel %vm1214, 1, 0
        %v1247 = vsel %vm1215, 1, 0
        %v1248 = vsel %vm1216, 1, 0
        %v1249 = vsel %vm1217, 1, 0
        %v1250 = vsel %vm1218, 1, 0
        %v1251 = vsel %vm1219, 1, 0
        %v1252 = vsel %vm1220, 1, 0
        %v1253 = vsel %vm1221, 1, 0
        %v1254 = vsel %vm1222, 1, 0
        %v1255 = vsel %vm1223, 1, 0
        %v1256 = vsel %vm1224, 1, 0
        %v1257 = vsel %vm1225, 1, 0
        %v1258 = vsel %vm1226, 1, 0
        %v1259 = vsel %vm1227, 1, 0
        %v1260 = vsel %vm1228, 1, 0
        %v1261 = vsel %vm1229, 1, 0
        %v1262 = vsel %vm1230, 1, 0
        %v1263 = vsel %vm1231, 1, 0
        %v1264 = vsel %vm1232, 1, 0
        %v1265 = vsel %vm1233, 1, 0
        %v1266 = vsel %vm1234, 1, 0
        %v1267 = vsel %vm1235, 1, 0
        %v1268 = vsel %vm1236, 1, 0
        %v1269 = vcvt.s32.f32 %v1237
        %v1270 = vcvt.s32.f32 %v1238
        %v1271 = vcvt.s32.f32 %v1239
        %v1272 = vcvt.s32.f32 %v1240
        %v1273 = vcvt.s32.f32 %v1241
        %v1274 = vcvt.s32.f32 %v1242
        %v1275 = vcvt.s32.f32 %v1243
        %v1276 = vcvt.s32.f32 %v1244
        %v1277 = vcvt.s32.f32 %v1245
        %v1278 = vcvt.s32.f32 %v1246
        %v1279 = vcvt.s32.f32 %v1247
        %v1280 = vcvt.s32.f32 %v1248
        %v1281 = vcvt.s32.f32 %v1249
        %v1282 = vcvt.s32.f32 %v1250
        %v1283 = vcvt.s32.f32 %v1251
        %v1284 = vcvt.s32.f32 %v1252
        %v1285 = vcvt.s32.f32 %v1253
        %v1286 = vcvt.s32.f32 %v1254
        %v1287 = vcvt.s32.f32 %v1255
        %v1288 = vcvt.s32.f32 %v1256
        %v1289 = vcvt.s32.f32 %v1257
        %v1290 = vcvt.s32.f32 %v1258
        %v1291 = vcvt.s32.f32 %v1259
        %v1292 = vcvt.s32.f32 %v1260
        %v1293 = vcvt.s32.f32 %v1261
        %v1294 = vcvt.s32.f32 %v1262
        %v1295 = vcvt.s32.f32 %v1263
        %v1296 = vcvt.s32.f32 %v1264
        %v1297 = vcvt.s32.f32 %v1265
        %v1298 = vcvt.s32.f32 %v1266
        %v1299 = vcvt.s32.f32 %v1267
        %v1300 = vcvt.s32.f32 %v1268
        %v1301 = vadd.f32 %v1077, %v1269
        %v1302 = vadd.f32 %v1078, %v1270
        %v1303 = vadd.f32 %v1079, %v1271
        %v1304 = vadd.f32 %v1080, %v1272
        %v1305 = vadd.f32 %v1081, %v1273
        %v1306 = vadd.f32 %v1082, %v1274
        %v1307 = vadd.f32 %v1083, %v1275
        %v1308 = vadd.f32 %v1084, %v1276
        %v1309 = vadd.f32 %v1085, %v1277
        %v1310 = vadd.f32 %v1086, %v1278
        %v1311 = vadd.f32 %v1087, %v1279
        %v1312 = vadd.f32 %v1088, %v1280
        %v1313 = vadd.f32 %v1089, %v1281
        %v1314 = vadd.f32 %v1090, %v1282
        %v1315 = vadd.f32 %v1091, %v1283
        %v1316 = vadd.f32 %v1092, %v1284
        %v1317 = vadd.f32 %v1093, %v1285
        %v1318 = vadd.f32 %v1094, %v1286
        %v1319 = vadd.f32 %v1095, %v1287
        %v1320 = vadd.f32 %v1096, %v1288
        %v1321 = vadd.f32 %v1097, %v1289
        %v1322 = vadd.f32 %v1098, %v1290
        %v1323 = vadd.f32 %v1099, %v1291
        %v1324 = vadd.f32 %v1100, %v1292
        %v1325 = vadd.f32 %v1101, %v1293
        %v1326 = vadd.f32 %v1102, %v1294
        %v1327 = vadd.f32 %v1103, %v1295
        %v1328 = vadd.f32 %v1104, %v1296
        %v1329 = vadd.f32 %v1105, %v1297
        %v1330 = vadd.f32 %v1106, %v1298
        %v1331 = vadd.f32 %v1107, %v1299
        %v1332 = vadd.f32 %v1108, %v1300
        %1333 = vset.pattern.permute.xlu0 3
        %1334 = vperm.xlu0 %1333, %v629
        %v1335 = vpop.permute.xlu0 %1334
        %1336 = vset.pattern.permute.xlu0 3
        %1337 = vperm.xlu0 %1336, %v630
        %v1338 = vpop.permute.xlu0 %1337
        %1339 = vset.pattern.permute.xlu0 3
        %1340 = vperm.xlu0 %1339, %v631
        %v1341 = vpop.permute.xlu0 %1340
        %1342 = vset.pattern.permute.xlu0 3
        %1343 = vperm.xlu0 %1342, %v632
        %v1344 = vpop.permute.xlu0 %1343
        %1345 = vset.pattern.permute.xlu0 3
        %1346 = vperm.xlu0 %1345, %v633
        %v1347 = vpop.permute.xlu0 %1346
        %1348 = vset.pattern.permute.xlu0 3
        %1349 = vperm.xlu0 %1348, %v634
        %v1350 = vpop.permute.xlu0 %1349
        %1351 = vset.pattern.permute.xlu0 3
        %1352 = vperm.xlu0 %1351, %v635
        %v1353 = vpop.permute.xlu0 %1352
        %1354 = vset.pattern.permute.xlu0 3
        %1355 = vperm.xlu0 %1354, %v636
        %v1356 = vpop.permute.xlu0 %1355
        %1357 = vset.pattern.permute.xlu0 3
        %1358 = vperm.xlu0 %1357, %v637
        %v1359 = vpop.permute.xlu0 %1358
        %1360 = vset.pattern.permute.xlu0 3
        %1361 = vperm.xlu0 %1360, %v638
        %v1362 = vpop.permute.xlu0 %1361
        %1363 = vset.pattern.permute.xlu0 3
        %1364 = vperm.xlu0 %1363, %v639
        %v1365 = vpop.permute.xlu0 %1364
        %1366 = vset.pattern.permute.xlu0 3
        %1367 = vperm.xlu0 %1366, %v640
        %v1368 = vpop.permute.xlu0 %1367
        %1369 = vset.pattern.permute.xlu0 3
        %1370 = vperm.xlu0 %1369, %v641
        %v1371 = vpop.permute.xlu0 %1370
        %1372 = vset.pattern.permute.xlu0 3
        %1373 = vperm.xlu0 %1372, %v642
        %v1374 = vpop.permute.xlu0 %1373
        %1375 = vset.pattern.permute.xlu0 3
        %1376 = vperm.xlu0 %1375, %v643
        %v1377 = vpop.permute.xlu0 %1376
        %1378 = vset.pattern.permute.xlu0 3
        %1379 = vperm.xlu0 %1378, %v644
        %v1380 = vpop.permute.xlu0 %1379
        %1381 = vset.pattern.permute.xlu0 3
        %1382 = vperm.xlu0 %1381, %v645
        %v1383 = vpop.permute.xlu0 %1382
        %1384 = vset.pattern.permute.xlu0 3
        %1385 = vperm.xlu0 %1384, %v646
        %v1386 = vpop.permute.xlu0 %1385
        %1387 = vset.pattern.permute.xlu0 3
        %1388 = vperm.xlu0 %1387, %v647
        %v1389 = vpop.permute.xlu0 %1388
        %1390 = vset.pattern.permute.xlu0 3
        %1391 = vperm.xlu0 %1390, %v648
        %v1392 = vpop.permute.xlu0 %1391
        %1393 = vset.pattern.permute.xlu0 3
        %1394 = vperm.xlu0 %1393, %v649
        %v1395 = vpop.permute.xlu0 %1394
        %1396 = vset.pattern.permute.xlu0 3
        %1397 = vperm.xlu0 %1396, %v650
        %v1398 = vpop.permute.xlu0 %1397
        %1399 = vset.pattern.permute.xlu0 3
        %1400 = vperm.xlu0 %1399, %v651
        %v1401 = vpop.permute.xlu0 %1400
        %1402 = vset.pattern.permute.xlu0 3
        %1403 = vperm.xlu0 %1402, %v652
        %v1404 = vpop.permute.xlu0 %1403
        %1405 = vset.pattern.permute.xlu0 3
        %1406 = vperm.xlu0 %1405, %v653
        %v1407 = vpop.permute.xlu0 %1406
        %1408 = vset.pattern.permute.xlu0 3
        %1409 = vperm.xlu0 %1408, %v654
        %v1410 = vpop.permute.xlu0 %1409
        %1411 = vset.pattern.permute.xlu0 3
        %1412 = vperm.xlu0 %1411, %v655
        %v1413 = vpop.permute.xlu0 %1412
        %1414 = vset.pattern.permute.xlu0 3
        %1415 = vperm.xlu0 %1414, %v656
        %v1416 = vpop.permute.xlu0 %1415
        %1417 = vset.pattern.permute.xlu0 3
        %1418 = vperm.xlu0 %1417, %v657
        %v1419 = vpop.permute.xlu0 %1418
        %1420 = vset.pattern.permute.xlu0 3
        %1421 = vperm.xlu0 %1420, %v658
        %v1422 = vpop.permute.xlu0 %1421
        %1423 = vset.pattern.permute.xlu0 3
        %1424 = vperm.xlu0 %1423, %v659
        %v1425 = vpop.permute.xlu0 %1424
        %1426 = vset.pattern.permute.xlu0 3
        %1427 = vperm.xlu0 %1426, %v660
        %v1428 = vpop.permute.xlu0 %1427
        %vm1429 = vcmp.eq.s32.totalorder %v1335, %v500
        %vm1430 = vcmp.eq.s32.totalorder %v1338, %v500
        %vm1431 = vcmp.eq.s32.totalorder %v1341, %v500
        %vm1432 = vcmp.eq.s32.totalorder %v1344, %v500
        %vm1433 = vcmp.eq.s32.totalorder %v1347, %v500
        %vm1434 = vcmp.eq.s32.totalorder %v1350, %v500
        %vm1435 = vcmp.eq.s32.totalorder %v1353, %v500
        %vm1436 = vcmp.eq.s32.totalorder %v1356, %v500
        %vm1437 = vcmp.eq.s32.totalorder %v1359, %v500
        %vm1438 = vcmp.eq.s32.totalorder %v1362, %v500
        %vm1439 = vcmp.eq.s32.totalorder %v1365, %v500
        %vm1440 = vcmp.eq.s32.totalorder %v1368, %v500
        %vm1441 = vcmp.eq.s32.totalorder %v1371, %v500
        %vm1442 = vcmp.eq.s32.totalorder %v1374, %v500
        %vm1443 = vcmp.eq.s32.totalorder %v1377, %v500
        %vm1444 = vcmp.eq.s32.totalorder %v1380, %v500
        %vm1445 = vcmp.eq.s32.totalorder %v1383, %v500
        %vm1446 = vcmp.eq.s32.totalorder %v1386, %v500
        %vm1447 = vcmp.eq.s32.totalorder %v1389, %v500
        %vm1448 = vcmp.eq.s32.totalorder %v1392, %v500
        %vm1449 = vcmp.eq.s32.totalorder %v1395, %v500
        %vm1450 = vcmp.eq.s32.totalorder %v1398, %v500
        %vm1451 = vcmp.eq.s32.totalorder %v1401, %v500
        %vm1452 = vcmp.eq.s32.totalorder %v1404, %v500
        %vm1453 = vcmp.eq.s32.totalorder %v1407, %v500
        %vm1454 = vcmp.eq.s32.totalorder %v1410, %v500
        %vm1455 = vcmp.eq.s32.totalorder %v1413, %v500
        %vm1456 = vcmp.eq.s32.totalorder %v1416, %v500
        %vm1457 = vcmp.eq.s32.totalorder %v1419, %v500
        %vm1458 = vcmp.eq.s32.totalorder %v1422, %v500
        %vm1459 = vcmp.eq.s32.totalorder %v1425, %v500
        %vm1460 = vcmp.eq.s32.totalorder %v1428, %v500
        %v1461 = vsel %vm1429, 1, 0
        %v1462 = vsel %vm1430, 1, 0
        %v1463 = vsel %vm1431, 1, 0
        %v1464 = vsel %vm1432, 1, 0
        %v1465 = vsel %vm1433, 1, 0
        %v1466 = vsel %vm1434, 1, 0
        %v1467 = vsel %vm1435, 1, 0
        %v1468 = vsel %vm1436, 1, 0
        %v1469 = vsel %vm1437, 1, 0
        %v1470 = vsel %vm1438, 1, 0
        %v1471 = vsel %vm1439, 1, 0
        %v1472 = vsel %vm1440, 1, 0
        %v1473 = vsel %vm1441, 1, 0
        %v1474 = vsel %vm1442, 1, 0
        %v1475 = vsel %vm1443, 1, 0
        %v1476 = vsel %vm1444, 1, 0
        %v1477 = vsel %vm1445, 1, 0
        %v1478 = vsel %vm1446, 1, 0
        %v1479 = vsel %vm1447, 1, 0
        %v1480 = vsel %vm1448, 1, 0
        %v1481 = vsel %vm1449, 1, 0
        %v1482 = vsel %vm1450, 1, 0
        %v1483 = vsel %vm1451, 1, 0
        %v1484 = vsel %vm1452, 1, 0
        %v1485 = vsel %vm1453, 1, 0
        %v1486 = vsel %vm1454, 1, 0
        %v1487 = vsel %vm1455, 1, 0
        %v1488 = vsel %vm1456, 1, 0
        %v1489 = vsel %vm1457, 1, 0
        %v1490 = vsel %vm1458, 1, 0
        %v1491 = vsel %vm1459, 1, 0
        %v1492 = vsel %vm1460, 1, 0
        %v1493 = vcvt.s32.f32 %v1461
        %v1494 = vcvt.s32.f32 %v1462
        %v1495 = vcvt.s32.f32 %v1463
        %v1496 = vcvt.s32.f32 %v1464
        %v1497 = vcvt.s32.f32 %v1465
        %v1498 = vcvt.s32.f32 %v1466
        %v1499 = vcvt.s32.f32 %v1467
        %v1500 = vcvt.s32.f32 %v1468
        %v1501 = vcvt.s32.f32 %v1469
        %v1502 = vcvt.s32.f32 %v1470
        %v1503 = vcvt.s32.f32 %v1471
        %v1504 = vcvt.s32.f32 %v1472
        %v1505 = vcvt.s32.f32 %v1473
        %v1506 = vcvt.s32.f32 %v1474
        %v1507 = vcvt.s32.f32 %v1475
        %v1508 = vcvt.s32.f32 %v1476
        %v1509 = vcvt.s32.f32 %v1477
        %v1510 = vcvt.s32.f32 %v1478
        %v1511 = vcvt.s32.f32 %v1479
        %v1512 = vcvt.s32.f32 %v1480
        %v1513 = vcvt.s32.f32 %v1481
        %v1514 = vcvt.s32.f32 %v1482
        %v1515 = vcvt.s32.f32 %v1483
        %v1516 = vcvt.s32.f32 %v1484
        %v1517 = vcvt.s32.f32 %v1485
        %v1518 = vcvt.s32.f32 %v1486
        %v1519 = vcvt.s32.f32 %v1487
        %v1520 = vcvt.s32.f32 %v1488
        %v1521 = vcvt.s32.f32 %v1489
        %v1522 = vcvt.s32.f32 %v1490
        %v1523 = vcvt.s32.f32 %v1491
        %v1524 = vcvt.s32.f32 %v1492
        %v1525 = vadd.f32 %v1301, %v1493
        %v1526 = vadd.f32 %v1302, %v1494
        %v1527 = vadd.f32 %v1303, %v1495
        %v1528 = vadd.f32 %v1304, %v1496
        %v1529 = vadd.f32 %v1305, %v1497
        %v1530 = vadd.f32 %v1306, %v1498
        %v1531 = vadd.f32 %v1307, %v1499
        %v1532 = vadd.f32 %v1308, %v1500
        %v1533 = vadd.f32 %v1309, %v1501
        %v1534 = vadd.f32 %v1310, %v1502
        %v1535 = vadd.f32 %v1311, %v1503
        %v1536 = vadd.f32 %v1312, %v1504
        %v1537 = vadd.f32 %v1313, %v1505
        %v1538 = vadd.f32 %v1314, %v1506
        %v1539 = vadd.f32 %v1315, %v1507
        %v1540 = vadd.f32 %v1316, %v1508
        %v1541 = vadd.f32 %v1317, %v1509
        %v1542 = vadd.f32 %v1318, %v1510
        %v1543 = vadd.f32 %v1319, %v1511
        %v1544 = vadd.f32 %v1320, %v1512
        %v1545 = vadd.f32 %v1321, %v1513
        %v1546 = vadd.f32 %v1322, %v1514
        %v1547 = vadd.f32 %v1323, %v1515
        %v1548 = vadd.f32 %v1324, %v1516
        %v1549 = vadd.f32 %v1325, %v1517
        %v1550 = vadd.f32 %v1326, %v1518
        %v1551 = vadd.f32 %v1327, %v1519
        %v1552 = vadd.f32 %v1328, %v1520
        %v1553 = vadd.f32 %v1329, %v1521
        %v1554 = vadd.f32 %v1330, %v1522
        %v1555 = vadd.f32 %v1331, %v1523
        %v1556 = vadd.f32 %v1332, %v1524
        %1557 = vset.pattern.permute.xlu0 4
        %1558 = vperm.xlu0 %1557, %v629
        %v1559 = vpop.permute.xlu0 %1558
        %1560 = vset.pattern.permute.xlu0 4
        %1561 = vperm.xlu0 %1560, %v630
        %v1562 = vpop.permute.xlu0 %1561
        %1563 = vset.pattern.permute.xlu0 4
        %1564 = vperm.xlu0 %1563, %v631
        %v1565 = vpop.permute.xlu0 %1564
        %1566 = vset.pattern.permute.xlu0 4
        %1567 = vperm.xlu0 %1566, %v632
        %v1568 = vpop.permute.xlu0 %1567
        %1569 = vset.pattern.permute.xlu0 4
        %1570 = vperm.xlu0 %1569, %v633
        %v1571 = vpop.permute.xlu0 %1570
        %1572 = vset.pattern.permute.xlu0 4
        %1573 = vperm.xlu0 %1572, %v634
        %v1574 = vpop.permute.xlu0 %1573
        %1575 = vset.pattern.permute.xlu0 4
        %1576 = vperm.xlu0 %1575, %v635
        %v1577 = vpop.permute.xlu0 %1576
        %1578 = vset.pattern.permute.xlu0 4
        %1579 = vperm.xlu0 %1578, %v636
        %v1580 = vpop.permute.xlu0 %1579
        %1581 = vset.pattern.permute.xlu0 4
        %1582 = vperm.xlu0 %1581, %v637
        %v1583 = vpop.permute.xlu0 %1582
        %1584 = vset.pattern.permute.xlu0 4
        %1585 = vperm.xlu0 %1584, %v638
        %v1586 = vpop.permute.xlu0 %1585
        %1587 = vset.pattern.permute.xlu0 4
        %1588 = vperm.xlu0 %1587, %v639
        %v1589 = vpop.permute.xlu0 %1588
        %1590 = vset.pattern.permute.xlu0 4
        %1591 = vperm.xlu0 %1590, %v640
        %v1592 = vpop.permute.xlu0 %1591
        %1593 = vset.pattern.permute.xlu0 4
        %1594 = vperm.xlu0 %1593, %v641
        %v1595 = vpop.permute.xlu0 %1594
        %1596 = vset.pattern.permute.xlu0 4
        %1597 = vperm.xlu0 %1596, %v642
        %v1598 = vpop.permute.xlu0 %1597
        %1599 = vset.pattern.permute.xlu0 4
        %1600 = vperm.xlu0 %1599, %v643
        %v1601 = vpop.permute.xlu0 %1600
        %1602 = vset.pattern.permute.xlu0 4
        %1603 = vperm.xlu0 %1602, %v644
        %v1604 = vpop.permute.xlu0 %1603
        %1605 = vset.pattern.permute.xlu0 4
        %1606 = vperm.xlu0 %1605, %v645
        %v1607 = vpop.permute.xlu0 %1606
        %1608 = vset.pattern.permute.xlu0 4
        %1609 = vperm.xlu0 %1608, %v646
        %v1610 = vpop.permute.xlu0 %1609
        %1611 = vset.pattern.permute.xlu0 4
        %1612 = vperm.xlu0 %1611, %v647
        %v1613 = vpop.permute.xlu0 %1612
        %1614 = vset.pattern.permute.xlu0 4
        %1615 = vperm.xlu0 %1614, %v648
        %v1616 = vpop.permute.xlu0 %1615
        %1617 = vset.pattern.permute.xlu0 4
        %1618 = vperm.xlu0 %1617, %v649
        %v1619 = vpop.permute.xlu0 %1618
        %1620 = vset.pattern.permute.xlu0 4
        %1621 = vperm.xlu0 %1620, %v650
        %v1622 = vpop.permute.xlu0 %1621
        %1623 = vset.pattern.permute.xlu0 4
        %1624 = vperm.xlu0 %1623, %v651
        %v1625 = vpop.permute.xlu0 %1624
        %1626 = vset.pattern.permute.xlu0 4
        %1627 = vperm.xlu0 %1626, %v652
        %v1628 = vpop.permute.xlu0 %1627
        %1629 = vset.pattern.permute.xlu0 4
        %1630 = vperm.xlu0 %1629, %v653
        %v1631 = vpop.permute.xlu0 %1630
        %1632 = vset.pattern.permute.xlu0 4
        %1633 = vperm.xlu0 %1632, %v654
        %v1634 = vpop.permute.xlu0 %1633
        %1635 = vset.pattern.permute.xlu0 4
        %1636 = vperm.xlu0 %1635, %v655
        %v1637 = vpop.permute.xlu0 %1636
        %1638 = vset.pattern.permute.xlu0 4
        %1639 = vperm.xlu0 %1638, %v656
        %v1640 = vpop.permute.xlu0 %1639
        %1641 = vset.pattern.permute.xlu0 4
        %1642 = vperm.xlu0 %1641, %v657
        %v1643 = vpop.permute.xlu0 %1642
        %1644 = vset.pattern.permute.xlu0 4
        %1645 = vperm.xlu0 %1644, %v658
        %v1646 = vpop.permute.xlu0 %1645
        %1647 = vset.pattern.permute.xlu0 4
        %1648 = vperm.xlu0 %1647, %v659
        %v1649 = vpop.permute.xlu0 %1648
        %1650 = vset.pattern.permute.xlu0 4
        %1651 = vperm.xlu0 %1650, %v660
        %v1652 = vpop.permute.xlu0 %1651
        %vm1653 = vcmp.eq.s32.totalorder %v1559, %v500
        %vm1654 = vcmp.eq.s32.totalorder %v1562, %v500
        %vm1655 = vcmp.eq.s32.totalorder %v1565, %v500
        %vm1656 = vcmp.eq.s32.totalorder %v1568, %v500
        %vm1657 = vcmp.eq.s32.totalorder %v1571, %v500
        %vm1658 = vcmp.eq.s32.totalorder %v1574, %v500
        %vm1659 = vcmp.eq.s32.totalorder %v1577, %v500
        %vm1660 = vcmp.eq.s32.totalorder %v1580, %v500
        %vm1661 = vcmp.eq.s32.totalorder %v1583, %v500
        %vm1662 = vcmp.eq.s32.totalorder %v1586, %v500
        %vm1663 = vcmp.eq.s32.totalorder %v1589, %v500
        %vm1664 = vcmp.eq.s32.totalorder %v1592, %v500
        %vm1665 = vcmp.eq.s32.totalorder %v1595, %v500
        %vm1666 = vcmp.eq.s32.totalorder %v1598, %v500
        %vm1667 = vcmp.eq.s32.totalorder %v1601, %v500
        %vm1668 = vcmp.eq.s32.totalorder %v1604, %v500
        %vm1669 = vcmp.eq.s32.totalorder %v1607, %v500
        %vm1670 = vcmp.eq.s32.totalorder %v1610, %v500
        %vm1671 = vcmp.eq.s32.totalorder %v1613, %v500
        %vm1672 = vcmp.eq.s32.totalorder %v1616, %v500
        %vm1673 = vcmp.eq.s32.totalorder %v1619, %v500
        %vm1674 = vcmp.eq.s32.totalorder %v1622, %v500
        %vm1675 = vcmp.eq.s32.totalorder %v1625, %v500
        %vm1676 = vcmp.eq.s32.totalorder %v1628, %v500
        %vm1677 = vcmp.eq.s32.totalorder %v1631, %v500
        %vm1678 = vcmp.eq.s32.totalorder %v1634, %v500
        %vm1679 = vcmp.eq.s32.totalorder %v1637, %v500
        %vm1680 = vcmp.eq.s32.totalorder %v1640, %v500
        %vm1681 = vcmp.eq.s32.totalorder %v1643, %v500
        %vm1682 = vcmp.eq.s32.totalorder %v1646, %v500
        %vm1683 = vcmp.eq.s32.totalorder %v1649, %v500
        %vm1684 = vcmp.eq.s32.totalorder %v1652, %v500
        %v1685 = vsel %vm1653, 1, 0
        %v1686 = vsel %vm1654, 1, 0
        %v1687 = vsel %vm1655, 1, 0
        %v1688 = vsel %vm1656, 1, 0
        %v1689 = vsel %vm1657, 1, 0
        %v1690 = vsel %vm1658, 1, 0
        %v1691 = vsel %vm1659, 1, 0
        %v1692 = vsel %vm1660, 1, 0
        %v1693 = vsel %vm1661, 1, 0
        %v1694 = vsel %vm1662, 1, 0
        %v1695 = vsel %vm1663, 1, 0
        %v1696 = vsel %vm1664, 1, 0
        %v1697 = vsel %vm1665, 1, 0
        %v1698 = vsel %vm1666, 1, 0
        %v1699 = vsel %vm1667, 1, 0
        %v1700 = vsel %vm1668, 1, 0
        %v1701 = vsel %vm1669, 1, 0
        %v1702 = vsel %vm1670, 1, 0
        %v1703 = vsel %vm1671, 1, 0
        %v1704 = vsel %vm1672, 1, 0
        %v1705 = vsel %vm1673, 1, 0
        %v1706 = vsel %vm1674, 1, 0
        %v1707 = vsel %vm1675, 1, 0
        %v1708 = vsel %vm1676, 1, 0
        %v1709 = vsel %vm1677, 1, 0
        %v1710 = vsel %vm1678, 1, 0
        %v1711 = vsel %vm1679, 1, 0
        %v1712 = vsel %vm1680, 1, 0
        %v1713 = vsel %vm1681, 1, 0
        %v1714 = vsel %vm1682, 1, 0
        %v1715 = vsel %vm1683, 1, 0
        %v1716 = vsel %vm1684, 1, 0
        %v1717 = vcvt.s32.f32 %v1685
        %v1718 = vcvt.s32.f32 %v1686
        %v1719 = vcvt.s32.f32 %v1687
        %v1720 = vcvt.s32.f32 %v1688
        %v1721 = vcvt.s32.f32 %v1689
        %v1722 = vcvt.s32.f32 %v1690
        %v1723 = vcvt.s32.f32 %v1691
        %v1724 = vcvt.s32.f32 %v1692
        %v1725 = vcvt.s32.f32 %v1693
        %v1726 = vcvt.s32.f32 %v1694
        %v1727 = vcvt.s32.f32 %v1695
        %v1728 = vcvt.s32.f32 %v1696
        %v1729 = vcvt.s32.f32 %v1697
        %v1730 = vcvt.s32.f32 %v1698
        %v1731 = vcvt.s32.f32 %v1699
        %v1732 = vcvt.s32.f32 %v1700
        %v1733 = vcvt.s32.f32 %v1701
        %v1734 = vcvt.s32.f32 %v1702
        %v1735 = vcvt.s32.f32 %v1703
        %v1736 = vcvt.s32.f32 %v1704
        %v1737 = vcvt.s32.f32 %v1705
        %v1738 = vcvt.s32.f32 %v1706
        %v1739 = vcvt.s32.f32 %v1707
        %v1740 = vcvt.s32.f32 %v1708
        %v1741 = vcvt.s32.f32 %v1709
        %v1742 = vcvt.s32.f32 %v1710
        %v1743 = vcvt.s32.f32 %v1711
        %v1744 = vcvt.s32.f32 %v1712
        %v1745 = vcvt.s32.f32 %v1713
        %v1746 = vcvt.s32.f32 %v1714
        %v1747 = vcvt.s32.f32 %v1715
        %v1748 = vcvt.s32.f32 %v1716
        %v1749 = vadd.f32 %v1525, %v1717
        %v1750 = vadd.f32 %v1526, %v1718
        %v1751 = vadd.f32 %v1527, %v1719
        %v1752 = vadd.f32 %v1528, %v1720
        %v1753 = vadd.f32 %v1529, %v1721
        %v1754 = vadd.f32 %v1530, %v1722
        %v1755 = vadd.f32 %v1531, %v1723
        %v1756 = vadd.f32 %v1532, %v1724
        %v1757 = vadd.f32 %v1533, %v1725
        %v1758 = vadd.f32 %v1534, %v1726
        %v1759 = vadd.f32 %v1535, %v1727
        %v1760 = vadd.f32 %v1536, %v1728
        %v1761 = vadd.f32 %v1537, %v1729
        %v1762 = vadd.f32 %v1538, %v1730
        %v1763 = vadd.f32 %v1539, %v1731
        %v1764 = vadd.f32 %v1540, %v1732
        %v1765 = vadd.f32 %v1541, %v1733
        %v1766 = vadd.f32 %v1542, %v1734
        %v1767 = vadd.f32 %v1543, %v1735
        %v1768 = vadd.f32 %v1544, %v1736
        %v1769 = vadd.f32 %v1545, %v1737
        %v1770 = vadd.f32 %v1546, %v1738
        %v1771 = vadd.f32 %v1547, %v1739
        %v1772 = vadd.f32 %v1548, %v1740
        %v1773 = vadd.f32 %v1549, %v1741
        %v1774 = vadd.f32 %v1550, %v1742
        %v1775 = vadd.f32 %v1551, %v1743
        %v1776 = vadd.f32 %v1552, %v1744
        %v1777 = vadd.f32 %v1553, %v1745
        %v1778 = vadd.f32 %v1554, %v1746
        %v1779 = vadd.f32 %v1555, %v1747
        %v1780 = vadd.f32 %v1556, %v1748
        %1781 = vset.pattern.permute.xlu0 5
        %1782 = vperm.xlu0 %1781, %v629
        %v1783 = vpop.permute.xlu0 %1782
        %1784 = vset.pattern.permute.xlu0 5
        %1785 = vperm.xlu0 %1784, %v630
        %v1786 = vpop.permute.xlu0 %1785
        %1787 = vset.pattern.permute.xlu0 5
        %1788 = vperm.xlu0 %1787, %v631
        %v1789 = vpop.permute.xlu0 %1788
        %1790 = vset.pattern.permute.xlu0 5
        %1791 = vperm.xlu0 %1790, %v632
        %v1792 = vpop.permute.xlu0 %1791
        %1793 = vset.pattern.permute.xlu0 5
        %1794 = vperm.xlu0 %1793, %v633
        %v1795 = vpop.permute.xlu0 %1794
        %1796 = vset.pattern.permute.xlu0 5
        %1797 = vperm.xlu0 %1796, %v634
        %v1798 = vpop.permute.xlu0 %1797
        %1799 = vset.pattern.permute.xlu0 5
        %1800 = vperm.xlu0 %1799, %v635
        %v1801 = vpop.permute.xlu0 %1800
        %1802 = vset.pattern.permute.xlu0 5
        %1803 = vperm.xlu0 %1802, %v636
        %v1804 = vpop.permute.xlu0 %1803
        %1805 = vset.pattern.permute.xlu0 5
        %1806 = vperm.xlu0 %1805, %v637
        %v1807 = vpop.permute.xlu0 %1806
        %1808 = vset.pattern.permute.xlu0 5
        %1809 = vperm.xlu0 %1808, %v638
        %v1810 = vpop.permute.xlu0 %1809
        %1811 = vset.pattern.permute.xlu0 5
        %1812 = vperm.xlu0 %1811, %v639
        %v1813 = vpop.permute.xlu0 %1812
        %1814 = vset.pattern.permute.xlu0 5
        %1815 = vperm.xlu0 %1814, %v640
        %v1816 = vpop.permute.xlu0 %1815
        %1817 = vset.pattern.permute.xlu0 5
        %1818 = vperm.xlu0 %1817, %v641
        %v1819 = vpop.permute.xlu0 %1818
        %1820 = vset.pattern.permute.xlu0 5
        %1821 = vperm.xlu0 %1820, %v642
        %v1822 = vpop.permute.xlu0 %1821
        %1823 = vset.pattern.permute.xlu0 5
        %1824 = vperm.xlu0 %1823, %v643
        %v1825 = vpop.permute.xlu0 %1824
        %1826 = vset.pattern.permute.xlu0 5
        %1827 = vperm.xlu0 %1826, %v644
        %v1828 = vpop.permute.xlu0 %1827
        %1829 = vset.pattern.permute.xlu0 5
        %1830 = vperm.xlu0 %1829, %v645
        %v1831 = vpop.permute.xlu0 %1830
        %1832 = vset.pattern.permute.xlu0 5
        %1833 = vperm.xlu0 %1832, %v646
        %v1834 = vpop.permute.xlu0 %1833
        %1835 = vset.pattern.permute.xlu0 5
        %1836 = vperm.xlu0 %1835, %v647
        %v1837 = vpop.permute.xlu0 %1836
        %1838 = vset.pattern.permute.xlu0 5
        %1839 = vperm.xlu0 %1838, %v648
        %v1840 = vpop.permute.xlu0 %1839
        %1841 = vset.pattern.permute.xlu0 5
        %1842 = vperm.xlu0 %1841, %v649
        %v1843 = vpop.permute.xlu0 %1842
        %1844 = vset.pattern.permute.xlu0 5
        %1845 = vperm.xlu0 %1844, %v650
        %v1846 = vpop.permute.xlu0 %1845
        %1847 = vset.pattern.permute.xlu0 5
        %1848 = vperm.xlu0 %1847, %v651
        %v1849 = vpop.permute.xlu0 %1848
        %1850 = vset.pattern.permute.xlu0 5
        %1851 = vperm.xlu0 %1850, %v652
        %v1852 = vpop.permute.xlu0 %1851
        %1853 = vset.pattern.permute.xlu0 5
        %1854 = vperm.xlu0 %1853, %v653
        %v1855 = vpop.permute.xlu0 %1854
        %1856 = vset.pattern.permute.xlu0 5
        %1857 = vperm.xlu0 %1856, %v654
        %v1858 = vpop.permute.xlu0 %1857
        %1859 = vset.pattern.permute.xlu0 5
        %1860 = vperm.xlu0 %1859, %v655
        %v1861 = vpop.permute.xlu0 %1860
        %1862 = vset.pattern.permute.xlu0 5
        %1863 = vperm.xlu0 %1862, %v656
        %v1864 = vpop.permute.xlu0 %1863
        %1865 = vset.pattern.permute.xlu0 5
        %1866 = vperm.xlu0 %1865, %v657
        %v1867 = vpop.permute.xlu0 %1866
        %1868 = vset.pattern.permute.xlu0 5
        %1869 = vperm.xlu0 %1868, %v658
        %v1870 = vpop.permute.xlu0 %1869
        %1871 = vset.pattern.permute.xlu0 5
        %1872 = vperm.xlu0 %1871, %v659
        %v1873 = vpop.permute.xlu0 %1872
        %1874 = vset.pattern.permute.xlu0 5
        %1875 = vperm.xlu0 %1874, %v660
        %v1876 = vpop.permute.xlu0 %1875
        %vm1877 = vcmp.eq.s32.totalorder %v1783, %v500
        %vm1878 = vcmp.eq.s32.totalorder %v1786, %v500
        %vm1879 = vcmp.eq.s32.totalorder %v1789, %v500
        %vm1880 = vcmp.eq.s32.totalorder %v1792, %v500
        %vm1881 = vcmp.eq.s32.totalorder %v1795, %v500
        %vm1882 = vcmp.eq.s32.totalorder %v1798, %v500
        %vm1883 = vcmp.eq.s32.totalorder %v1801, %v500
        %vm1884 = vcmp.eq.s32.totalorder %v1804, %v500
        %vm1885 = vcmp.eq.s32.totalorder %v1807, %v500
        %vm1886 = vcmp.eq.s32.totalorder %v1810, %v500
        %vm1887 = vcmp.eq.s32.totalorder %v1813, %v500
        %vm1888 = vcmp.eq.s32.totalorder %v1816, %v500
        %vm1889 = vcmp.eq.s32.totalorder %v1819, %v500
        %vm1890 = vcmp.eq.s32.totalorder %v1822, %v500
        %vm1891 = vcmp.eq.s32.totalorder %v1825, %v500
        %vm1892 = vcmp.eq.s32.totalorder %v1828, %v500
        %vm1893 = vcmp.eq.s32.totalorder %v1831, %v500
        %vm1894 = vcmp.eq.s32.totalorder %v1834, %v500
        %vm1895 = vcmp.eq.s32.totalorder %v1837, %v500
        %vm1896 = vcmp.eq.s32.totalorder %v1840, %v500
        %vm1897 = vcmp.eq.s32.totalorder %v1843, %v500
        %vm1898 = vcmp.eq.s32.totalorder %v1846, %v500
        %vm1899 = vcmp.eq.s32.totalorder %v1849, %v500
        %vm1900 = vcmp.eq.s32.totalorder %v1852, %v500
        %vm1901 = vcmp.eq.s32.totalorder %v1855, %v500
        %vm1902 = vcmp.eq.s32.totalorder %v1858, %v500
        %vm1903 = vcmp.eq.s32.totalorder %v1861, %v500
        %vm1904 = vcmp.eq.s32.totalorder %v1864, %v500
        %vm1905 = vcmp.eq.s32.totalorder %v1867, %v500
        %vm1906 = vcmp.eq.s32.totalorder %v1870, %v500
        %vm1907 = vcmp.eq.s32.totalorder %v1873, %v500
        %vm1908 = vcmp.eq.s32.totalorder %v1876, %v500
        %v1909 = vsel %vm1877, 1, 0
        %v1910 = vsel %vm1878, 1, 0
        %v1911 = vsel %vm1879, 1, 0
        %v1912 = vsel %vm1880, 1, 0
        %v1913 = vsel %vm1881, 1, 0
        %v1914 = vsel %vm1882, 1, 0
        %v1915 = vsel %vm1883, 1, 0
        %v1916 = vsel %vm1884, 1, 0
        %v1917 = vsel %vm1885, 1, 0
        %v1918 = vsel %vm1886, 1, 0
        %v1919 = vsel %vm1887, 1, 0
        %v1920 = vsel %vm1888, 1, 0
        %v1921 = vsel %vm1889, 1, 0
        %v1922 = vsel %vm1890, 1, 0
        %v1923 = vsel %vm1891, 1, 0
        %v1924 = vsel %vm1892, 1, 0
        %v1925 = vsel %vm1893, 1, 0
        %v1926 = vsel %vm1894, 1, 0
        %v1927 = vsel %vm1895, 1, 0
        %v1928 = vsel %vm1896, 1, 0
        %v1929 = vsel %vm1897, 1, 0
        %v1930 = vsel %vm1898, 1, 0
        %v1931 = vsel %vm1899, 1, 0
        %v1932 = vsel %vm1900, 1, 0
        %v1933 = vsel %vm1901, 1, 0
        %v1934 = vsel %vm1902, 1, 0
        %v1935 = vsel %vm1903, 1, 0
        %v1936 = vsel %vm1904, 1, 0
        %v1937 = vsel %vm1905, 1, 0
        %v1938 = vsel %vm1906, 1, 0
        %v1939 = vsel %vm1907, 1, 0
        %v1940 = vsel %vm1908, 1, 0
        %v1941 = vcvt.s32.f32 %v1909
        %v1942 = vcvt.s32.f32 %v1910
        %v1943 = vcvt.s32.f32 %v1911
        %v1944 = vcvt.s32.f32 %v1912
        %v1945 = vcvt.s32.f32 %v1913
        %v1946 = vcvt.s32.f32 %v1914
        %v1947 = vcvt.s32.f32 %v1915
        %v1948 = vcvt.s32.f32 %v1916
        %v1949 = vcvt.s32.f32 %v1917
        %v1950 = vcvt.s32.f32 %v1918
        %v1951 = vcvt.s32.f32 %v1919
        %v1952 = vcvt.s32.f32 %v1920
        %v1953 = vcvt.s32.f32 %v1921
        %v1954 = vcvt.s32.f32 %v1922
        %v1955 = vcvt.s32.f32 %v1923
        %v1956 = vcvt.s32.f32 %v1924
        %v1957 = vcvt.s32.f32 %v1925
        %v1958 = vcvt.s32.f32 %v1926
        %v1959 = vcvt.s32.f32 %v1927
        %v1960 = vcvt.s32.f32 %v1928
        %v1961 = vcvt.s32.f32 %v1929
        %v1962 = vcvt.s32.f32 %v1930
        %v1963 = vcvt.s32.f32 %v1931
        %v1964 = vcvt.s32.f32 %v1932
        %v1965 = vcvt.s32.f32 %v1933
        %v1966 = vcvt.s32.f32 %v1934
        %v1967 = vcvt.s32.f32 %v1935
        %v1968 = vcvt.s32.f32 %v1936
        %v1969 = vcvt.s32.f32 %v1937
        %v1970 = vcvt.s32.f32 %v1938
        %v1971 = vcvt.s32.f32 %v1939
        %v1972 = vcvt.s32.f32 %v1940
        %v1973 = vadd.f32 %v1749, %v1941
        %v1974 = vadd.f32 %v1750, %v1942
        %v1975 = vadd.f32 %v1751, %v1943
        %v1976 = vadd.f32 %v1752, %v1944
        %v1977 = vadd.f32 %v1753, %v1945
        %v1978 = vadd.f32 %v1754, %v1946
        %v1979 = vadd.f32 %v1755, %v1947
        %v1980 = vadd.f32 %v1756, %v1948
        %v1981 = vadd.f32 %v1757, %v1949
        %v1982 = vadd.f32 %v1758, %v1950
        %v1983 = vadd.f32 %v1759, %v1951
        %v1984 = vadd.f32 %v1760, %v1952
        %v1985 = vadd.f32 %v1761, %v1953
        %v1986 = vadd.f32 %v1762, %v1954
        %v1987 = vadd.f32 %v1763, %v1955
        %v1988 = vadd.f32 %v1764, %v1956
        %v1989 = vadd.f32 %v1765, %v1957
        %v1990 = vadd.f32 %v1766, %v1958
        %v1991 = vadd.f32 %v1767, %v1959
        %v1992 = vadd.f32 %v1768, %v1960
        %v1993 = vadd.f32 %v1769, %v1961
        %v1994 = vadd.f32 %v1770, %v1962
        %v1995 = vadd.f32 %v1771, %v1963
        %v1996 = vadd.f32 %v1772, %v1964
        %v1997 = vadd.f32 %v1773, %v1965
        %v1998 = vadd.f32 %v1774, %v1966
        %v1999 = vadd.f32 %v1775, %v1967
        %v2000 = vadd.f32 %v1776, %v1968
        %v2001 = vadd.f32 %v1777, %v1969
        %v2002 = vadd.f32 %v1778, %v1970
        %v2003 = vadd.f32 %v1779, %v1971
        %v2004 = vadd.f32 %v1780, %v1972
        %2005 = vset.pattern.permute.xlu0 6
        %2006 = vperm.xlu0 %2005, %v629
        %v2007 = vpop.permute.xlu0 %2006
        %2008 = vset.pattern.permute.xlu0 6
        %2009 = vperm.xlu0 %2008, %v630
        %v2010 = vpop.permute.xlu0 %2009
        %2011 = vset.pattern.permute.xlu0 6
        %2012 = vperm.xlu0 %2011, %v631
        %v2013 = vpop.permute.xlu0 %2012
        %2014 = vset.pattern.permute.xlu0 6
        %2015 = vperm.xlu0 %2014, %v632
        %v2016 = vpop.permute.xlu0 %2015
        %2017 = vset.pattern.permute.xlu0 6
        %2018 = vperm.xlu0 %2017, %v633
        %v2019 = vpop.permute.xlu0 %2018
        %2020 = vset.pattern.permute.xlu0 6
        %2021 = vperm.xlu0 %2020, %v634
        %v2022 = vpop.permute.xlu0 %2021
        %2023 = vset.pattern.permute.xlu0 6
        %2024 = vperm.xlu0 %2023, %v635
        %v2025 = vpop.permute.xlu0 %2024
        %2026 = vset.pattern.permute.xlu0 6
        %2027 = vperm.xlu0 %2026, %v636
        %v2028 = vpop.permute.xlu0 %2027
        %2029 = vset.pattern.permute.xlu0 6
        %2030 = vperm.xlu0 %2029, %v637
        %v2031 = vpop.permute.xlu0 %2030
        %2032 = vset.pattern.permute.xlu0 6
        %2033 = vperm.xlu0 %2032, %v638
        %v2034 = vpop.permute.xlu0 %2033
        %2035 = vset.pattern.permute.xlu0 6
        %2036 = vperm.xlu0 %2035, %v639
        %v2037 = vpop.permute.xlu0 %2036
        %2038 = vset.pattern.permute.xlu0 6
        %2039 = vperm.xlu0 %2038, %v640
        %v2040 = vpop.permute.xlu0 %2039
        %2041 = vset.pattern.permute.xlu0 6
        %2042 = vperm.xlu0 %2041, %v641
        %v2043 = vpop.permute.xlu0 %2042
        %2044 = vset.pattern.permute.xlu0 6
        %2045 = vperm.xlu0 %2044, %v642
        %v2046 = vpop.permute.xlu0 %2045
        %2047 = vset.pattern.permute.xlu0 6
        %2048 = vperm.xlu0 %2047, %v643
        %v2049 = vpop.permute.xlu0 %2048
        %2050 = vset.pattern.permute.xlu0 6
        %2051 = vperm.xlu0 %2050, %v644
        %v2052 = vpop.permute.xlu0 %2051
        %2053 = vset.pattern.permute.xlu0 6
        %2054 = vperm.xlu0 %2053, %v645
        %v2055 = vpop.permute.xlu0 %2054
        %2056 = vset.pattern.permute.xlu0 6
        %2057 = vperm.xlu0 %2056, %v646
        %v2058 = vpop.permute.xlu0 %2057
        %2059 = vset.pattern.permute.xlu0 6
        %2060 = vperm.xlu0 %2059, %v647
        %v2061 = vpop.permute.xlu0 %2060
        %2062 = vset.pattern.permute.xlu0 6
        %2063 = vperm.xlu0 %2062, %v648
        %v2064 = vpop.permute.xlu0 %2063
        %2065 = vset.pattern.permute.xlu0 6
        %2066 = vperm.xlu0 %2065, %v649
        %v2067 = vpop.permute.xlu0 %2066
        %2068 = vset.pattern.permute.xlu0 6
        %2069 = vperm.xlu0 %2068, %v650
        %v2070 = vpop.permute.xlu0 %2069
        %2071 = vset.pattern.permute.xlu0 6
        %2072 = vperm.xlu0 %2071, %v651
        %v2073 = vpop.permute.xlu0 %2072
        %2074 = vset.pattern.permute.xlu0 6
        %2075 = vperm.xlu0 %2074, %v652
        %v2076 = vpop.permute.xlu0 %2075
        %2077 = vset.pattern.permute.xlu0 6
        %2078 = vperm.xlu0 %2077, %v653
        %v2079 = vpop.permute.xlu0 %2078
        %2080 = vset.pattern.permute.xlu0 6
        %2081 = vperm.xlu0 %2080, %v654
        %v2082 = vpop.permute.xlu0 %2081
        %2083 = vset.pattern.permute.xlu0 6
        %2084 = vperm.xlu0 %2083, %v655
        %v2085 = vpop.permute.xlu0 %2084
        %2086 = vset.pattern.permute.xlu0 6
        %2087 = vperm.xlu0 %2086, %v656
        %v2088 = vpop.permute.xlu0 %2087
        %2089 = vset.pattern.permute.xlu0 6
        %2090 = vperm.xlu0 %2089, %v657
        %v2091 = vpop.permute.xlu0 %2090
        %2092 = vset.pattern.permute.xlu0 6
        %2093 = vperm.xlu0 %2092, %v658
        %v2094 = vpop.permute.xlu0 %2093
        %2095 = vset.pattern.permute.xlu0 6
        %2096 = vperm.xlu0 %2095, %v659
        %v2097 = vpop.permute.xlu0 %2096
        %2098 = vset.pattern.permute.xlu0 6
        %2099 = vperm.xlu0 %2098, %v660
        %v2100 = vpop.permute.xlu0 %2099
        %vm2101 = vcmp.eq.s32.totalorder %v2007, %v500
        %vm2102 = vcmp.eq.s32.totalorder %v2010, %v500
        %vm2103 = vcmp.eq.s32.totalorder %v2013, %v500
        %vm2104 = vcmp.eq.s32.totalorder %v2016, %v500
        %vm2105 = vcmp.eq.s32.totalorder %v2019, %v500
        %vm2106 = vcmp.eq.s32.totalorder %v2022, %v500
        %vm2107 = vcmp.eq.s32.totalorder %v2025, %v500
        %vm2108 = vcmp.eq.s32.totalorder %v2028, %v500
        %vm2109 = vcmp.eq.s32.totalorder %v2031, %v500
        %vm2110 = vcmp.eq.s32.totalorder %v2034, %v500
        %vm2111 = vcmp.eq.s32.totalorder %v2037, %v500
        %vm2112 = vcmp.eq.s32.totalorder %v2040, %v500
        %vm2113 = vcmp.eq.s32.totalorder %v2043, %v500
        %vm2114 = vcmp.eq.s32.totalorder %v2046, %v500
        %vm2115 = vcmp.eq.s32.totalorder %v2049, %v500
        %vm2116 = vcmp.eq.s32.totalorder %v2052, %v500
        %vm2117 = vcmp.eq.s32.totalorder %v2055, %v500
        %vm2118 = vcmp.eq.s32.totalorder %v2058, %v500
        %vm2119 = vcmp.eq.s32.totalorder %v2061, %v500
        %vm2120 = vcmp.eq.s32.totalorder %v2064, %v500
        %vm2121 = vcmp.eq.s32.totalorder %v2067, %v500
        %vm2122 = vcmp.eq.s32.totalorder %v2070, %v500
        %vm2123 = vcmp.eq.s32.totalorder %v2073, %v500
        %vm2124 = vcmp.eq.s32.totalorder %v2076, %v500
        %vm2125 = vcmp.eq.s32.totalorder %v2079, %v500
        %vm2126 = vcmp.eq.s32.totalorder %v2082, %v500
        %vm2127 = vcmp.eq.s32.totalorder %v2085, %v500
        %vm2128 = vcmp.eq.s32.totalorder %v2088, %v500
        %vm2129 = vcmp.eq.s32.totalorder %v2091, %v500
        %vm2130 = vcmp.eq.s32.totalorder %v2094, %v500
        %vm2131 = vcmp.eq.s32.totalorder %v2097, %v500
        %vm2132 = vcmp.eq.s32.totalorder %v2100, %v500
        %v2133 = vsel %vm2101, 1, 0
        %v2134 = vsel %vm2102, 1, 0
        %v2135 = vsel %vm2103, 1, 0
        %v2136 = vsel %vm2104, 1, 0
        %v2137 = vsel %vm2105, 1, 0
        %v2138 = vsel %vm2106, 1, 0
        %v2139 = vsel %vm2107, 1, 0
        %v2140 = vsel %vm2108, 1, 0
        %v2141 = vsel %vm2109, 1, 0
        %v2142 = vsel %vm2110, 1, 0
        %v2143 = vsel %vm2111, 1, 0
        %v2144 = vsel %vm2112, 1, 0
        %v2145 = vsel %vm2113, 1, 0
        %v2146 = vsel %vm2114, 1, 0
        %v2147 = vsel %vm2115, 1, 0
        %v2148 = vsel %vm2116, 1, 0
        %v2149 = vsel %vm2117, 1, 0
        %v2150 = vsel %vm2118, 1, 0
        %v2151 = vsel %vm2119, 1, 0
        %v2152 = vsel %vm2120, 1, 0
        %v2153 = vsel %vm2121, 1, 0
        %v2154 = vsel %vm2122, 1, 0
        %v2155 = vsel %vm2123, 1, 0
        %v2156 = vsel %vm2124, 1, 0
        %v2157 = vsel %vm2125, 1, 0
        %v2158 = vsel %vm2126, 1, 0
        %v2159 = vsel %vm2127, 1, 0
        %v2160 = vsel %vm2128, 1, 0
        %v2161 = vsel %vm2129, 1, 0
        %v2162 = vsel %vm2130, 1, 0
        %v2163 = vsel %vm2131, 1, 0
        %v2164 = vsel %vm2132, 1, 0
        %v2165 = vcvt.s32.f32 %v2133
        %v2166 = vcvt.s32.f32 %v2134
        %v2167 = vcvt.s32.f32 %v2135
        %v2168 = vcvt.s32.f32 %v2136
        %v2169 = vcvt.s32.f32 %v2137
        %v2170 = vcvt.s32.f32 %v2138
        %v2171 = vcvt.s32.f32 %v2139
        %v2172 = vcvt.s32.f32 %v2140
        %v2173 = vcvt.s32.f32 %v2141
        %v2174 = vcvt.s32.f32 %v2142
        %v2175 = vcvt.s32.f32 %v2143
        %v2176 = vcvt.s32.f32 %v2144
        %v2177 = vcvt.s32.f32 %v2145
        %v2178 = vcvt.s32.f32 %v2146
        %v2179 = vcvt.s32.f32 %v2147
        %v2180 = vcvt.s32.f32 %v2148
        %v2181 = vcvt.s32.f32 %v2149
        %v2182 = vcvt.s32.f32 %v2150
        %v2183 = vcvt.s32.f32 %v2151
        %v2184 = vcvt.s32.f32 %v2152
        %v2185 = vcvt.s32.f32 %v2153
        %v2186 = vcvt.s32.f32 %v2154
        %v2187 = vcvt.s32.f32 %v2155
        %v2188 = vcvt.s32.f32 %v2156
        %v2189 = vcvt.s32.f32 %v2157
        %v2190 = vcvt.s32.f32 %v2158
        %v2191 = vcvt.s32.f32 %v2159
        %v2192 = vcvt.s32.f32 %v2160
        %v2193 = vcvt.s32.f32 %v2161
        %v2194 = vcvt.s32.f32 %v2162
        %v2195 = vcvt.s32.f32 %v2163
        %v2196 = vcvt.s32.f32 %v2164
        %v2197 = vadd.f32 %v1973, %v2165
        %v2198 = vadd.f32 %v1974, %v2166
        %v2199 = vadd.f32 %v1975, %v2167
        %v2200 = vadd.f32 %v1976, %v2168
        %v2201 = vadd.f32 %v1977, %v2169
        %v2202 = vadd.f32 %v1978, %v2170
        %v2203 = vadd.f32 %v1979, %v2171
        %v2204 = vadd.f32 %v1980, %v2172
        %v2205 = vadd.f32 %v1981, %v2173
        %v2206 = vadd.f32 %v1982, %v2174
        %v2207 = vadd.f32 %v1983, %v2175
        %v2208 = vadd.f32 %v1984, %v2176
        %v2209 = vadd.f32 %v1985, %v2177
        %v2210 = vadd.f32 %v1986, %v2178
        %v2211 = vadd.f32 %v1987, %v2179
        %v2212 = vadd.f32 %v1988, %v2180
        %v2213 = vadd.f32 %v1989, %v2181
        %v2214 = vadd.f32 %v1990, %v2182
        %v2215 = vadd.f32 %v1991, %v2183
        %v2216 = vadd.f32 %v1992, %v2184
        %v2217 = vadd.f32 %v1993, %v2185
        %v2218 = vadd.f32 %v1994, %v2186
        %v2219 = vadd.f32 %v1995, %v2187
        %v2220 = vadd.f32 %v1996, %v2188
        %v2221 = vadd.f32 %v1997, %v2189
        %v2222 = vadd.f32 %v1998, %v2190
        %v2223 = vadd.f32 %v1999, %v2191
        %v2224 = vadd.f32 %v2000, %v2192
        %v2225 = vadd.f32 %v2001, %v2193
        %v2226 = vadd.f32 %v2002, %v2194
        %v2227 = vadd.f32 %v2003, %v2195
        %v2228 = vadd.f32 %v2004, %v2196
        %2229 = vset.pattern.permute.xlu0 7
        %2230 = vperm.xlu0 %2229, %v629
        %v2231 = vpop.permute.xlu0 %2230
        %2232 = vset.pattern.permute.xlu0 7
        %2233 = vperm.xlu0 %2232, %v630
        %v2234 = vpop.permute.xlu0 %2233
        %2235 = vset.pattern.permute.xlu0 7
        %2236 = vperm.xlu0 %2235, %v631
        %v2237 = vpop.permute.xlu0 %2236
        %2238 = vset.pattern.permute.xlu0 7
        %2239 = vperm.xlu0 %2238, %v632
        %v2240 = vpop.permute.xlu0 %2239
        %2241 = vset.pattern.permute.xlu0 7
        %2242 = vperm.xlu0 %2241, %v633
        %v2243 = vpop.permute.xlu0 %2242
        %2244 = vset.pattern.permute.xlu0 7
        %2245 = vperm.xlu0 %2244, %v634
        %v2246 = vpop.permute.xlu0 %2245
        %2247 = vset.pattern.permute.xlu0 7
        %2248 = vperm.xlu0 %2247, %v635
        %v2249 = vpop.permute.xlu0 %2248
        %2250 = vset.pattern.permute.xlu0 7
        %2251 = vperm.xlu0 %2250, %v636
        %v2252 = vpop.permute.xlu0 %2251
        %2253 = vset.pattern.permute.xlu0 7
        %2254 = vperm.xlu0 %2253, %v637
        %v2255 = vpop.permute.xlu0 %2254
        %2256 = vset.pattern.permute.xlu0 7
        %2257 = vperm.xlu0 %2256, %v638
        %v2258 = vpop.permute.xlu0 %2257
        %2259 = vset.pattern.permute.xlu0 7
        %2260 = vperm.xlu0 %2259, %v639
        %v2261 = vpop.permute.xlu0 %2260
        %2262 = vset.pattern.permute.xlu0 7
        %2263 = vperm.xlu0 %2262, %v640
        %v2264 = vpop.permute.xlu0 %2263
        %2265 = vset.pattern.permute.xlu0 7
        %2266 = vperm.xlu0 %2265, %v641
        %v2267 = vpop.permute.xlu0 %2266
        %2268 = vset.pattern.permute.xlu0 7
        %2269 = vperm.xlu0 %2268, %v642
        %v2270 = vpop.permute.xlu0 %2269
        %2271 = vset.pattern.permute.xlu0 7
        %2272 = vperm.xlu0 %2271, %v643
        %v2273 = vpop.permute.xlu0 %2272
        %2274 = vset.pattern.permute.xlu0 7
        %2275 = vperm.xlu0 %2274, %v644
        %v2276 = vpop.permute.xlu0 %2275
        %2277 = vset.pattern.permute.xlu0 7
        %2278 = vperm.xlu0 %2277, %v645
        %v2279 = vpop.permute.xlu0 %2278
        %2280 = vset.pattern.permute.xlu0 7
        %2281 = vperm.xlu0 %2280, %v646
        %v2282 = vpop.permute.xlu0 %2281
        %2283 = vset.pattern.permute.xlu0 7
        %2284 = vperm.xlu0 %2283, %v647
        %v2285 = vpop.permute.xlu0 %2284
        %2286 = vset.pattern.permute.xlu0 7
        %2287 = vperm.xlu0 %2286, %v648
        %v2288 = vpop.permute.xlu0 %2287
        %2289 = vset.pattern.permute.xlu0 7
        %2290 = vperm.xlu0 %2289, %v649
        %v2291 = vpop.permute.xlu0 %2290
        %2292 = vset.pattern.permute.xlu0 7
        %2293 = vperm.xlu0 %2292, %v650
        %v2294 = vpop.permute.xlu0 %2293
        %2295 = vset.pattern.permute.xlu0 7
        %2296 = vperm.xlu0 %2295, %v651
        %v2297 = vpop.permute.xlu0 %2296
        %2298 = vset.pattern.permute.xlu0 7
        %2299 = vperm.xlu0 %2298, %v652
        %v2300 = vpop.permute.xlu0 %2299
        %2301 = vset.pattern.permute.xlu0 7
        %2302 = vperm.xlu0 %2301, %v653
        %v2303 = vpop.permute.xlu0 %2302
        %2304 = vset.pattern.permute.xlu0 7
        %2305 = vperm.xlu0 %2304, %v654
        %v2306 = vpop.permute.xlu0 %2305
        %2307 = vset.pattern.permute.xlu0 7
        %2308 = vperm.xlu0 %2307, %v655
        %v2309 = vpop.permute.xlu0 %2308
        %2310 = vset.pattern.permute.xlu0 7
        %2311 = vperm.xlu0 %2310, %v656
        %v2312 = vpop.permute.xlu0 %2311
        %2313 = vset.pattern.permute.xlu0 7
        %2314 = vperm.xlu0 %2313, %v657
        %v2315 = vpop.permute.xlu0 %2314
        %2316 = vset.pattern.permute.xlu0 7
        %2317 = vperm.xlu0 %2316, %v658
        %v2318 = vpop.permute.xlu0 %2317
        %2319 = vset.pattern.permute.xlu0 7
        %2320 = vperm.xlu0 %2319, %v659
        %v2321 = vpop.permute.xlu0 %2320
        %2322 = vset.pattern.permute.xlu0 7
        %2323 = vperm.xlu0 %2322, %v660
        %v2324 = vpop.permute.xlu0 %2323
        %vm2325 = vcmp.eq.s32.totalorder %v2231, %v500
        %vm2326 = vcmp.eq.s32.totalorder %v2234, %v500
        %vm2327 = vcmp.eq.s32.totalorder %v2237, %v500
        %vm2328 = vcmp.eq.s32.totalorder %v2240, %v500
        %vm2329 = vcmp.eq.s32.totalorder %v2243, %v500
        %vm2330 = vcmp.eq.s32.totalorder %v2246, %v500
        %vm2331 = vcmp.eq.s32.totalorder %v2249, %v500
        %vm2332 = vcmp.eq.s32.totalorder %v2252, %v500
        %vm2333 = vcmp.eq.s32.totalorder %v2255, %v500
        %vm2334 = vcmp.eq.s32.totalorder %v2258, %v500
        %vm2335 = vcmp.eq.s32.totalorder %v2261, %v500
        %vm2336 = vcmp.eq.s32.totalorder %v2264, %v500
        %vm2337 = vcmp.eq.s32.totalorder %v2267, %v500
        %vm2338 = vcmp.eq.s32.totalorder %v2270, %v500
        %vm2339 = vcmp.eq.s32.totalorder %v2273, %v500
        %vm2340 = vcmp.eq.s32.totalorder %v2276, %v500
        %vm2341 = vcmp.eq.s32.totalorder %v2279, %v500
        %vm2342 = vcmp.eq.s32.totalorder %v2282, %v500
        %vm2343 = vcmp.eq.s32.totalorder %v2285, %v500
        %vm2344 = vcmp.eq.s32.totalorder %v2288, %v500
        %vm2345 = vcmp.eq.s32.totalorder %v2291, %v500
        %vm2346 = vcmp.eq.s32.totalorder %v2294, %v500
        %vm2347 = vcmp.eq.s32.totalorder %v2297, %v500
        %vm2348 = vcmp.eq.s32.totalorder %v2300, %v500
        %vm2349 = vcmp.eq.s32.totalorder %v2303, %v500
        %vm2350 = vcmp.eq.s32.totalorder %v2306, %v500
        %vm2351 = vcmp.eq.s32.totalorder %v2309, %v500
        %vm2352 = vcmp.eq.s32.totalorder %v2312, %v500
        %vm2353 = vcmp.eq.s32.totalorder %v2315, %v500
        %vm2354 = vcmp.eq.s32.totalorder %v2318, %v500
        %vm2355 = vcmp.eq.s32.totalorder %v2321, %v500
        %vm2356 = vcmp.eq.s32.totalorder %v2324, %v500
        %v2357 = vsel %vm2325, 1, 0
        %v2358 = vsel %vm2326, 1, 0
        %v2359 = vsel %vm2327, 1, 0
        %v2360 = vsel %vm2328, 1, 0
        %v2361 = vsel %vm2329, 1, 0
        %v2362 = vsel %vm2330, 1, 0
        %v2363 = vsel %vm2331, 1, 0
        %v2364 = vsel %vm2332, 1, 0
        %v2365 = vsel %vm2333, 1, 0
        %v2366 = vsel %vm2334, 1, 0
        %v2367 = vsel %vm2335, 1, 0
        %v2368 = vsel %vm2336, 1, 0
        %v2369 = vsel %vm2337, 1, 0
        %v2370 = vsel %vm2338, 1, 0
        %v2371 = vsel %vm2339, 1, 0
        %v2372 = vsel %vm2340, 1, 0
        %v2373 = vsel %vm2341, 1, 0
        %v2374 = vsel %vm2342, 1, 0
        %v2375 = vsel %vm2343, 1, 0
        %v2376 = vsel %vm2344, 1, 0
        %v2377 = vsel %vm2345, 1, 0
        %v2378 = vsel %vm2346, 1, 0
        %v2379 = vsel %vm2347, 1, 0
        %v2380 = vsel %vm2348, 1, 0
        %v2381 = vsel %vm2349, 1, 0
        %v2382 = vsel %vm2350, 1, 0
        %v2383 = vsel %vm2351, 1, 0
        %v2384 = vsel %vm2352, 1, 0
        %v2385 = vsel %vm2353, 1, 0
        %v2386 = vsel %vm2354, 1, 0
        %v2387 = vsel %vm2355, 1, 0
        %v2388 = vsel %vm2356, 1, 0
        %v2389 = vcvt.s32.f32 %v2357
        %v2390 = vcvt.s32.f32 %v2358
        %v2391 = vcvt.s32.f32 %v2359
        %v2392 = vcvt.s32.f32 %v2360
        %v2393 = vcvt.s32.f32 %v2361
        %v2394 = vcvt.s32.f32 %v2362
        %v2395 = vcvt.s32.f32 %v2363
        %v2396 = vcvt.s32.f32 %v2364
        %v2397 = vcvt.s32.f32 %v2365
        %v2398 = vcvt.s32.f32 %v2366
        %v2399 = vcvt.s32.f32 %v2367
        %v2400 = vcvt.s32.f32 %v2368
        %v2401 = vcvt.s32.f32 %v2369
        %v2402 = vcvt.s32.f32 %v2370
        %v2403 = vcvt.s32.f32 %v2371
        %v2404 = vcvt.s32.f32 %v2372
        %v2405 = vcvt.s32.f32 %v2373
        %v2406 = vcvt.s32.f32 %v2374
        %v2407 = vcvt.s32.f32 %v2375
        %v2408 = vcvt.s32.f32 %v2376
        %v2409 = vcvt.s32.f32 %v2377
        %v2410 = vcvt.s32.f32 %v2378
        %v2411 = vcvt.s32.f32 %v2379
        %v2412 = vcvt.s32.f32 %v2380
        %v2413 = vcvt.s32.f32 %v2381
        %v2414 = vcvt.s32.f32 %v2382
        %v2415 = vcvt.s32.f32 %v2383
        %v2416 = vcvt.s32.f32 %v2384
        %v2417 = vcvt.s32.f32 %v2385
        %v2418 = vcvt.s32.f32 %v2386
        %v2419 = vcvt.s32.f32 %v2387
        %v2420 = vcvt.s32.f32 %v2388
        %v2421 = vadd.f32 %v2197, %v2389
        %v2422 = vadd.f32 %v2198, %v2390
        %v2423 = vadd.f32 %v2199, %v2391
        %v2424 = vadd.f32 %v2200, %v2392
        %v2425 = vadd.f32 %v2201, %v2393
        %v2426 = vadd.f32 %v2202, %v2394
        %v2427 = vadd.f32 %v2203, %v2395
        %v2428 = vadd.f32 %v2204, %v2396
        %v2429 = vadd.f32 %v2205, %v2397
        %v2430 = vadd.f32 %v2206, %v2398
        %v2431 = vadd.f32 %v2207, %v2399
        %v2432 = vadd.f32 %v2208, %v2400
        %v2433 = vadd.f32 %v2209, %v2401
        %v2434 = vadd.f32 %v2210, %v2402
        %v2435 = vadd.f32 %v2211, %v2403
        %v2436 = vadd.f32 %v2212, %v2404
        %v2437 = vadd.f32 %v2213, %v2405
        %v2438 = vadd.f32 %v2214, %v2406
        %v2439 = vadd.f32 %v2215, %v2407
        %v2440 = vadd.f32 %v2216, %v2408
        %v2441 = vadd.f32 %v2217, %v2409
        %v2442 = vadd.f32 %v2218, %v2410
        %v2443 = vadd.f32 %v2219, %v2411
        %v2444 = vadd.f32 %v2220, %v2412
        %v2445 = vadd.f32 %v2221, %v2413
        %v2446 = vadd.f32 %v2222, %v2414
        %v2447 = vadd.f32 %v2223, %v2415
        %v2448 = vadd.f32 %v2224, %v2416
        %v2449 = vadd.f32 %v2225, %v2417
        %v2450 = vadd.f32 %v2226, %v2418
        %v2451 = vadd.f32 %v2227, %v2419
        %v2452 = vadd.f32 %v2228, %v2420
        %vm2453 = vcmp.gt.s32.totalorder %v467, 1
        %vm2454 = vcmp.gt.s32.totalorder %v468, 1
        %vm2455 = vcmp.gt.s32.totalorder %v469, 1
        %vm2456 = vcmp.gt.s32.totalorder %v470, 1
        %vm2457 = vcmp.gt.s32.totalorder %v471, 1
        %vm2458 = vcmp.gt.s32.totalorder %v472, 1
        %vm2459 = vcmp.gt.s32.totalorder %v473, 1
        %vm2460 = vcmp.gt.s32.totalorder %v474, 1
        %vm2461 = vcmp.gt.s32.totalorder %v475, 1
        %vm2462 = vcmp.gt.s32.totalorder %v476, 1
        %vm2463 = vcmp.gt.s32.totalorder %v477, 1
        %vm2464 = vcmp.gt.s32.totalorder %v478, 1
        %vm2465 = vcmp.gt.s32.totalorder %v479, 1
        %vm2466 = vcmp.gt.s32.totalorder %v480, 1
        %vm2467 = vcmp.gt.s32.totalorder %v481, 1
        %vm2468 = vcmp.gt.s32.totalorder %v482, 1
        %vm2469 = vcmp.gt.s32.totalorder %v483, 1
        %vm2470 = vcmp.gt.s32.totalorder %v484, 1
        %vm2471 = vcmp.gt.s32.totalorder %v485, 1
        %vm2472 = vcmp.gt.s32.totalorder %v486, 1
        %vm2473 = vcmp.gt.s32.totalorder %v487, 1
        %vm2474 = vcmp.gt.s32.totalorder %v488, 1
        %vm2475 = vcmp.gt.s32.totalorder %v489, 1
        %vm2476 = vcmp.gt.s32.totalorder %v490, 1
        %vm2477 = vcmp.gt.s32.totalorder %v491, 1
        %vm2478 = vcmp.gt.s32.totalorder %v492, 1
        %vm2479 = vcmp.gt.s32.totalorder %v493, 1
        %vm2480 = vcmp.gt.s32.totalorder %v494, 1
        %vm2481 = vcmp.gt.s32.totalorder %v495, 1
        %vm2482 = vcmp.gt.s32.totalorder %v496, 1
        %vm2483 = vcmp.gt.s32.totalorder %v497, 1
        %vm2484 = vcmp.gt.s32.totalorder %v498, 1
        %2485 = vrot.lane.b32.xlu0 %v403, 127
        %v2486 = vpop.permute.xlu0 %2485
        %2487 = vrot.lane.b32.xlu0 %v404, 127
        %v2488 = vpop.permute.xlu0 %2487
        %2489 = vrot.lane.b32.xlu0 %v405, 127
        %v2490 = vpop.permute.xlu0 %2489
        %2491 = vrot.lane.b32.xlu0 %v406, 127
        %v2492 = vpop.permute.xlu0 %2491
        %2493 = vrot.lane.b32.xlu0 %v407, 127
        %v2494 = vpop.permute.xlu0 %2493
        %2495 = vrot.lane.b32.xlu0 %v408, 127
        %v2496 = vpop.permute.xlu0 %2495
        %2497 = vrot.lane.b32.xlu0 %v409, 127
        %v2498 = vpop.permute.xlu0 %2497
        %2499 = vrot.lane.b32.xlu0 %v410, 127
        %v2500 = vpop.permute.xlu0 %2499
        %2501 = vrot.lane.b32.xlu0 %v411, 127
        %v2502 = vpop.permute.xlu0 %2501
        %2503 = vrot.lane.b32.xlu0 %v412, 127
        %v2504 = vpop.permute.xlu0 %2503
        %2505 = vrot.lane.b32.xlu0 %v413, 127
        %v2506 = vpop.permute.xlu0 %2505
        %2507 = vrot.lane.b32.xlu0 %v414, 127
        %v2508 = vpop.permute.xlu0 %2507
        %2509 = vrot.lane.b32.xlu0 %v415, 127
        %v2510 = vpop.permute.xlu0 %2509
        %2511 = vrot.lane.b32.xlu0 %v416, 127
        %v2512 = vpop.permute.xlu0 %2511
        %2513 = vrot.lane.b32.xlu0 %v417, 127
        %v2514 = vpop.permute.xlu0 %2513
        %2515 = vrot.lane.b32.xlu0 %v418, 127
        %v2516 = vpop.permute.xlu0 %2515
        %2517 = vrot.lane.b32.xlu0 %v419, 127
        %v2518 = vpop.permute.xlu0 %2517
        %2519 = vrot.lane.b32.xlu0 %v420, 127
        %v2520 = vpop.permute.xlu0 %2519
        %2521 = vrot.lane.b32.xlu0 %v421, 127
        %v2522 = vpop.permute.xlu0 %2521
        %2523 = vrot.lane.b32.xlu0 %v422, 127
        %v2524 = vpop.permute.xlu0 %2523
        %2525 = vrot.lane.b32.xlu0 %v423, 127
        %v2526 = vpop.permute.xlu0 %2525
        %2527 = vrot.lane.b32.xlu0 %v424, 127
        %v2528 = vpop.permute.xlu0 %2527
        %2529 = vrot.lane.b32.xlu0 %v425, 127
        %v2530 = vpop.permute.xlu0 %2529
        %2531 = vrot.lane.b32.xlu0 %v426, 127
        %v2532 = vpop.permute.xlu0 %2531
        %2533 = vrot.lane.b32.xlu0 %v427, 127
        %v2534 = vpop.permute.xlu0 %2533
        %2535 = vrot.lane.b32.xlu0 %v428, 127
        %v2536 = vpop.permute.xlu0 %2535
        %2537 = vrot.lane.b32.xlu0 %v429, 127
        %v2538 = vpop.permute.xlu0 %2537
        %2539 = vrot.lane.b32.xlu0 %v430, 127
        %v2540 = vpop.permute.xlu0 %2539
        %2541 = vrot.lane.b32.xlu0 %v431, 127
        %v2542 = vpop.permute.xlu0 %2541
        %2543 = vrot.lane.b32.xlu0 %v432, 127
        %v2544 = vpop.permute.xlu0 %2543
        %2545 = vrot.lane.b32.xlu0 %v433, 127
        %v2546 = vpop.permute.xlu0 %2545
        %2547 = vrot.lane.b32.xlu0 %v434, 127
        %v2548 = vpop.permute.xlu0 %2547
        %v2549 = vsel %vm2453, %v2486, %v403
        %v2550 = vsel %vm2454, %v2488, %v404
        %v2551 = vsel %vm2455, %v2490, %v405
        %v2552 = vsel %vm2456, %v2492, %v406
        %v2553 = vsel %vm2457, %v2494, %v407
        %v2554 = vsel %vm2458, %v2496, %v408
        %v2555 = vsel %vm2459, %v2498, %v409
        %v2556 = vsel %vm2460, %v2500, %v410
        %v2557 = vsel %vm2461, %v2502, %v411
        %v2558 = vsel %vm2462, %v2504, %v412
        %v2559 = vsel %vm2463, %v2506, %v413
        %v2560 = vsel %vm2464, %v2508, %v414
        %v2561 = vsel %vm2465, %v2510, %v415
        %v2562 = vsel %vm2466, %v2512, %v416
        %v2563 = vsel %vm2467, %v2514, %v417
        %v2564 = vsel %vm2468, %v2516, %v418
        %v2565 = vsel %vm2469, %v2518, %v419
        %v2566 = vsel %vm2470, %v2520, %v420
        %v2567 = vsel %vm2471, %v2522, %v421
        %v2568 = vsel %vm2472, %v2524, %v422
        %v2569 = vsel %vm2473, %v2526, %v423
        %v2570 = vsel %vm2474, %v2528, %v424
        %v2571 = vsel %vm2475, %v2530, %v425
        %v2572 = vsel %vm2476, %v2532, %v426
        %v2573 = vsel %vm2477, %v2534, %v427
        %v2574 = vsel %vm2478, %v2536, %v428
        %v2575 = vsel %vm2479, %v2538, %v429
        %v2576 = vsel %vm2480, %v2540, %v430
        %v2577 = vsel %vm2481, %v2542, %v431
        %v2578 = vsel %vm2482, %v2544, %v432
        %v2579 = vsel %vm2483, %v2546, %v433
        %v2580 = vsel %vm2484, %v2548, %v434
        %vm2581 = vcmp.eq.s32.totalorder %v467, 1
        %vm2582 = vcmp.eq.s32.totalorder %v468, 1
        %vm2583 = vcmp.eq.s32.totalorder %v469, 1
        %vm2584 = vcmp.eq.s32.totalorder %v470, 1
        %vm2585 = vcmp.eq.s32.totalorder %v471, 1
        %vm2586 = vcmp.eq.s32.totalorder %v472, 1
        %vm2587 = vcmp.eq.s32.totalorder %v473, 1
        %vm2588 = vcmp.eq.s32.totalorder %v474, 1
        %vm2589 = vcmp.eq.s32.totalorder %v475, 1
        %vm2590 = vcmp.eq.s32.totalorder %v476, 1
        %vm2591 = vcmp.eq.s32.totalorder %v477, 1
        %vm2592 = vcmp.eq.s32.totalorder %v478, 1
        %vm2593 = vcmp.eq.s32.totalorder %v479, 1
        %vm2594 = vcmp.eq.s32.totalorder %v480, 1
        %vm2595 = vcmp.eq.s32.totalorder %v481, 1
        %vm2596 = vcmp.eq.s32.totalorder %v482, 1
        %vm2597 = vcmp.eq.s32.totalorder %v483, 1
        %vm2598 = vcmp.eq.s32.totalorder %v484, 1
        %vm2599 = vcmp.eq.s32.totalorder %v485, 1
        %vm2600 = vcmp.eq.s32.totalorder %v486, 1
        %vm2601 = vcmp.eq.s32.totalorder %v487, 1
        %vm2602 = vcmp.eq.s32.totalorder %v488, 1
        %vm2603 = vcmp.eq.s32.totalorder %v489, 1
        %vm2604 = vcmp.eq.s32.totalorder %v490, 1
        %vm2605 = vcmp.eq.s32.totalorder %v491, 1
        %vm2606 = vcmp.eq.s32.totalorder %v492, 1
        %vm2607 = vcmp.eq.s32.totalorder %v493, 1
        %vm2608 = vcmp.eq.s32.totalorder %v494, 1
        %vm2609 = vcmp.eq.s32.totalorder %v495, 1
        %vm2610 = vcmp.eq.s32.totalorder %v496, 1
        %vm2611 = vcmp.eq.s32.totalorder %v497, 1
        %vm2612 = vcmp.eq.s32.totalorder %v498, 1
        %v2613 = vsel %vm2581, %v2486, 0
        %v2614 = vsel %vm2582, %v2488, 0
        %v2615 = vsel %vm2583, %v2490, 0
        %v2616 = vsel %vm2584, %v2492, 0
        %v2617 = vsel %vm2585, %v2494, 0
        %v2618 = vsel %vm2586, %v2496, 0
        %v2619 = vsel %vm2587, %v2498, 0
        %v2620 = vsel %vm2588, %v2500, 0
        %v2621 = vsel %vm2589, %v2502, 0
        %v2622 = vsel %vm2590, %v2504, 0
        %v2623 = vsel %vm2591, %v2506, 0
        %v2624 = vsel %vm2592, %v2508, 0
        %v2625 = vsel %vm2593, %v2510, 0
        %v2626 = vsel %vm2594, %v2512, 0
        %v2627 = vsel %vm2595, %v2514, 0
        %v2628 = vsel %vm2596, %v2516, 0
        %v2629 = vsel %vm2597, %v2518, 0
        %v2630 = vsel %vm2598, %v2520, 0
        %v2631 = vsel %vm2599, %v2522, 0
        %v2632 = vsel %vm2600, %v2524, 0
        %v2633 = vsel %vm2601, %v2526, 0
        %v2634 = vsel %vm2602, %v2528, 0
        %v2635 = vsel %vm2603, %v2530, 0
        %v2636 = vsel %vm2604, %v2532, 0
        %v2637 = vsel %vm2605, %v2534, 0
        %v2638 = vsel %vm2606, %v2536, 0
        %v2639 = vsel %vm2607, %v2538, 0
        %v2640 = vsel %vm2608, %v2540, 0
        %v2641 = vsel %vm2609, %v2542, 0
        %v2642 = vsel %vm2610, %v2544, 0
        %v2643 = vsel %vm2611, %v2546, 0
        %v2644 = vsel %vm2612, %v2548, 0
        %vm2645 = vcmp.gt.s32.totalorder %v467, 2
        %vm2646 = vcmp.gt.s32.totalorder %v468, 2
        %vm2647 = vcmp.gt.s32.totalorder %v469, 2
        %vm2648 = vcmp.gt.s32.totalorder %v470, 2
        %vm2649 = vcmp.gt.s32.totalorder %v471, 2
        %vm2650 = vcmp.gt.s32.totalorder %v472, 2
        %vm2651 = vcmp.gt.s32.totalorder %v473, 2
        %vm2652 = vcmp.gt.s32.totalorder %v474, 2
        %vm2653 = vcmp.gt.s32.totalorder %v475, 2
        %vm2654 = vcmp.gt.s32.totalorder %v476, 2
        %vm2655 = vcmp.gt.s32.totalorder %v477, 2
        %vm2656 = vcmp.gt.s32.totalorder %v478, 2
        %vm2657 = vcmp.gt.s32.totalorder %v479, 2
        %vm2658 = vcmp.gt.s32.totalorder %v480, 2
        %vm2659 = vcmp.gt.s32.totalorder %v481, 2
        %vm2660 = vcmp.gt.s32.totalorder %v482, 2
        %vm2661 = vcmp.gt.s32.totalorder %v483, 2
        %vm2662 = vcmp.gt.s32.totalorder %v484, 2
        %vm2663 = vcmp.gt.s32.totalorder %v485, 2
        %vm2664 = vcmp.gt.s32.totalorder %v486, 2
        %vm2665 = vcmp.gt.s32.totalorder %v487, 2
        %vm2666 = vcmp.gt.s32.totalorder %v488, 2
        %vm2667 = vcmp.gt.s32.totalorder %v489, 2
        %vm2668 = vcmp.gt.s32.totalorder %v490, 2
        %vm2669 = vcmp.gt.s32.totalorder %v491, 2
        %vm2670 = vcmp.gt.s32.totalorder %v492, 2
        %vm2671 = vcmp.gt.s32.totalorder %v493, 2
        %vm2672 = vcmp.gt.s32.totalorder %v494, 2
        %vm2673 = vcmp.gt.s32.totalorder %v495, 2
        %vm2674 = vcmp.gt.s32.totalorder %v496, 2
        %vm2675 = vcmp.gt.s32.totalorder %v497, 2
        %vm2676 = vcmp.gt.s32.totalorder %v498, 2
        %2677 = vrot.lane.b32.xlu0 %v403, 126
        %v2678 = vpop.permute.xlu0 %2677
        %2679 = vrot.lane.b32.xlu0 %v404, 126
        %v2680 = vpop.permute.xlu0 %2679
        %2681 = vrot.lane.b32.xlu0 %v405, 126
        %v2682 = vpop.permute.xlu0 %2681
        %2683 = vrot.lane.b32.xlu0 %v406, 126
        %v2684 = vpop.permute.xlu0 %2683
        %2685 = vrot.lane.b32.xlu0 %v407, 126
        %v2686 = vpop.permute.xlu0 %2685
        %2687 = vrot.lane.b32.xlu0 %v408, 126
        %v2688 = vpop.permute.xlu0 %2687
        %2689 = vrot.lane.b32.xlu0 %v409, 126
        %v2690 = vpop.permute.xlu0 %2689
        %2691 = vrot.lane.b32.xlu0 %v410, 126
        %v2692 = vpop.permute.xlu0 %2691
        %2693 = vrot.lane.b32.xlu0 %v411, 126
        %v2694 = vpop.permute.xlu0 %2693
        %2695 = vrot.lane.b32.xlu0 %v412, 126
        %v2696 = vpop.permute.xlu0 %2695
        %2697 = vrot.lane.b32.xlu0 %v413, 126
        %v2698 = vpop.permute.xlu0 %2697
        %2699 = vrot.lane.b32.xlu0 %v414, 126
        %v2700 = vpop.permute.xlu0 %2699
        %2701 = vrot.lane.b32.xlu0 %v415, 126
        %v2702 = vpop.permute.xlu0 %2701
        %2703 = vrot.lane.b32.xlu0 %v416, 126
        %v2704 = vpop.permute.xlu0 %2703
        %2705 = vrot.lane.b32.xlu0 %v417, 126
        %v2706 = vpop.permute.xlu0 %2705
        %2707 = vrot.lane.b32.xlu0 %v418, 126
        %v2708 = vpop.permute.xlu0 %2707
        %2709 = vrot.lane.b32.xlu0 %v419, 126
        %v2710 = vpop.permute.xlu0 %2709
        %2711 = vrot.lane.b32.xlu0 %v420, 126
        %v2712 = vpop.permute.xlu0 %2711
        %2713 = vrot.lane.b32.xlu0 %v421, 126
        %v2714 = vpop.permute.xlu0 %2713
        %2715 = vrot.lane.b32.xlu0 %v422, 126
        %v2716 = vpop.permute.xlu0 %2715
        %2717 = vrot.lane.b32.xlu0 %v423, 126
        %v2718 = vpop.permute.xlu0 %2717
        %2719 = vrot.lane.b32.xlu0 %v424, 126
        %v2720 = vpop.permute.xlu0 %2719
        %2721 = vrot.lane.b32.xlu0 %v425, 126
        %v2722 = vpop.permute.xlu0 %2721
        %2723 = vrot.lane.b32.xlu0 %v426, 126
        %v2724 = vpop.permute.xlu0 %2723
        %2725 = vrot.lane.b32.xlu0 %v427, 126
        %v2726 = vpop.permute.xlu0 %2725
        %2727 = vrot.lane.b32.xlu0 %v428, 126
        %v2728 = vpop.permute.xlu0 %2727
        %2729 = vrot.lane.b32.xlu0 %v429, 126
        %v2730 = vpop.permute.xlu0 %2729
        %2731 = vrot.lane.b32.xlu0 %v430, 126
        %v2732 = vpop.permute.xlu0 %2731
        %2733 = vrot.lane.b32.xlu0 %v431, 126
        %v2734 = vpop.permute.xlu0 %2733
        %2735 = vrot.lane.b32.xlu0 %v432, 126
        %v2736 = vpop.permute.xlu0 %2735
        %2737 = vrot.lane.b32.xlu0 %v433, 126
        %v2738 = vpop.permute.xlu0 %2737
        %2739 = vrot.lane.b32.xlu0 %v434, 126
        %v2740 = vpop.permute.xlu0 %2739
        %v2741 = vsel %vm2645, %v2678, %v2549
        %v2742 = vsel %vm2646, %v2680, %v2550
        %v2743 = vsel %vm2647, %v2682, %v2551
        %v2744 = vsel %vm2648, %v2684, %v2552
        %v2745 = vsel %vm2649, %v2686, %v2553
        %v2746 = vsel %vm2650, %v2688, %v2554
        %v2747 = vsel %vm2651, %v2690, %v2555
        %v2748 = vsel %vm2652, %v2692, %v2556
        %v2749 = vsel %vm2653, %v2694, %v2557
        %v2750 = vsel %vm2654, %v2696, %v2558
        %v2751 = vsel %vm2655, %v2698, %v2559
        %v2752 = vsel %vm2656, %v2700, %v2560
        %v2753 = vsel %vm2657, %v2702, %v2561
        %v2754 = vsel %vm2658, %v2704, %v2562
        %v2755 = vsel %vm2659, %v2706, %v2563
        %v2756 = vsel %vm2660, %v2708, %v2564
        %v2757 = vsel %vm2661, %v2710, %v2565
        %v2758 = vsel %vm2662, %v2712, %v2566
        %v2759 = vsel %vm2663, %v2714, %v2567
        %v2760 = vsel %vm2664, %v2716, %v2568
        %v2761 = vsel %vm2665, %v2718, %v2569
        %v2762 = vsel %vm2666, %v2720, %v2570
        %v2763 = vsel %vm2667, %v2722, %v2571
        %v2764 = vsel %vm2668, %v2724, %v2572
        %v2765 = vsel %vm2669, %v2726, %v2573
        %v2766 = vsel %vm2670, %v2728, %v2574
        %v2767 = vsel %vm2671, %v2730, %v2575
        %v2768 = vsel %vm2672, %v2732, %v2576
        %v2769 = vsel %vm2673, %v2734, %v2577
        %v2770 = vsel %vm2674, %v2736, %v2578
        %v2771 = vsel %vm2675, %v2738, %v2579
        %v2772 = vsel %vm2676, %v2740, %v2580
        %vm2773 = vcmp.eq.s32.totalorder %v467, 2
        %vm2774 = vcmp.eq.s32.totalorder %v468, 2
        %vm2775 = vcmp.eq.s32.totalorder %v469, 2
        %vm2776 = vcmp.eq.s32.totalorder %v470, 2
        %vm2777 = vcmp.eq.s32.totalorder %v471, 2
        %vm2778 = vcmp.eq.s32.totalorder %v472, 2
        %vm2779 = vcmp.eq.s32.totalorder %v473, 2
        %vm2780 = vcmp.eq.s32.totalorder %v474, 2
        %vm2781 = vcmp.eq.s32.totalorder %v475, 2
        %vm2782 = vcmp.eq.s32.totalorder %v476, 2
        %vm2783 = vcmp.eq.s32.totalorder %v477, 2
        %vm2784 = vcmp.eq.s32.totalorder %v478, 2
        %vm2785 = vcmp.eq.s32.totalorder %v479, 2
        %vm2786 = vcmp.eq.s32.totalorder %v480, 2
        %vm2787 = vcmp.eq.s32.totalorder %v481, 2
        %vm2788 = vcmp.eq.s32.totalorder %v482, 2
        %vm2789 = vcmp.eq.s32.totalorder %v483, 2
        %vm2790 = vcmp.eq.s32.totalorder %v484, 2
        %vm2791 = vcmp.eq.s32.totalorder %v485, 2
        %vm2792 = vcmp.eq.s32.totalorder %v486, 2
        %vm2793 = vcmp.eq.s32.totalorder %v487, 2
        %vm2794 = vcmp.eq.s32.totalorder %v488, 2
        %vm2795 = vcmp.eq.s32.totalorder %v489, 2
        %vm2796 = vcmp.eq.s32.totalorder %v490, 2
        %vm2797 = vcmp.eq.s32.totalorder %v491, 2
        %vm2798 = vcmp.eq.s32.totalorder %v492, 2
        %vm2799 = vcmp.eq.s32.totalorder %v493, 2
        %vm2800 = vcmp.eq.s32.totalorder %v494, 2
        %vm2801 = vcmp.eq.s32.totalorder %v495, 2
        %vm2802 = vcmp.eq.s32.totalorder %v496, 2
        %vm2803 = vcmp.eq.s32.totalorder %v497, 2
        %vm2804 = vcmp.eq.s32.totalorder %v498, 2
        %v2805 = vsel %vm2773, %v2678, %v2613
        %v2806 = vsel %vm2774, %v2680, %v2614
        %v2807 = vsel %vm2775, %v2682, %v2615
        %v2808 = vsel %vm2776, %v2684, %v2616
        %v2809 = vsel %vm2777, %v2686, %v2617
        %v2810 = vsel %vm2778, %v2688, %v2618
        %v2811 = vsel %vm2779, %v2690, %v2619
        %v2812 = vsel %vm2780, %v2692, %v2620
        %v2813 = vsel %vm2781, %v2694, %v2621
        %v2814 = vsel %vm2782, %v2696, %v2622
        %v2815 = vsel %vm2783, %v2698, %v2623
        %v2816 = vsel %vm2784, %v2700, %v2624
        %v2817 = vsel %vm2785, %v2702, %v2625
        %v2818 = vsel %vm2786, %v2704, %v2626
        %v2819 = vsel %vm2787, %v2706, %v2627
        %v2820 = vsel %vm2788, %v2708, %v2628
        %v2821 = vsel %vm2789, %v2710, %v2629
        %v2822 = vsel %vm2790, %v2712, %v2630
        %v2823 = vsel %vm2791, %v2714, %v2631
        %v2824 = vsel %vm2792, %v2716, %v2632
        %v2825 = vsel %vm2793, %v2718, %v2633
        %v2826 = vsel %vm2794, %v2720, %v2634
        %v2827 = vsel %vm2795, %v2722, %v2635
        %v2828 = vsel %vm2796, %v2724, %v2636
        %v2829 = vsel %vm2797, %v2726, %v2637
        %v2830 = vsel %vm2798, %v2728, %v2638
        %v2831 = vsel %vm2799, %v2730, %v2639
        %v2832 = vsel %vm2800, %v2732, %v2640
        %v2833 = vsel %vm2801, %v2734, %v2641
        %v2834 = vsel %vm2802, %v2736, %v2642
        %v2835 = vsel %vm2803, %v2738, %v2643
        %v2836 = vsel %vm2804, %v2740, %v2644
        %vm2837 = vcmp.gt.s32.totalorder %v467, 3
        %vm2838 = vcmp.gt.s32.totalorder %v468, 3
        %vm2839 = vcmp.gt.s32.totalorder %v469, 3
        %vm2840 = vcmp.gt.s32.totalorder %v470, 3
        %vm2841 = vcmp.gt.s32.totalorder %v471, 3
        %vm2842 = vcmp.gt.s32.totalorder %v472, 3
        %vm2843 = vcmp.gt.s32.totalorder %v473, 3
        %vm2844 = vcmp.gt.s32.totalorder %v474, 3
        %vm2845 = vcmp.gt.s32.totalorder %v475, 3
        %vm2846 = vcmp.gt.s32.totalorder %v476, 3
        %vm2847 = vcmp.gt.s32.totalorder %v477, 3
        %vm2848 = vcmp.gt.s32.totalorder %v478, 3
        %vm2849 = vcmp.gt.s32.totalorder %v479, 3
        %vm2850 = vcmp.gt.s32.totalorder %v480, 3
        %vm2851 = vcmp.gt.s32.totalorder %v481, 3
        %vm2852 = vcmp.gt.s32.totalorder %v482, 3
        %vm2853 = vcmp.gt.s32.totalorder %v483, 3
        %vm2854 = vcmp.gt.s32.totalorder %v484, 3
        %vm2855 = vcmp.gt.s32.totalorder %v485, 3
        %vm2856 = vcmp.gt.s32.totalorder %v486, 3
        %vm2857 = vcmp.gt.s32.totalorder %v487, 3
        %vm2858 = vcmp.gt.s32.totalorder %v488, 3
        %vm2859 = vcmp.gt.s32.totalorder %v489, 3
        %vm2860 = vcmp.gt.s32.totalorder %v490, 3
        %vm2861 = vcmp.gt.s32.totalorder %v491, 3
        %vm2862 = vcmp.gt.s32.totalorder %v492, 3
        %vm2863 = vcmp.gt.s32.totalorder %v493, 3
        %vm2864 = vcmp.gt.s32.totalorder %v494, 3
        %vm2865 = vcmp.gt.s32.totalorder %v495, 3
        %vm2866 = vcmp.gt.s32.totalorder %v496, 3
        %vm2867 = vcmp.gt.s32.totalorder %v497, 3
        %vm2868 = vcmp.gt.s32.totalorder %v498, 3
        %2869 = vrot.lane.b32.xlu0 %v403, 125
        %v2870 = vpop.permute.xlu0 %2869
        %2871 = vrot.lane.b32.xlu0 %v404, 125
        %v2872 = vpop.permute.xlu0 %2871
        %2873 = vrot.lane.b32.xlu0 %v405, 125
        %v2874 = vpop.permute.xlu0 %2873
        %2875 = vrot.lane.b32.xlu0 %v406, 125
        %v2876 = vpop.permute.xlu0 %2875
        %2877 = vrot.lane.b32.xlu0 %v407, 125
        %v2878 = vpop.permute.xlu0 %2877
        %2879 = vrot.lane.b32.xlu0 %v408, 125
        %v2880 = vpop.permute.xlu0 %2879
        %2881 = vrot.lane.b32.xlu0 %v409, 125
        %v2882 = vpop.permute.xlu0 %2881
        %2883 = vrot.lane.b32.xlu0 %v410, 125
        %v2884 = vpop.permute.xlu0 %2883
        %2885 = vrot.lane.b32.xlu0 %v411, 125
        %v2886 = vpop.permute.xlu0 %2885
        %2887 = vrot.lane.b32.xlu0 %v412, 125
        %v2888 = vpop.permute.xlu0 %2887
        %2889 = vrot.lane.b32.xlu0 %v413, 125
        %v2890 = vpop.permute.xlu0 %2889
        %2891 = vrot.lane.b32.xlu0 %v414, 125
        %v2892 = vpop.permute.xlu0 %2891
        %2893 = vrot.lane.b32.xlu0 %v415, 125
        %v2894 = vpop.permute.xlu0 %2893
        %2895 = vrot.lane.b32.xlu0 %v416, 125
        %v2896 = vpop.permute.xlu0 %2895
        %2897 = vrot.lane.b32.xlu0 %v417, 125
        %v2898 = vpop.permute.xlu0 %2897
        %2899 = vrot.lane.b32.xlu0 %v418, 125
        %v2900 = vpop.permute.xlu0 %2899
        %2901 = vrot.lane.b32.xlu0 %v419, 125
        %v2902 = vpop.permute.xlu0 %2901
        %2903 = vrot.lane.b32.xlu0 %v420, 125
        %v2904 = vpop.permute.xlu0 %2903
        %2905 = vrot.lane.b32.xlu0 %v421, 125
        %v2906 = vpop.permute.xlu0 %2905
        %2907 = vrot.lane.b32.xlu0 %v422, 125
        %v2908 = vpop.permute.xlu0 %2907
        %2909 = vrot.lane.b32.xlu0 %v423, 125
        %v2910 = vpop.permute.xlu0 %2909
        %2911 = vrot.lane.b32.xlu0 %v424, 125
        %v2912 = vpop.permute.xlu0 %2911
        %2913 = vrot.lane.b32.xlu0 %v425, 125
        %v2914 = vpop.permute.xlu0 %2913
        %2915 = vrot.lane.b32.xlu0 %v426, 125
        %v2916 = vpop.permute.xlu0 %2915
        %2917 = vrot.lane.b32.xlu0 %v427, 125
        %v2918 = vpop.permute.xlu0 %2917
        %2919 = vrot.lane.b32.xlu0 %v428, 125
        %v2920 = vpop.permute.xlu0 %2919
        %2921 = vrot.lane.b32.xlu0 %v429, 125
        %v2922 = vpop.permute.xlu0 %2921
        %2923 = vrot.lane.b32.xlu0 %v430, 125
        %v2924 = vpop.permute.xlu0 %2923
        %2925 = vrot.lane.b32.xlu0 %v431, 125
        %v2926 = vpop.permute.xlu0 %2925
        %2927 = vrot.lane.b32.xlu0 %v432, 125
        %v2928 = vpop.permute.xlu0 %2927
        %2929 = vrot.lane.b32.xlu0 %v433, 125
        %v2930 = vpop.permute.xlu0 %2929
        %2931 = vrot.lane.b32.xlu0 %v434, 125
        %v2932 = vpop.permute.xlu0 %2931
        %v2933 = vsel %vm2837, %v2870, %v2741
        %v2934 = vsel %vm2838, %v2872, %v2742
        %v2935 = vsel %vm2839, %v2874, %v2743
        %v2936 = vsel %vm2840, %v2876, %v2744
        %v2937 = vsel %vm2841, %v2878, %v2745
        %v2938 = vsel %vm2842, %v2880, %v2746
        %v2939 = vsel %vm2843, %v2882, %v2747
        %v2940 = vsel %vm2844, %v2884, %v2748
        %v2941 = vsel %vm2845, %v2886, %v2749
        %v2942 = vsel %vm2846, %v2888, %v2750
        %v2943 = vsel %vm2847, %v2890, %v2751
        %v2944 = vsel %vm2848, %v2892, %v2752
        %v2945 = vsel %vm2849, %v2894, %v2753
        %v2946 = vsel %vm2850, %v2896, %v2754
        %v2947 = vsel %vm2851, %v2898, %v2755
        %v2948 = vsel %vm2852, %v2900, %v2756
        %v2949 = vsel %vm2853, %v2902, %v2757
        %v2950 = vsel %vm2854, %v2904, %v2758
        %v2951 = vsel %vm2855, %v2906, %v2759
        %v2952 = vsel %vm2856, %v2908, %v2760
        %v2953 = vsel %vm2857, %v2910, %v2761
        %v2954 = vsel %vm2858, %v2912, %v2762
        %v2955 = vsel %vm2859, %v2914, %v2763
        %v2956 = vsel %vm2860, %v2916, %v2764
        %v2957 = vsel %vm2861, %v2918, %v2765
        %v2958 = vsel %vm2862, %v2920, %v2766
        %v2959 = vsel %vm2863, %v2922, %v2767
        %v2960 = vsel %vm2864, %v2924, %v2768
        %v2961 = vsel %vm2865, %v2926, %v2769
        %v2962 = vsel %vm2866, %v2928, %v2770
        %v2963 = vsel %vm2867, %v2930, %v2771
        %v2964 = vsel %vm2868, %v2932, %v2772
        %vm2965 = vcmp.eq.s32.totalorder %v467, 3
        %vm2966 = vcmp.eq.s32.totalorder %v468, 3
        %vm2967 = vcmp.eq.s32.totalorder %v469, 3
        %vm2968 = vcmp.eq.s32.totalorder %v470, 3
        %vm2969 = vcmp.eq.s32.totalorder %v471, 3
        %vm2970 = vcmp.eq.s32.totalorder %v472, 3
        %vm2971 = vcmp.eq.s32.totalorder %v473, 3
        %vm2972 = vcmp.eq.s32.totalorder %v474, 3
        %vm2973 = vcmp.eq.s32.totalorder %v475, 3
        %vm2974 = vcmp.eq.s32.totalorder %v476, 3
        %vm2975 = vcmp.eq.s32.totalorder %v477, 3
        %vm2976 = vcmp.eq.s32.totalorder %v478, 3
        %vm2977 = vcmp.eq.s32.totalorder %v479, 3
        %vm2978 = vcmp.eq.s32.totalorder %v480, 3
        %vm2979 = vcmp.eq.s32.totalorder %v481, 3
        %vm2980 = vcmp.eq.s32.totalorder %v482, 3
        %vm2981 = vcmp.eq.s32.totalorder %v483, 3
        %vm2982 = vcmp.eq.s32.totalorder %v484, 3
        %vm2983 = vcmp.eq.s32.totalorder %v485, 3
        %vm2984 = vcmp.eq.s32.totalorder %v486, 3
        %vm2985 = vcmp.eq.s32.totalorder %v487, 3
        %vm2986 = vcmp.eq.s32.totalorder %v488, 3
        %vm2987 = vcmp.eq.s32.totalorder %v489, 3
        %vm2988 = vcmp.eq.s32.totalorder %v490, 3
        %vm2989 = vcmp.eq.s32.totalorder %v491, 3
        %vm2990 = vcmp.eq.s32.totalorder %v492, 3
        %vm2991 = vcmp.eq.s32.totalorder %v493, 3
        %vm2992 = vcmp.eq.s32.totalorder %v494, 3
        %vm2993 = vcmp.eq.s32.totalorder %v495, 3
        %vm2994 = vcmp.eq.s32.totalorder %v496, 3
        %vm2995 = vcmp.eq.s32.totalorder %v497, 3
        %vm2996 = vcmp.eq.s32.totalorder %v498, 3
        %v2997 = vsel %vm2965, %v2870, %v2805
        %v2998 = vsel %vm2966, %v2872, %v2806
        %v2999 = vsel %vm2967, %v2874, %v2807
        %v3000 = vsel %vm2968, %v2876, %v2808
        %v3001 = vsel %vm2969, %v2878, %v2809
        %v3002 = vsel %vm2970, %v2880, %v2810
        %v3003 = vsel %vm2971, %v2882, %v2811
        %v3004 = vsel %vm2972, %v2884, %v2812
        %v3005 = vsel %vm2973, %v2886, %v2813
        %v3006 = vsel %vm2974, %v2888, %v2814
        %v3007 = vsel %vm2975, %v2890, %v2815
        %v3008 = vsel %vm2976, %v2892, %v2816
        %v3009 = vsel %vm2977, %v2894, %v2817
        %v3010 = vsel %vm2978, %v2896, %v2818
        %v3011 = vsel %vm2979, %v2898, %v2819
        %v3012 = vsel %vm2980, %v2900, %v2820
        %v3013 = vsel %vm2981, %v2902, %v2821
        %v3014 = vsel %vm2982, %v2904, %v2822
        %v3015 = vsel %vm2983, %v2906, %v2823
        %v3016 = vsel %vm2984, %v2908, %v2824
        %v3017 = vsel %vm2985, %v2910, %v2825
        %v3018 = vsel %vm2986, %v2912, %v2826
        %v3019 = vsel %vm2987, %v2914, %v2827
        %v3020 = vsel %vm2988, %v2916, %v2828
        %v3021 = vsel %vm2989, %v2918, %v2829
        %v3022 = vsel %vm2990, %v2920, %v2830
        %v3023 = vsel %vm2991, %v2922, %v2831
        %v3024 = vsel %vm2992, %v2924, %v2832
        %v3025 = vsel %vm2993, %v2926, %v2833
        %v3026 = vsel %vm2994, %v2928, %v2834
        %v3027 = vsel %vm2995, %v2930, %v2835
        %v3028 = vsel %vm2996, %v2932, %v2836
        %vm3029 = vcmp.gt.s32.totalorder %v467, 4
        %vm3030 = vcmp.gt.s32.totalorder %v468, 4
        %vm3031 = vcmp.gt.s32.totalorder %v469, 4
        %vm3032 = vcmp.gt.s32.totalorder %v470, 4
        %vm3033 = vcmp.gt.s32.totalorder %v471, 4
        %vm3034 = vcmp.gt.s32.totalorder %v472, 4
        %vm3035 = vcmp.gt.s32.totalorder %v473, 4
        %vm3036 = vcmp.gt.s32.totalorder %v474, 4
        %vm3037 = vcmp.gt.s32.totalorder %v475, 4
        %vm3038 = vcmp.gt.s32.totalorder %v476, 4
        %vm3039 = vcmp.gt.s32.totalorder %v477, 4
        %vm3040 = vcmp.gt.s32.totalorder %v478, 4
        %vm3041 = vcmp.gt.s32.totalorder %v479, 4
        %vm3042 = vcmp.gt.s32.totalorder %v480, 4
        %vm3043 = vcmp.gt.s32.totalorder %v481, 4
        %vm3044 = vcmp.gt.s32.totalorder %v482, 4
        %vm3045 = vcmp.gt.s32.totalorder %v483, 4
        %vm3046 = vcmp.gt.s32.totalorder %v484, 4
        %vm3047 = vcmp.gt.s32.totalorder %v485, 4
        %vm3048 = vcmp.gt.s32.totalorder %v486, 4
        %vm3049 = vcmp.gt.s32.totalorder %v487, 4
        %vm3050 = vcmp.gt.s32.totalorder %v488, 4
        %vm3051 = vcmp.gt.s32.totalorder %v489, 4
        %vm3052 = vcmp.gt.s32.totalorder %v490, 4
        %vm3053 = vcmp.gt.s32.totalorder %v491, 4
        %vm3054 = vcmp.gt.s32.totalorder %v492, 4
        %vm3055 = vcmp.gt.s32.totalorder %v493, 4
        %vm3056 = vcmp.gt.s32.totalorder %v494, 4
        %vm3057 = vcmp.gt.s32.totalorder %v495, 4
        %vm3058 = vcmp.gt.s32.totalorder %v496, 4
        %vm3059 = vcmp.gt.s32.totalorder %v497, 4
        %vm3060 = vcmp.gt.s32.totalorder %v498, 4
        %3061 = vrot.lane.b32.xlu0 %v403, 124
        %v3062 = vpop.permute.xlu0 %3061
        %3063 = vrot.lane.b32.xlu0 %v404, 124
        %v3064 = vpop.permute.xlu0 %3063
        %3065 = vrot.lane.b32.xlu0 %v405, 124
        %v3066 = vpop.permute.xlu0 %3065
        %3067 = vrot.lane.b32.xlu0 %v406, 124
        %v3068 = vpop.permute.xlu0 %3067
        %3069 = vrot.lane.b32.xlu0 %v407, 124
        %v3070 = vpop.permute.xlu0 %3069
        %3071 = vrot.lane.b32.xlu0 %v408, 124
        %v3072 = vpop.permute.xlu0 %3071
        %3073 = vrot.lane.b32.xlu0 %v409, 124
        %v3074 = vpop.permute.xlu0 %3073
        %3075 = vrot.lane.b32.xlu0 %v410, 124
        %v3076 = vpop.permute.xlu0 %3075
        %3077 = vrot.lane.b32.xlu0 %v411, 124
        %v3078 = vpop.permute.xlu0 %3077
        %3079 = vrot.lane.b32.xlu0 %v412, 124
        %v3080 = vpop.permute.xlu0 %3079
        %3081 = vrot.lane.b32.xlu0 %v413, 124
        %v3082 = vpop.permute.xlu0 %3081
        %3083 = vrot.lane.b32.xlu0 %v414, 124
        %v3084 = vpop.permute.xlu0 %3083
        %3085 = vrot.lane.b32.xlu0 %v415, 124
        %v3086 = vpop.permute.xlu0 %3085
        %3087 = vrot.lane.b32.xlu0 %v416, 124
        %v3088 = vpop.permute.xlu0 %3087
        %3089 = vrot.lane.b32.xlu0 %v417, 124
        %v3090 = vpop.permute.xlu0 %3089
        %3091 = vrot.lane.b32.xlu0 %v418, 124
        %v3092 = vpop.permute.xlu0 %3091
        %3093 = vrot.lane.b32.xlu0 %v419, 124
        %v3094 = vpop.permute.xlu0 %3093
        %3095 = vrot.lane.b32.xlu0 %v420, 124
        %v3096 = vpop.permute.xlu0 %3095
        %3097 = vrot.lane.b32.xlu0 %v421, 124
        %v3098 = vpop.permute.xlu0 %3097
        %3099 = vrot.lane.b32.xlu0 %v422, 124
        %v3100 = vpop.permute.xlu0 %3099
        %3101 = vrot.lane.b32.xlu0 %v423, 124
        %v3102 = vpop.permute.xlu0 %3101
        %3103 = vrot.lane.b32.xlu0 %v424, 124
        %v3104 = vpop.permute.xlu0 %3103
        %3105 = vrot.lane.b32.xlu0 %v425, 124
        %v3106 = vpop.permute.xlu0 %3105
        %3107 = vrot.lane.b32.xlu0 %v426, 124
        %v3108 = vpop.permute.xlu0 %3107
        %3109 = vrot.lane.b32.xlu0 %v427, 124
        %v3110 = vpop.permute.xlu0 %3109
        %3111 = vrot.lane.b32.xlu0 %v428, 124
        %v3112 = vpop.permute.xlu0 %3111
        %3113 = vrot.lane.b32.xlu0 %v429, 124
        %v3114 = vpop.permute.xlu0 %3113
        %3115 = vrot.lane.b32.xlu0 %v430, 124
        %v3116 = vpop.permute.xlu0 %3115
        %3117 = vrot.lane.b32.xlu0 %v431, 124
        %v3118 = vpop.permute.xlu0 %3117
        %3119 = vrot.lane.b32.xlu0 %v432, 124
        %v3120 = vpop.permute.xlu0 %3119
        %3121 = vrot.lane.b32.xlu0 %v433, 124
        %v3122 = vpop.permute.xlu0 %3121
        %3123 = vrot.lane.b32.xlu0 %v434, 124
        %v3124 = vpop.permute.xlu0 %3123
        %v3125 = vsel %vm3029, %v3062, %v2933
        %v3126 = vsel %vm3030, %v3064, %v2934
        %v3127 = vsel %vm3031, %v3066, %v2935
        %v3128 = vsel %vm3032, %v3068, %v2936
        %v3129 = vsel %vm3033, %v3070, %v2937
        %v3130 = vsel %vm3034, %v3072, %v2938
        %v3131 = vsel %vm3035, %v3074, %v2939
        %v3132 = vsel %vm3036, %v3076, %v2940
        %v3133 = vsel %vm3037, %v3078, %v2941
        %v3134 = vsel %vm3038, %v3080, %v2942
        %v3135 = vsel %vm3039, %v3082, %v2943
        %v3136 = vsel %vm3040, %v3084, %v2944
        %v3137 = vsel %vm3041, %v3086, %v2945
        %v3138 = vsel %vm3042, %v3088, %v2946
        %v3139 = vsel %vm3043, %v3090, %v2947
        %v3140 = vsel %vm3044, %v3092, %v2948
        %v3141 = vsel %vm3045, %v3094, %v2949
        %v3142 = vsel %vm3046, %v3096, %v2950
        %v3143 = vsel %vm3047, %v3098, %v2951
        %v3144 = vsel %vm3048, %v3100, %v2952
        %v3145 = vsel %vm3049, %v3102, %v2953
        %v3146 = vsel %vm3050, %v3104, %v2954
        %v3147 = vsel %vm3051, %v3106, %v2955
        %v3148 = vsel %vm3052, %v3108, %v2956
        %v3149 = vsel %vm3053, %v3110, %v2957
        %v3150 = vsel %vm3054, %v3112, %v2958
        %v3151 = vsel %vm3055, %v3114, %v2959
        %v3152 = vsel %vm3056, %v3116, %v2960
        %v3153 = vsel %vm3057, %v3118, %v2961
        %v3154 = vsel %vm3058, %v3120, %v2962
        %v3155 = vsel %vm3059, %v3122, %v2963
        %v3156 = vsel %vm3060, %v3124, %v2964
        %vm3157 = vcmp.eq.s32.totalorder %v467, 4
        %vm3158 = vcmp.eq.s32.totalorder %v468, 4
        %vm3159 = vcmp.eq.s32.totalorder %v469, 4
        %vm3160 = vcmp.eq.s32.totalorder %v470, 4
        %vm3161 = vcmp.eq.s32.totalorder %v471, 4
        %vm3162 = vcmp.eq.s32.totalorder %v472, 4
        %vm3163 = vcmp.eq.s32.totalorder %v473, 4
        %vm3164 = vcmp.eq.s32.totalorder %v474, 4
        %vm3165 = vcmp.eq.s32.totalorder %v475, 4
        %vm3166 = vcmp.eq.s32.totalorder %v476, 4
        %vm3167 = vcmp.eq.s32.totalorder %v477, 4
        %vm3168 = vcmp.eq.s32.totalorder %v478, 4
        %vm3169 = vcmp.eq.s32.totalorder %v479, 4
        %vm3170 = vcmp.eq.s32.totalorder %v480, 4
        %vm3171 = vcmp.eq.s32.totalorder %v481, 4
        %vm3172 = vcmp.eq.s32.totalorder %v482, 4
        %vm3173 = vcmp.eq.s32.totalorder %v483, 4
        %vm3174 = vcmp.eq.s32.totalorder %v484, 4
        %vm3175 = vcmp.eq.s32.totalorder %v485, 4
        %vm3176 = vcmp.eq.s32.totalorder %v486, 4
        %vm3177 = vcmp.eq.s32.totalorder %v487, 4
        %vm3178 = vcmp.eq.s32.totalorder %v488, 4
        %vm3179 = vcmp.eq.s32.totalorder %v489, 4
        %vm3180 = vcmp.eq.s32.totalorder %v490, 4
        %vm3181 = vcmp.eq.s32.totalorder %v491, 4
        %vm3182 = vcmp.eq.s32.totalorder %v492, 4
        %vm3183 = vcmp.eq.s32.totalorder %v493, 4
        %vm3184 = vcmp.eq.s32.totalorder %v494, 4
        %vm3185 = vcmp.eq.s32.totalorder %v495, 4
        %vm3186 = vcmp.eq.s32.totalorder %v496, 4
        %vm3187 = vcmp.eq.s32.totalorder %v497, 4
        %vm3188 = vcmp.eq.s32.totalorder %v498, 4
        %v3189 = vsel %vm3157, %v3062, %v2997
        %v3190 = vsel %vm3158, %v3064, %v2998
        %v3191 = vsel %vm3159, %v3066, %v2999
        %v3192 = vsel %vm3160, %v3068, %v3000
        %v3193 = vsel %vm3161, %v3070, %v3001
        %v3194 = vsel %vm3162, %v3072, %v3002
        %v3195 = vsel %vm3163, %v3074, %v3003
        %v3196 = vsel %vm3164, %v3076, %v3004
        %v3197 = vsel %vm3165, %v3078, %v3005
        %v3198 = vsel %vm3166, %v3080, %v3006
        %v3199 = vsel %vm3167, %v3082, %v3007
        %v3200 = vsel %vm3168, %v3084, %v3008
        %v3201 = vsel %vm3169, %v3086, %v3009
        %v3202 = vsel %vm3170, %v3088, %v3010
        %v3203 = vsel %vm3171, %v3090, %v3011
        %v3204 = vsel %vm3172, %v3092, %v3012
        %v3205 = vsel %vm3173, %v3094, %v3013
        %v3206 = vsel %vm3174, %v3096, %v3014
        %v3207 = vsel %vm3175, %v3098, %v3015
        %v3208 = vsel %vm3176, %v3100, %v3016
        %v3209 = vsel %vm3177, %v3102, %v3017
        %v3210 = vsel %vm3178, %v3104, %v3018
        %v3211 = vsel %vm3179, %v3106, %v3019
        %v3212 = vsel %vm3180, %v3108, %v3020
        %v3213 = vsel %vm3181, %v3110, %v3021
        %v3214 = vsel %vm3182, %v3112, %v3022
        %v3215 = vsel %vm3183, %v3114, %v3023
        %v3216 = vsel %vm3184, %v3116, %v3024
        %v3217 = vsel %vm3185, %v3118, %v3025
        %v3218 = vsel %vm3186, %v3120, %v3026
        %v3219 = vsel %vm3187, %v3122, %v3027
        %v3220 = vsel %vm3188, %v3124, %v3028
        %vm3221 = vcmp.gt.s32.totalorder %v467, 5
        %vm3222 = vcmp.gt.s32.totalorder %v468, 5
        %vm3223 = vcmp.gt.s32.totalorder %v469, 5
        %vm3224 = vcmp.gt.s32.totalorder %v470, 5
        %vm3225 = vcmp.gt.s32.totalorder %v471, 5
        %vm3226 = vcmp.gt.s32.totalorder %v472, 5
        %vm3227 = vcmp.gt.s32.totalorder %v473, 5
        %vm3228 = vcmp.gt.s32.totalorder %v474, 5
        %vm3229 = vcmp.gt.s32.totalorder %v475, 5
        %vm3230 = vcmp.gt.s32.totalorder %v476, 5
        %vm3231 = vcmp.gt.s32.totalorder %v477, 5
        %vm3232 = vcmp.gt.s32.totalorder %v478, 5
        %vm3233 = vcmp.gt.s32.totalorder %v479, 5
        %vm3234 = vcmp.gt.s32.totalorder %v480, 5
        %vm3235 = vcmp.gt.s32.totalorder %v481, 5
        %vm3236 = vcmp.gt.s32.totalorder %v482, 5
        %vm3237 = vcmp.gt.s32.totalorder %v483, 5
        %vm3238 = vcmp.gt.s32.totalorder %v484, 5
        %vm3239 = vcmp.gt.s32.totalorder %v485, 5
        %vm3240 = vcmp.gt.s32.totalorder %v486, 5
        %vm3241 = vcmp.gt.s32.totalorder %v487, 5
        %vm3242 = vcmp.gt.s32.totalorder %v488, 5
        %vm3243 = vcmp.gt.s32.totalorder %v489, 5
        %vm3244 = vcmp.gt.s32.totalorder %v490, 5
        %vm3245 = vcmp.gt.s32.totalorder %v491, 5
        %vm3246 = vcmp.gt.s32.totalorder %v492, 5
        %vm3247 = vcmp.gt.s32.totalorder %v493, 5
        %vm3248 = vcmp.gt.s32.totalorder %v494, 5
        %vm3249 = vcmp.gt.s32.totalorder %v495, 5
        %vm3250 = vcmp.gt.s32.totalorder %v496, 5
        %vm3251 = vcmp.gt.s32.totalorder %v497, 5
        %vm3252 = vcmp.gt.s32.totalorder %v498, 5
        %3253 = vrot.lane.b32.xlu0 %v403, 123
        %v3254 = vpop.permute.xlu0 %3253
        %3255 = vrot.lane.b32.xlu0 %v404, 123
        %v3256 = vpop.permute.xlu0 %3255
        %3257 = vrot.lane.b32.xlu0 %v405, 123
        %v3258 = vpop.permute.xlu0 %3257
        %3259 = vrot.lane.b32.xlu0 %v406, 123
        %v3260 = vpop.permute.xlu0 %3259
        %3261 = vrot.lane.b32.xlu0 %v407, 123
        %v3262 = vpop.permute.xlu0 %3261
        %3263 = vrot.lane.b32.xlu0 %v408, 123
        %v3264 = vpop.permute.xlu0 %3263
        %3265 = vrot.lane.b32.xlu0 %v409, 123
        %v3266 = vpop.permute.xlu0 %3265
        %3267 = vrot.lane.b32.xlu0 %v410, 123
        %v3268 = vpop.permute.xlu0 %3267
        %3269 = vrot.lane.b32.xlu0 %v411, 123
        %v3270 = vpop.permute.xlu0 %3269
        %3271 = vrot.lane.b32.xlu0 %v412, 123
        %v3272 = vpop.permute.xlu0 %3271
        %3273 = vrot.lane.b32.xlu0 %v413, 123
        %v3274 = vpop.permute.xlu0 %3273
        %3275 = vrot.lane.b32.xlu0 %v414, 123
        %v3276 = vpop.permute.xlu0 %3275
        %3277 = vrot.lane.b32.xlu0 %v415, 123
        %v3278 = vpop.permute.xlu0 %3277
        %3279 = vrot.lane.b32.xlu0 %v416, 123
        %v3280 = vpop.permute.xlu0 %3279
        %3281 = vrot.lane.b32.xlu0 %v417, 123
        %v3282 = vpop.permute.xlu0 %3281
        %3283 = vrot.lane.b32.xlu0 %v418, 123
        %v3284 = vpop.permute.xlu0 %3283
        %3285 = vrot.lane.b32.xlu0 %v419, 123
        %v3286 = vpop.permute.xlu0 %3285
        %3287 = vrot.lane.b32.xlu0 %v420, 123
        %v3288 = vpop.permute.xlu0 %3287
        %3289 = vrot.lane.b32.xlu0 %v421, 123
        %v3290 = vpop.permute.xlu0 %3289
        %3291 = vrot.lane.b32.xlu0 %v422, 123
        %v3292 = vpop.permute.xlu0 %3291
        %3293 = vrot.lane.b32.xlu0 %v423, 123
        %v3294 = vpop.permute.xlu0 %3293
        %3295 = vrot.lane.b32.xlu0 %v424, 123
        %v3296 = vpop.permute.xlu0 %3295
        %3297 = vrot.lane.b32.xlu0 %v425, 123
        %v3298 = vpop.permute.xlu0 %3297
        %3299 = vrot.lane.b32.xlu0 %v426, 123
        %v3300 = vpop.permute.xlu0 %3299
        %3301 = vrot.lane.b32.xlu0 %v427, 123
        %v3302 = vpop.permute.xlu0 %3301
        %3303 = vrot.lane.b32.xlu0 %v428, 123
        %v3304 = vpop.permute.xlu0 %3303
        %3305 = vrot.lane.b32.xlu0 %v429, 123
        %v3306 = vpop.permute.xlu0 %3305
        %3307 = vrot.lane.b32.xlu0 %v430, 123
        %v3308 = vpop.permute.xlu0 %3307
        %3309 = vrot.lane.b32.xlu0 %v431, 123
        %v3310 = vpop.permute.xlu0 %3309
        %3311 = vrot.lane.b32.xlu0 %v432, 123
        %v3312 = vpop.permute.xlu0 %3311
        %3313 = vrot.lane.b32.xlu0 %v433, 123
        %v3314 = vpop.permute.xlu0 %3313
        %3315 = vrot.lane.b32.xlu0 %v434, 123
        %v3316 = vpop.permute.xlu0 %3315
        %v3317 = vsel %vm3221, %v3254, %v3125
        %v3318 = vsel %vm3222, %v3256, %v3126
        %v3319 = vsel %vm3223, %v3258, %v3127
        %v3320 = vsel %vm3224, %v3260, %v3128
        %v3321 = vsel %vm3225, %v3262, %v3129
        %v3322 = vsel %vm3226, %v3264, %v3130
        %v3323 = vsel %vm3227, %v3266, %v3131
        %v3324 = vsel %vm3228, %v3268, %v3132
        %v3325 = vsel %vm3229, %v3270, %v3133
        %v3326 = vsel %vm3230, %v3272, %v3134
        %v3327 = vsel %vm3231, %v3274, %v3135
        %v3328 = vsel %vm3232, %v3276, %v3136
        %v3329 = vsel %vm3233, %v3278, %v3137
        %v3330 = vsel %vm3234, %v3280, %v3138
        %v3331 = vsel %vm3235, %v3282, %v3139
        %v3332 = vsel %vm3236, %v3284, %v3140
        %v3333 = vsel %vm3237, %v3286, %v3141
        %v3334 = vsel %vm3238, %v3288, %v3142
        %v3335 = vsel %vm3239, %v3290, %v3143
        %v3336 = vsel %vm3240, %v3292, %v3144
        %v3337 = vsel %vm3241, %v3294, %v3145
        %v3338 = vsel %vm3242, %v3296, %v3146
        %v3339 = vsel %vm3243, %v3298, %v3147
        %v3340 = vsel %vm3244, %v3300, %v3148
        %v3341 = vsel %vm3245, %v3302, %v3149
        %v3342 = vsel %vm3246, %v3304, %v3150
        %v3343 = vsel %vm3247, %v3306, %v3151
        %v3344 = vsel %vm3248, %v3308, %v3152
        %v3345 = vsel %vm3249, %v3310, %v3153
        %v3346 = vsel %vm3250, %v3312, %v3154
        %v3347 = vsel %vm3251, %v3314, %v3155
        %v3348 = vsel %vm3252, %v3316, %v3156
        %vm3349 = vcmp.eq.s32.totalorder %v467, 5
        %vm3350 = vcmp.eq.s32.totalorder %v468, 5
        %vm3351 = vcmp.eq.s32.totalorder %v469, 5
        %vm3352 = vcmp.eq.s32.totalorder %v470, 5
        %vm3353 = vcmp.eq.s32.totalorder %v471, 5
        %vm3354 = vcmp.eq.s32.totalorder %v472, 5
        %vm3355 = vcmp.eq.s32.totalorder %v473, 5
        %vm3356 = vcmp.eq.s32.totalorder %v474, 5
        %vm3357 = vcmp.eq.s32.totalorder %v475, 5
        %vm3358 = vcmp.eq.s32.totalorder %v476, 5
        %vm3359 = vcmp.eq.s32.totalorder %v477, 5
        %vm3360 = vcmp.eq.s32.totalorder %v478, 5
        %vm3361 = vcmp.eq.s32.totalorder %v479, 5
        %vm3362 = vcmp.eq.s32.totalorder %v480, 5
        %vm3363 = vcmp.eq.s32.totalorder %v481, 5
        %vm3364 = vcmp.eq.s32.totalorder %v482, 5
        %vm3365 = vcmp.eq.s32.totalorder %v483, 5
        %vm3366 = vcmp.eq.s32.totalorder %v484, 5
        %vm3367 = vcmp.eq.s32.totalorder %v485, 5
        %vm3368 = vcmp.eq.s32.totalorder %v486, 5
        %vm3369 = vcmp.eq.s32.totalorder %v487, 5
        %vm3370 = vcmp.eq.s32.totalorder %v488, 5
        %vm3371 = vcmp.eq.s32.totalorder %v489, 5
        %vm3372 = vcmp.eq.s32.totalorder %v490, 5
        %vm3373 = vcmp.eq.s32.totalorder %v491, 5
        %vm3374 = vcmp.eq.s32.totalorder %v492, 5
        %vm3375 = vcmp.eq.s32.totalorder %v493, 5
        %vm3376 = vcmp.eq.s32.totalorder %v494, 5
        %vm3377 = vcmp.eq.s32.totalorder %v495, 5
        %vm3378 = vcmp.eq.s32.totalorder %v496, 5
        %vm3379 = vcmp.eq.s32.totalorder %v497, 5
        %vm3380 = vcmp.eq.s32.totalorder %v498, 5
        %v3381 = vsel %vm3349, %v3254, %v3189
        %v3382 = vsel %vm3350, %v3256, %v3190
        %v3383 = vsel %vm3351, %v3258, %v3191
        %v3384 = vsel %vm3352, %v3260, %v3192
        %v3385 = vsel %vm3353, %v3262, %v3193
        %v3386 = vsel %vm3354, %v3264, %v3194
        %v3387 = vsel %vm3355, %v3266, %v3195
        %v3388 = vsel %vm3356, %v3268, %v3196
        %v3389 = vsel %vm3357, %v3270, %v3197
        %v3390 = vsel %vm3358, %v3272, %v3198
        %v3391 = vsel %vm3359, %v3274, %v3199
        %v3392 = vsel %vm3360, %v3276, %v3200
        %v3393 = vsel %vm3361, %v3278, %v3201
        %v3394 = vsel %vm3362, %v3280, %v3202
        %v3395 = vsel %vm3363, %v3282, %v3203
        %v3396 = vsel %vm3364, %v3284, %v3204
        %v3397 = vsel %vm3365, %v3286, %v3205
        %v3398 = vsel %vm3366, %v3288, %v3206
        %v3399 = vsel %vm3367, %v3290, %v3207
        %v3400 = vsel %vm3368, %v3292, %v3208
        %v3401 = vsel %vm3369, %v3294, %v3209
        %v3402 = vsel %vm3370, %v3296, %v3210
        %v3403 = vsel %vm3371, %v3298, %v3211
        %v3404 = vsel %vm3372, %v3300, %v3212
        %v3405 = vsel %vm3373, %v3302, %v3213
        %v3406 = vsel %vm3374, %v3304, %v3214
        %v3407 = vsel %vm3375, %v3306, %v3215
        %v3408 = vsel %vm3376, %v3308, %v3216
        %v3409 = vsel %vm3377, %v3310, %v3217
        %v3410 = vsel %vm3378, %v3312, %v3218
        %v3411 = vsel %vm3379, %v3314, %v3219
        %v3412 = vsel %vm3380, %v3316, %v3220
        %vm3413 = vcmp.gt.s32.totalorder %v467, 6
        %vm3414 = vcmp.gt.s32.totalorder %v468, 6
        %vm3415 = vcmp.gt.s32.totalorder %v469, 6
        %vm3416 = vcmp.gt.s32.totalorder %v470, 6
        %vm3417 = vcmp.gt.s32.totalorder %v471, 6
        %vm3418 = vcmp.gt.s32.totalorder %v472, 6
        %vm3419 = vcmp.gt.s32.totalorder %v473, 6
        %vm3420 = vcmp.gt.s32.totalorder %v474, 6
        %vm3421 = vcmp.gt.s32.totalorder %v475, 6
        %vm3422 = vcmp.gt.s32.totalorder %v476, 6
        %vm3423 = vcmp.gt.s32.totalorder %v477, 6
        %vm3424 = vcmp.gt.s32.totalorder %v478, 6
        %vm3425 = vcmp.gt.s32.totalorder %v479, 6
        %vm3426 = vcmp.gt.s32.totalorder %v480, 6
        %vm3427 = vcmp.gt.s32.totalorder %v481, 6
        %vm3428 = vcmp.gt.s32.totalorder %v482, 6
        %vm3429 = vcmp.gt.s32.totalorder %v483, 6
        %vm3430 = vcmp.gt.s32.totalorder %v484, 6
        %vm3431 = vcmp.gt.s32.totalorder %v485, 6
        %vm3432 = vcmp.gt.s32.totalorder %v486, 6
        %vm3433 = vcmp.gt.s32.totalorder %v487, 6
        %vm3434 = vcmp.gt.s32.totalorder %v488, 6
        %vm3435 = vcmp.gt.s32.totalorder %v489, 6
        %vm3436 = vcmp.gt.s32.totalorder %v490, 6
        %vm3437 = vcmp.gt.s32.totalorder %v491, 6
        %vm3438 = vcmp.gt.s32.totalorder %v492, 6
        %vm3439 = vcmp.gt.s32.totalorder %v493, 6
        %vm3440 = vcmp.gt.s32.totalorder %v494, 6
        %vm3441 = vcmp.gt.s32.totalorder %v495, 6
        %vm3442 = vcmp.gt.s32.totalorder %v496, 6
        %vm3443 = vcmp.gt.s32.totalorder %v497, 6
        %vm3444 = vcmp.gt.s32.totalorder %v498, 6
        %3445 = vrot.lane.b32.xlu0 %v403, 122
        %v3446 = vpop.permute.xlu0 %3445
        %3447 = vrot.lane.b32.xlu0 %v404, 122
        %v3448 = vpop.permute.xlu0 %3447
        %3449 = vrot.lane.b32.xlu0 %v405, 122
        %v3450 = vpop.permute.xlu0 %3449
        %3451 = vrot.lane.b32.xlu0 %v406, 122
        %v3452 = vpop.permute.xlu0 %3451
        %3453 = vrot.lane.b32.xlu0 %v407, 122
        %v3454 = vpop.permute.xlu0 %3453
        %3455 = vrot.lane.b32.xlu0 %v408, 122
        %v3456 = vpop.permute.xlu0 %3455
        %3457 = vrot.lane.b32.xlu0 %v409, 122
        %v3458 = vpop.permute.xlu0 %3457
        %3459 = vrot.lane.b32.xlu0 %v410, 122
        %v3460 = vpop.permute.xlu0 %3459
        %3461 = vrot.lane.b32.xlu0 %v411, 122
        %v3462 = vpop.permute.xlu0 %3461
        %3463 = vrot.lane.b32.xlu0 %v412, 122
        %v3464 = vpop.permute.xlu0 %3463
        %3465 = vrot.lane.b32.xlu0 %v413, 122
        %v3466 = vpop.permute.xlu0 %3465
        %3467 = vrot.lane.b32.xlu0 %v414, 122
        %v3468 = vpop.permute.xlu0 %3467
        %3469 = vrot.lane.b32.xlu0 %v415, 122
        %v3470 = vpop.permute.xlu0 %3469
        %3471 = vrot.lane.b32.xlu0 %v416, 122
        %v3472 = vpop.permute.xlu0 %3471
        %3473 = vrot.lane.b32.xlu0 %v417, 122
        %v3474 = vpop.permute.xlu0 %3473
        %3475 = vrot.lane.b32.xlu0 %v418, 122
        %v3476 = vpop.permute.xlu0 %3475
        %3477 = vrot.lane.b32.xlu0 %v419, 122
        %v3478 = vpop.permute.xlu0 %3477
        %3479 = vrot.lane.b32.xlu0 %v420, 122
        %v3480 = vpop.permute.xlu0 %3479
        %3481 = vrot.lane.b32.xlu0 %v421, 122
        %v3482 = vpop.permute.xlu0 %3481
        %3483 = vrot.lane.b32.xlu0 %v422, 122
        %v3484 = vpop.permute.xlu0 %3483
        %3485 = vrot.lane.b32.xlu0 %v423, 122
        %v3486 = vpop.permute.xlu0 %3485
        %3487 = vrot.lane.b32.xlu0 %v424, 122
        %v3488 = vpop.permute.xlu0 %3487
        %3489 = vrot.lane.b32.xlu0 %v425, 122
        %v3490 = vpop.permute.xlu0 %3489
        %3491 = vrot.lane.b32.xlu0 %v426, 122
        %v3492 = vpop.permute.xlu0 %3491
        %3493 = vrot.lane.b32.xlu0 %v427, 122
        %v3494 = vpop.permute.xlu0 %3493
        %3495 = vrot.lane.b32.xlu0 %v428, 122
        %v3496 = vpop.permute.xlu0 %3495
        %3497 = vrot.lane.b32.xlu0 %v429, 122
        %v3498 = vpop.permute.xlu0 %3497
        %3499 = vrot.lane.b32.xlu0 %v430, 122
        %v3500 = vpop.permute.xlu0 %3499
        %3501 = vrot.lane.b32.xlu0 %v431, 122
        %v3502 = vpop.permute.xlu0 %3501
        %3503 = vrot.lane.b32.xlu0 %v432, 122
        %v3504 = vpop.permute.xlu0 %3503
        %3505 = vrot.lane.b32.xlu0 %v433, 122
        %v3506 = vpop.permute.xlu0 %3505
        %3507 = vrot.lane.b32.xlu0 %v434, 122
        %v3508 = vpop.permute.xlu0 %3507
        %v3509 = vsel %vm3413, %v3446, %v3317
        %v3510 = vsel %vm3414, %v3448, %v3318
        %v3511 = vsel %vm3415, %v3450, %v3319
        %v3512 = vsel %vm3416, %v3452, %v3320
        %v3513 = vsel %vm3417, %v3454, %v3321
        %v3514 = vsel %vm3418, %v3456, %v3322
        %v3515 = vsel %vm3419, %v3458, %v3323
        %v3516 = vsel %vm3420, %v3460, %v3324
        %v3517 = vsel %vm3421, %v3462, %v3325
        %v3518 = vsel %vm3422, %v3464, %v3326
        %v3519 = vsel %vm3423, %v3466, %v3327
        %v3520 = vsel %vm3424, %v3468, %v3328
        %v3521 = vsel %vm3425, %v3470, %v3329
        %v3522 = vsel %vm3426, %v3472, %v3330
        %v3523 = vsel %vm3427, %v3474, %v3331
        %v3524 = vsel %vm3428, %v3476, %v3332
        %v3525 = vsel %vm3429, %v3478, %v3333
        %v3526 = vsel %vm3430, %v3480, %v3334
        %v3527 = vsel %vm3431, %v3482, %v3335
        %v3528 = vsel %vm3432, %v3484, %v3336
        %v3529 = vsel %vm3433, %v3486, %v3337
        %v3530 = vsel %vm3434, %v3488, %v3338
        %v3531 = vsel %vm3435, %v3490, %v3339
        %v3532 = vsel %vm3436, %v3492, %v3340
        %v3533 = vsel %vm3437, %v3494, %v3341
        %v3534 = vsel %vm3438, %v3496, %v3342
        %v3535 = vsel %vm3439, %v3498, %v3343
        %v3536 = vsel %vm3440, %v3500, %v3344
        %v3537 = vsel %vm3441, %v3502, %v3345
        %v3538 = vsel %vm3442, %v3504, %v3346
        %v3539 = vsel %vm3443, %v3506, %v3347
        %v3540 = vsel %vm3444, %v3508, %v3348
        %vm3541 = vcmp.eq.s32.totalorder %v467, 6
        %vm3542 = vcmp.eq.s32.totalorder %v468, 6
        %vm3543 = vcmp.eq.s32.totalorder %v469, 6
        %vm3544 = vcmp.eq.s32.totalorder %v470, 6
        %vm3545 = vcmp.eq.s32.totalorder %v471, 6
        %vm3546 = vcmp.eq.s32.totalorder %v472, 6
        %vm3547 = vcmp.eq.s32.totalorder %v473, 6
        %vm3548 = vcmp.eq.s32.totalorder %v474, 6
        %vm3549 = vcmp.eq.s32.totalorder %v475, 6
        %vm3550 = vcmp.eq.s32.totalorder %v476, 6
        %vm3551 = vcmp.eq.s32.totalorder %v477, 6
        %vm3552 = vcmp.eq.s32.totalorder %v478, 6
        %vm3553 = vcmp.eq.s32.totalorder %v479, 6
        %vm3554 = vcmp.eq.s32.totalorder %v480, 6
        %vm3555 = vcmp.eq.s32.totalorder %v481, 6
        %vm3556 = vcmp.eq.s32.totalorder %v482, 6
        %vm3557 = vcmp.eq.s32.totalorder %v483, 6
        %vm3558 = vcmp.eq.s32.totalorder %v484, 6
        %vm3559 = vcmp.eq.s32.totalorder %v485, 6
        %vm3560 = vcmp.eq.s32.totalorder %v486, 6
        %vm3561 = vcmp.eq.s32.totalorder %v487, 6
        %vm3562 = vcmp.eq.s32.totalorder %v488, 6
        %vm3563 = vcmp.eq.s32.totalorder %v489, 6
        %vm3564 = vcmp.eq.s32.totalorder %v490, 6
        %vm3565 = vcmp.eq.s32.totalorder %v491, 6
        %vm3566 = vcmp.eq.s32.totalorder %v492, 6
        %vm3567 = vcmp.eq.s32.totalorder %v493, 6
        %vm3568 = vcmp.eq.s32.totalorder %v494, 6
        %vm3569 = vcmp.eq.s32.totalorder %v495, 6
        %vm3570 = vcmp.eq.s32.totalorder %v496, 6
        %vm3571 = vcmp.eq.s32.totalorder %v497, 6
        %vm3572 = vcmp.eq.s32.totalorder %v498, 6
        %v3573 = vsel %vm3541, %v3446, %v3381
        %v3574 = vsel %vm3542, %v3448, %v3382
        %v3575 = vsel %vm3543, %v3450, %v3383
        %v3576 = vsel %vm3544, %v3452, %v3384
        %v3577 = vsel %vm3545, %v3454, %v3385
        %v3578 = vsel %vm3546, %v3456, %v3386
        %v3579 = vsel %vm3547, %v3458, %v3387
        %v3580 = vsel %vm3548, %v3460, %v3388
        %v3581 = vsel %vm3549, %v3462, %v3389
        %v3582 = vsel %vm3550, %v3464, %v3390
        %v3583 = vsel %vm3551, %v3466, %v3391
        %v3584 = vsel %vm3552, %v3468, %v3392
        %v3585 = vsel %vm3553, %v3470, %v3393
        %v3586 = vsel %vm3554, %v3472, %v3394
        %v3587 = vsel %vm3555, %v3474, %v3395
        %v3588 = vsel %vm3556, %v3476, %v3396
        %v3589 = vsel %vm3557, %v3478, %v3397
        %v3590 = vsel %vm3558, %v3480, %v3398
        %v3591 = vsel %vm3559, %v3482, %v3399
        %v3592 = vsel %vm3560, %v3484, %v3400
        %v3593 = vsel %vm3561, %v3486, %v3401
        %v3594 = vsel %vm3562, %v3488, %v3402
        %v3595 = vsel %vm3563, %v3490, %v3403
        %v3596 = vsel %vm3564, %v3492, %v3404
        %v3597 = vsel %vm3565, %v3494, %v3405
        %v3598 = vsel %vm3566, %v3496, %v3406
        %v3599 = vsel %vm3567, %v3498, %v3407
        %v3600 = vsel %vm3568, %v3500, %v3408
        %v3601 = vsel %vm3569, %v3502, %v3409
        %v3602 = vsel %vm3570, %v3504, %v3410
        %v3603 = vsel %vm3571, %v3506, %v3411
        %v3604 = vsel %vm3572, %v3508, %v3412
        %vm3605 = vcmp.gt.s32.totalorder %v467, 7
        %vm3606 = vcmp.gt.s32.totalorder %v468, 7
        %vm3607 = vcmp.gt.s32.totalorder %v469, 7
        %vm3608 = vcmp.gt.s32.totalorder %v470, 7
        %vm3609 = vcmp.gt.s32.totalorder %v471, 7
        %vm3610 = vcmp.gt.s32.totalorder %v472, 7
        %vm3611 = vcmp.gt.s32.totalorder %v473, 7
        %vm3612 = vcmp.gt.s32.totalorder %v474, 7
        %vm3613 = vcmp.gt.s32.totalorder %v475, 7
        %vm3614 = vcmp.gt.s32.totalorder %v476, 7
        %vm3615 = vcmp.gt.s32.totalorder %v477, 7
        %vm3616 = vcmp.gt.s32.totalorder %v478, 7
        %vm3617 = vcmp.gt.s32.totalorder %v479, 7
        %vm3618 = vcmp.gt.s32.totalorder %v480, 7
        %vm3619 = vcmp.gt.s32.totalorder %v481, 7
        %vm3620 = vcmp.gt.s32.totalorder %v482, 7
        %vm3621 = vcmp.gt.s32.totalorder %v483, 7
        %vm3622 = vcmp.gt.s32.totalorder %v484, 7
        %vm3623 = vcmp.gt.s32.totalorder %v485, 7
        %vm3624 = vcmp.gt.s32.totalorder %v486, 7
        %vm3625 = vcmp.gt.s32.totalorder %v487, 7
        %vm3626 = vcmp.gt.s32.totalorder %v488, 7
        %vm3627 = vcmp.gt.s32.totalorder %v489, 7
        %vm3628 = vcmp.gt.s32.totalorder %v490, 7
        %vm3629 = vcmp.gt.s32.totalorder %v491, 7
        %vm3630 = vcmp.gt.s32.totalorder %v492, 7
        %vm3631 = vcmp.gt.s32.totalorder %v493, 7
        %vm3632 = vcmp.gt.s32.totalorder %v494, 7
        %vm3633 = vcmp.gt.s32.totalorder %v495, 7
        %vm3634 = vcmp.gt.s32.totalorder %v496, 7
        %vm3635 = vcmp.gt.s32.totalorder %v497, 7
        %vm3636 = vcmp.gt.s32.totalorder %v498, 7
        %3637 = vrot.lane.b32.xlu0 %v403, 121
        %v3638 = vpop.permute.xlu0 %3637
        %3639 = vrot.lane.b32.xlu0 %v404, 121
        %v3640 = vpop.permute.xlu0 %3639
        %3641 = vrot.lane.b32.xlu0 %v405, 121
        %v3642 = vpop.permute.xlu0 %3641
        %3643 = vrot.lane.b32.xlu0 %v406, 121
        %v3644 = vpop.permute.xlu0 %3643
        %3645 = vrot.lane.b32.xlu0 %v407, 121
        %v3646 = vpop.permute.xlu0 %3645
        %3647 = vrot.lane.b32.xlu0 %v408, 121
        %v3648 = vpop.permute.xlu0 %3647
        %3649 = vrot.lane.b32.xlu0 %v409, 121
        %v3650 = vpop.permute.xlu0 %3649
        %3651 = vrot.lane.b32.xlu0 %v410, 121
        %v3652 = vpop.permute.xlu0 %3651
        %3653 = vrot.lane.b32.xlu0 %v411, 121
        %v3654 = vpop.permute.xlu0 %3653
        %3655 = vrot.lane.b32.xlu0 %v412, 121
        %v3656 = vpop.permute.xlu0 %3655
        %3657 = vrot.lane.b32.xlu0 %v413, 121
        %v3658 = vpop.permute.xlu0 %3657
        %3659 = vrot.lane.b32.xlu0 %v414, 121
        %v3660 = vpop.permute.xlu0 %3659
        %3661 = vrot.lane.b32.xlu0 %v415, 121
        %v3662 = vpop.permute.xlu0 %3661
        %3663 = vrot.lane.b32.xlu0 %v416, 121
        %v3664 = vpop.permute.xlu0 %3663
        %3665 = vrot.lane.b32.xlu0 %v417, 121
        %v3666 = vpop.permute.xlu0 %3665
        %3667 = vrot.lane.b32.xlu0 %v418, 121
        %v3668 = vpop.permute.xlu0 %3667
        %3669 = vrot.lane.b32.xlu0 %v419, 121
        %v3670 = vpop.permute.xlu0 %3669
        %3671 = vrot.lane.b32.xlu0 %v420, 121
        %v3672 = vpop.permute.xlu0 %3671
        %3673 = vrot.lane.b32.xlu0 %v421, 121
        %v3674 = vpop.permute.xlu0 %3673
        %3675 = vrot.lane.b32.xlu0 %v422, 121
        %v3676 = vpop.permute.xlu0 %3675
        %3677 = vrot.lane.b32.xlu0 %v423, 121
        %v3678 = vpop.permute.xlu0 %3677
        %3679 = vrot.lane.b32.xlu0 %v424, 121
        %v3680 = vpop.permute.xlu0 %3679
        %3681 = vrot.lane.b32.xlu0 %v425, 121
        %v3682 = vpop.permute.xlu0 %3681
        %3683 = vrot.lane.b32.xlu0 %v426, 121
        %v3684 = vpop.permute.xlu0 %3683
        %3685 = vrot.lane.b32.xlu0 %v427, 121
        %v3686 = vpop.permute.xlu0 %3685
        %3687 = vrot.lane.b32.xlu0 %v428, 121
        %v3688 = vpop.permute.xlu0 %3687
        %3689 = vrot.lane.b32.xlu0 %v429, 121
        %v3690 = vpop.permute.xlu0 %3689
        %3691 = vrot.lane.b32.xlu0 %v430, 121
        %v3692 = vpop.permute.xlu0 %3691
        %3693 = vrot.lane.b32.xlu0 %v431, 121
        %v3694 = vpop.permute.xlu0 %3693
        %3695 = vrot.lane.b32.xlu0 %v432, 121
        %v3696 = vpop.permute.xlu0 %3695
        %3697 = vrot.lane.b32.xlu0 %v433, 121
        %v3698 = vpop.permute.xlu0 %3697
        %3699 = vrot.lane.b32.xlu0 %v434, 121
        %v3700 = vpop.permute.xlu0 %3699
        %v3701 = vsel %vm3605, %v3638, %v3509
        %v3702 = vsel %vm3606, %v3640, %v3510
        %v3703 = vsel %vm3607, %v3642, %v3511
        %v3704 = vsel %vm3608, %v3644, %v3512
        %v3705 = vsel %vm3609, %v3646, %v3513
        %v3706 = vsel %vm3610, %v3648, %v3514
        %v3707 = vsel %vm3611, %v3650, %v3515
        %v3708 = vsel %vm3612, %v3652, %v3516
        %v3709 = vsel %vm3613, %v3654, %v3517
        %v3710 = vsel %vm3614, %v3656, %v3518
        %v3711 = vsel %vm3615, %v3658, %v3519
        %v3712 = vsel %vm3616, %v3660, %v3520
        %v3713 = vsel %vm3617, %v3662, %v3521
        %v3714 = vsel %vm3618, %v3664, %v3522
        %v3715 = vsel %vm3619, %v3666, %v3523
        %v3716 = vsel %vm3620, %v3668, %v3524
        %v3717 = vsel %vm3621, %v3670, %v3525
        %v3718 = vsel %vm3622, %v3672, %v3526
        %v3719 = vsel %vm3623, %v3674, %v3527
        %v3720 = vsel %vm3624, %v3676, %v3528
        %v3721 = vsel %vm3625, %v3678, %v3529
        %v3722 = vsel %vm3626, %v3680, %v3530
        %v3723 = vsel %vm3627, %v3682, %v3531
        %v3724 = vsel %vm3628, %v3684, %v3532
        %v3725 = vsel %vm3629, %v3686, %v3533
        %v3726 = vsel %vm3630, %v3688, %v3534
        %v3727 = vsel %vm3631, %v3690, %v3535
        %v3728 = vsel %vm3632, %v3692, %v3536
        %v3729 = vsel %vm3633, %v3694, %v3537
        %v3730 = vsel %vm3634, %v3696, %v3538
        %v3731 = vsel %vm3635, %v3698, %v3539
        %v3732 = vsel %vm3636, %v3700, %v3540
        %vm3733 = vcmp.eq.s32.totalorder %v467, 7
        %vm3734 = vcmp.eq.s32.totalorder %v468, 7
        %vm3735 = vcmp.eq.s32.totalorder %v469, 7
        %vm3736 = vcmp.eq.s32.totalorder %v470, 7
        %vm3737 = vcmp.eq.s32.totalorder %v471, 7
        %vm3738 = vcmp.eq.s32.totalorder %v472, 7
        %vm3739 = vcmp.eq.s32.totalorder %v473, 7
        %vm3740 = vcmp.eq.s32.totalorder %v474, 7
        %vm3741 = vcmp.eq.s32.totalorder %v475, 7
        %vm3742 = vcmp.eq.s32.totalorder %v476, 7
        %vm3743 = vcmp.eq.s32.totalorder %v477, 7
        %vm3744 = vcmp.eq.s32.totalorder %v478, 7
        %vm3745 = vcmp.eq.s32.totalorder %v479, 7
        %vm3746 = vcmp.eq.s32.totalorder %v480, 7
        %vm3747 = vcmp.eq.s32.totalorder %v481, 7
        %vm3748 = vcmp.eq.s32.totalorder %v482, 7
        %vm3749 = vcmp.eq.s32.totalorder %v483, 7
        %vm3750 = vcmp.eq.s32.totalorder %v484, 7
        %vm3751 = vcmp.eq.s32.totalorder %v485, 7
        %vm3752 = vcmp.eq.s32.totalorder %v486, 7
        %vm3753 = vcmp.eq.s32.totalorder %v487, 7
        %vm3754 = vcmp.eq.s32.totalorder %v488, 7
        %vm3755 = vcmp.eq.s32.totalorder %v489, 7
        %vm3756 = vcmp.eq.s32.totalorder %v490, 7
        %vm3757 = vcmp.eq.s32.totalorder %v491, 7
        %vm3758 = vcmp.eq.s32.totalorder %v492, 7
        %vm3759 = vcmp.eq.s32.totalorder %v493, 7
        %vm3760 = vcmp.eq.s32.totalorder %v494, 7
        %vm3761 = vcmp.eq.s32.totalorder %v495, 7
        %vm3762 = vcmp.eq.s32.totalorder %v496, 7
        %vm3763 = vcmp.eq.s32.totalorder %v497, 7
        %vm3764 = vcmp.eq.s32.totalorder %v498, 7
        %v3765 = vsel %vm3733, %v3638, %v3573
        %v3766 = vsel %vm3734, %v3640, %v3574
        %v3767 = vsel %vm3735, %v3642, %v3575
        %v3768 = vsel %vm3736, %v3644, %v3576
        %v3769 = vsel %vm3737, %v3646, %v3577
        %v3770 = vsel %vm3738, %v3648, %v3578
        %v3771 = vsel %vm3739, %v3650, %v3579
        %v3772 = vsel %vm3740, %v3652, %v3580
        %v3773 = vsel %vm3741, %v3654, %v3581
        %v3774 = vsel %vm3742, %v3656, %v3582
        %v3775 = vsel %vm3743, %v3658, %v3583
        %v3776 = vsel %vm3744, %v3660, %v3584
        %v3777 = vsel %vm3745, %v3662, %v3585
        %v3778 = vsel %vm3746, %v3664, %v3586
        %v3779 = vsel %vm3747, %v3666, %v3587
        %v3780 = vsel %vm3748, %v3668, %v3588
        %v3781 = vsel %vm3749, %v3670, %v3589
        %v3782 = vsel %vm3750, %v3672, %v3590
        %v3783 = vsel %vm3751, %v3674, %v3591
        %v3784 = vsel %vm3752, %v3676, %v3592
        %v3785 = vsel %vm3753, %v3678, %v3593
        %v3786 = vsel %vm3754, %v3680, %v3594
        %v3787 = vsel %vm3755, %v3682, %v3595
        %v3788 = vsel %vm3756, %v3684, %v3596
        %v3789 = vsel %vm3757, %v3686, %v3597
        %v3790 = vsel %vm3758, %v3688, %v3598
        %v3791 = vsel %vm3759, %v3690, %v3599
        %v3792 = vsel %vm3760, %v3692, %v3600
        %v3793 = vsel %vm3761, %v3694, %v3601
        %v3794 = vsel %vm3762, %v3696, %v3602
        %v3795 = vsel %vm3763, %v3698, %v3603
        %v3796 = vsel %vm3764, %v3700, %v3604
        %vm3797 = vcmp.lt.s32.totalorder %v467, 8
        %vm3798 = vcmp.lt.s32.totalorder %v468, 8
        %vm3799 = vcmp.lt.s32.totalorder %v469, 8
        %vm3800 = vcmp.lt.s32.totalorder %v470, 8
        %vm3801 = vcmp.lt.s32.totalorder %v471, 8
        %vm3802 = vcmp.lt.s32.totalorder %v472, 8
        %vm3803 = vcmp.lt.s32.totalorder %v473, 8
        %vm3804 = vcmp.lt.s32.totalorder %v474, 8
        %vm3805 = vcmp.lt.s32.totalorder %v475, 8
        %vm3806 = vcmp.lt.s32.totalorder %v476, 8
        %vm3807 = vcmp.lt.s32.totalorder %v477, 8
        %vm3808 = vcmp.lt.s32.totalorder %v478, 8
        %vm3809 = vcmp.lt.s32.totalorder %v479, 8
        %vm3810 = vcmp.lt.s32.totalorder %v480, 8
        %vm3811 = vcmp.lt.s32.totalorder %v481, 8
        %vm3812 = vcmp.lt.s32.totalorder %v482, 8
        %vm3813 = vcmp.lt.s32.totalorder %v483, 8
        %vm3814 = vcmp.lt.s32.totalorder %v484, 8
        %vm3815 = vcmp.lt.s32.totalorder %v485, 8
        %vm3816 = vcmp.lt.s32.totalorder %v486, 8
        %vm3817 = vcmp.lt.s32.totalorder %v487, 8
        %vm3818 = vcmp.lt.s32.totalorder %v488, 8
        %vm3819 = vcmp.lt.s32.totalorder %v489, 8
        %vm3820 = vcmp.lt.s32.totalorder %v490, 8
        %vm3821 = vcmp.lt.s32.totalorder %v491, 8
        %vm3822 = vcmp.lt.s32.totalorder %v492, 8
        %vm3823 = vcmp.lt.s32.totalorder %v493, 8
        %vm3824 = vcmp.lt.s32.totalorder %v494, 8
        %vm3825 = vcmp.lt.s32.totalorder %v495, 8
        %vm3826 = vcmp.lt.s32.totalorder %v496, 8
        %vm3827 = vcmp.lt.s32.totalorder %v497, 8
        %vm3828 = vcmp.lt.s32.totalorder %v498, 8
        %v3829 = vsel %vm3797, 1, 0
        %v3830 = vsel %vm3798, 1, 0
        %v3831 = vsel %vm3799, 1, 0
        %v3832 = vsel %vm3800, 1, 0
        %v3833 = vsel %vm3801, 1, 0
        %v3834 = vsel %vm3802, 1, 0
        %v3835 = vsel %vm3803, 1, 0
        %v3836 = vsel %vm3804, 1, 0
        %v3837 = vsel %vm3805, 1, 0
        %v3838 = vsel %vm3806, 1, 0
        %v3839 = vsel %vm3807, 1, 0
        %v3840 = vsel %vm3808, 1, 0
        %v3841 = vsel %vm3809, 1, 0
        %v3842 = vsel %vm3810, 1, 0
        %v3843 = vsel %vm3811, 1, 0
        %v3844 = vsel %vm3812, 1, 0
        %v3845 = vsel %vm3813, 1, 0
        %v3846 = vsel %vm3814, 1, 0
        %v3847 = vsel %vm3815, 1, 0
        %v3848 = vsel %vm3816, 1, 0
        %v3849 = vsel %vm3817, 1, 0
        %v3850 = vsel %vm3818, 1, 0
        %v3851 = vsel %vm3819, 1, 0
        %v3852 = vsel %vm3820, 1, 0
        %v3853 = vsel %vm3821, 1, 0
        %v3854 = vsel %vm3822, 1, 0
        %v3855 = vsel %vm3823, 1, 0
        %v3856 = vsel %vm3824, 1, 0
        %v3857 = vsel %vm3825, 1, 0
        %v3858 = vsel %vm3826, 1, 0
        %v3859 = vsel %vm3827, 1, 0
        %v3860 = vsel %vm3828, 1, 0
        %v3861 = vcvt.s32.f32 %v3829
        %v3862 = vcvt.s32.f32 %v3830
        %v3863 = vcvt.s32.f32 %v3831
        %v3864 = vcvt.s32.f32 %v3832
        %v3865 = vcvt.s32.f32 %v3833
        %v3866 = vcvt.s32.f32 %v3834
        %v3867 = vcvt.s32.f32 %v3835
        %v3868 = vcvt.s32.f32 %v3836
        %v3869 = vcvt.s32.f32 %v3837
        %v3870 = vcvt.s32.f32 %v3838
        %v3871 = vcvt.s32.f32 %v3839
        %v3872 = vcvt.s32.f32 %v3840
        %v3873 = vcvt.s32.f32 %v3841
        %v3874 = vcvt.s32.f32 %v3842
        %v3875 = vcvt.s32.f32 %v3843
        %v3876 = vcvt.s32.f32 %v3844
        %v3877 = vcvt.s32.f32 %v3845
        %v3878 = vcvt.s32.f32 %v3846
        %v3879 = vcvt.s32.f32 %v3847
        %v3880 = vcvt.s32.f32 %v3848
        %v3881 = vcvt.s32.f32 %v3849
        %v3882 = vcvt.s32.f32 %v3850
        %v3883 = vcvt.s32.f32 %v3851
        %v3884 = vcvt.s32.f32 %v3852
        %v3885 = vcvt.s32.f32 %v3853
        %v3886 = vcvt.s32.f32 %v3854
        %v3887 = vcvt.s32.f32 %v3855
        %v3888 = vcvt.s32.f32 %v3856
        %v3889 = vcvt.s32.f32 %v3857
        %v3890 = vcvt.s32.f32 %v3858
        %v3891 = vcvt.s32.f32 %v3859
        %v3892 = vcvt.s32.f32 %v3860
        %v3893 = vld [vmem:[%s3] sm:$0xff]
        %v3894 = vld [vmem:[%s3 + $0x8] sm:$0xff]
        %v3895 = vld [vmem:[%s3 + $0x10] sm:$0xff]
        %v3896 = vld [vmem:[%s3 + $0x18] sm:$0xff]
        %v3897 = vld [vmem:[%s3 + $0x20] sm:$0xff]
        %v3898 = vld [vmem:[%s3 + $0x28] sm:$0xff]
        %v3899 = vld [vmem:[%s3 + $0x30] sm:$0xff]
        %v3900 = vld [vmem:[%s3 + $0x38] sm:$0xff]
        %v3901 = vld [vmem:[%s3 + $0x40] sm:$0xff]
        %v3902 = vld [vmem:[%s3 + $0x48] sm:$0xff]
        %v3903 = vld [vmem:[%s3 + $0x50] sm:$0xff]
        %v3904 = vld [vmem:[%s3 + $0x58] sm:$0xff]
        %v3905 = vld [vmem:[%s3 + $0x60] sm:$0xff]
        %v3906 = vld [vmem:[%s3 + $0x68] sm:$0xff]
        %v3907 = vld [vmem:[%s3 + $0x70] sm:$0xff]
        %v3908 = vld [vmem:[%s3 + $0x78] sm:$0xff]
        %3909 = vmatprep.subr.mxu0 0.0
        %3910 = vmatpush1.msra.mxu0 %v3893
        %3911 = vmatprep.subr.mxu0 0.0
        %3912 = vmatpush1.msra.mxu0 %v3894
        %3913 = vmatprep.subr.mxu0 0.0
        %3914 = vmatpush1.msra.mxu0 %v3895
        %3915 = vmatprep.subr.mxu0 0.0
        %3916 = vmatpush1.msra.mxu0 %v3896
        %3917 = vmatprep.subr.mxu0 0.0
        %3918 = vmatpush1.msra.mxu0 %v3897
        %3919 = vmatprep.subr.mxu0 0.0
        %3920 = vmatpush1.msra.mxu0 %v3898
        %3921 = vmatprep.subr.mxu0 0.0
        %3922 = vmatpush1.msra.mxu0 %v3899
        %3923 = vmatprep.subr.mxu0 0.0
        %3924 = vmatpush1.msra.mxu0 %v3900
        %3925 = vmatprep.subr.mxu0 0.0
        %3926 = vmatpush1.msra.mxu0 %v3901
        %3927 = vmatprep.subr.mxu0 0.0
        %3928 = vmatpush1.msra.mxu0 %v3902
        %3929 = vmatprep.subr.mxu0 0.0
        %3930 = vmatpush1.msra.mxu0 %v3903
        %3931 = vmatprep.subr.mxu0 0.0
        %3932 = vmatpush1.msra.mxu0 %v3904
        %3933 = vmatprep.subr.mxu0 0.0
        %3934 = vmatpush1.msra.mxu0 %v3905
        %3935 = vmatprep.subr.mxu0 0.0
        %3936 = vmatpush1.msra.mxu0 %v3906
        %3937 = vmatprep.subr.mxu0 0.0
        %3938 = vmatpush1.msra.mxu0 %v3907
        %3939 = vmatprep.subr.mxu0 0.0
        %3940 = vmatpush1.msra.mxu0 %v3908
        %3941 = vmatprep.subr.mxu0 0.0
        %3942 = vmatpush1.msra.mxu0 0.0
        %3943 = vmatprep.subr.mxu0 0.0
        %3944 = vmatpush1.msra.mxu0 0.0
        %3945 = vmatprep.subr.mxu0 0.0
        %3946 = vmatpush1.msra.mxu0 0.0
        %3947 = vmatprep.subr.mxu0 0.0
        %3948 = vmatpush1.msra.mxu0 0.0
        %3949 = vmatprep.subr.mxu0 0.0
        %3950 = vmatpush1.msra.mxu0 0.0
        %3951 = vmatprep.subr.mxu0 0.0
        %3952 = vmatpush1.msra.mxu0 0.0
        %3953 = vmatprep.subr.mxu0 0.0
        %3954 = vmatpush1.msra.mxu0 0.0
        %3955 = vmatprep.subr.mxu0 0.0
        %3956 = vmatpush1.msra.mxu0 0.0
        %3957 = vmatprep.subr.mxu0 0.0
        %3958 = vmatpush1.msra.mxu0 0.0
        %3959 = vmatprep.subr.mxu0 0.0
        %3960 = vmatpush1.msra.mxu0 0.0
        %3961 = vmatprep.subr.mxu0 0.0
        %3962 = vmatpush1.msra.mxu0 0.0
        %3963 = vmatprep.subr.mxu0 0.0
        %3964 = vmatpush1.msra.mxu0 0.0
        %3965 = vmatprep.subr.mxu0 0.0
        %3966 = vmatpush1.msra.mxu0 0.0
        %3967 = vmatprep.subr.mxu0 0.0
        %3968 = vmatpush1.msra.mxu0 0.0
        %3969 = vmatprep.subr.mxu0 0.0
        %3970 = vmatpush1.msra.mxu0 0.0
        %3971 = vmatprep.subr.mxu0 0.0
        %3972 = vmatpush1.msra.mxu0 0.0
        %3973 = vmatprep.mubr.f32.mxu0 0.0
        %3974 = vmatmul.mubr.f32.gmra.mrb[0].mxu0 %v2421
        %v3975 = vpop.f32.mrb[0].mxu0
        %v3976 = vadd.f32 0.0, %v3975
        %v3977 = vpop.f32.mrb[0].mxu0
        %3978 = vmatprep.mubr.f32.mxu0 0.0
        %3979 = vmatmul.mubr.f32.gmra.mrb[0].mxu0 %v2422
        %v3980 = vpop.f32.mrb[0].mxu0
        %v3981 = vadd.f32 0.0, %v3980
        %v3982 = vpop.f32.mrb[0].mxu0
        %3983 = vmatprep.mubr.f32.mxu0 0.0
        %3984 = vmatmul.mubr.f32.gmra.mrb[0].mxu0 %v2423
        %v3985 = vpop.f32.mrb[0].mxu0
        %v3986 = vadd.f32 0.0, %v3985
        %v3987 = vpop.f32.mrb[0].mxu0
        %3988 = vmatprep.mubr.f32.mxu0 0.0
        %3989 = vmatmul.mubr.f32.gmra.mrb[0].mxu0 %v2424
        %v3990 = vpop.f32.mrb[0].mxu0
        %v3991 = vadd.f32 0.0, %v3990
        %v3992 = vpop.f32.mrb[0].mxu0
        %3993 = vmatprep.mubr.f32.mxu0 0.0
        %3994 = vmatmul.mubr.f32.gmra.mrb[0].mxu0 %v2425
        %v3995 = vpop.f32.mrb[0].mxu0
        %v3996 = vadd.f32 0.0, %v3995
        %v3997 = vpop.f32.mrb[0].mxu0
        %3998 = vmatprep.mubr.f32.mxu0 0.0
        %3999 = vmatmul.mubr.f32.gmra.mrb[0].mxu0 %v2426
        %v4000 = vpop.f32.mrb[0].mxu0
        %v4001 = vadd.f32 0.0, %v4000
        %v4002 = vpop.f32.mrb[0].mxu0
        %4003 = vmatprep.mubr.f32.mxu0 0.0
        %4004 = vmatmul.mubr.f32.gmra.mrb[0].mxu0 %v2427
        %v4005 = vpop.f32.mrb[0].mxu0
        %v4006 = vadd.f32 0.0, %v4005
        %v4007 = vpop.f32.mrb[0].mxu0
        %4008 = vmatprep.mubr.f32.mxu0 0.0
        %4009 = vmatmul.mubr.f32.gmra.mrb[0].mxu0 %v2428
        %v4010 = vpop.f32.mrb[0].mxu0
        %v4011 = vadd.f32 0.0, %v4010
        %v4012 = vpop.f32.mrb[0].mxu0
        %4013 = vmatprep.mubr.f32.mxu0 0.0
        %4014 = vmatmul.mubr.f32.gmra.mrb[0].mxu0 %v2429
        %v4015 = vpop.f32.mrb[0].mxu0
        %v4016 = vadd.f32 0.0, %v4015
        %v4017 = vpop.f32.mrb[0].mxu0
        %4018 = vmatprep.mubr.f32.mxu0 0.0
        %4019 = vmatmul.mubr.f32.gmra.mrb[0].mxu0 %v2430
        %v4020 = vpop.f32.mrb[0].mxu0
        %v4021 = vadd.f32 0.0, %v4020
        %v4022 = vpop.f32.mrb[0].mxu0
        %4023 = vmatprep.mubr.f32.mxu0 0.0
        %4024 = vmatmul.mubr.f32.gmra.mrb[0].mxu0 %v2431
        %v4025 = vpop.f32.mrb[0].mxu0
        %v4026 = vadd.f32 0.0, %v4025
        %v4027 = vpop.f32.mrb[0].mxu0
        %4028 = vmatprep.mubr.f32.mxu0 0.0
        %4029 = vmatmul.mubr.f32.gmra.mrb[0].mxu0 %v2432
        %v4030 = vpop.f32.mrb[0].mxu0
        %v4031 = vadd.f32 0.0, %v4030
        %v4032 = vpop.f32.mrb[0].mxu0
        %4033 = vmatprep.mubr.f32.mxu0 0.0
        %4034 = vmatmul.mubr.f32.gmra.mrb[0].mxu0 %v2433
        %v4035 = vpop.f32.mrb[0].mxu0
        %v4036 = vadd.f32 0.0, %v4035
        %v4037 = vpop.f32.mrb[0].mxu0
        %4038 = vmatprep.mubr.f32.mxu0 0.0
        %4039 = vmatmul.mubr.f32.gmra.mrb[0].mxu0 %v2434
        %v4040 = vpop.f32.mrb[0].mxu0
        %v4041 = vadd.f32 0.0, %v4040
        %v4042 = vpop.f32.mrb[0].mxu0
        %4043 = vmatprep.mubr.f32.mxu0 0.0
        %4044 = vmatmul.mubr.f32.gmra.mrb[0].mxu0 %v2435
        %v4045 = vpop.f32.mrb[0].mxu0
        %v4046 = vadd.f32 0.0, %v4045
        %v4047 = vpop.f32.mrb[0].mxu0
        %4048 = vmatprep.mubr.f32.mxu0 0.0
        %4049 = vmatmul.mubr.f32.gmra.mrb[0].mxu0 %v2436
        %v4050 = vpop.f32.mrb[0].mxu0
        %v4051 = vadd.f32 0.0, %v4050
        %v4052 = vpop.f32.mrb[0].mxu0
        %4053 = vmatprep.mubr.f32.mxu0 0.0
        %4054 = vmatmul.mubr.f32.gmra.mrb[0].mxu0 %v2437
        %v4055 = vpop.f32.mrb[0].mxu0
        %v4056 = vadd.f32 0.0, %v4055
        %v4057 = vpop.f32.mrb[0].mxu0
        %4058 = vmatprep.mubr.f32.mxu0 0.0
        %4059 = vmatmul.mubr.f32.gmra.mrb[0].mxu0 %v2438
        %v4060 = vpop.f32.mrb[0].mxu0
        %v4061 = vadd.f32 0.0, %v4060
        %v4062 = vpop.f32.mrb[0].mxu0
        %4063 = vmatprep.mubr.f32.mxu0 0.0
        %4064 = vmatmul.mubr.f32.gmra.mrb[0].mxu0 %v2439
        %v4065 = vpop.f32.mrb[0].mxu0
        %v4066 = vadd.f32 0.0, %v4065
        %v4067 = vpop.f32.mrb[0].mxu0
        %4068 = vmatprep.mubr.f32.mxu0 0.0
        %4069 = vmatmul.mubr.f32.gmra.mrb[0].mxu0 %v2440
        %v4070 = vpop.f32.mrb[0].mxu0
        %v4071 = vadd.f32 0.0, %v4070
        %v4072 = vpop.f32.mrb[0].mxu0
        %4073 = vmatprep.mubr.f32.mxu0 0.0
        %4074 = vmatmul.mubr.f32.gmra.mrb[0].mxu0 %v2441
        %v4075 = vpop.f32.mrb[0].mxu0
        %v4076 = vadd.f32 0.0, %v4075
        %v4077 = vpop.f32.mrb[0].mxu0
        %4078 = vmatprep.mubr.f32.mxu0 0.0
        %4079 = vmatmul.mubr.f32.gmra.mrb[0].mxu0 %v2442
        %v4080 = vpop.f32.mrb[0].mxu0
        %v4081 = vadd.f32 0.0, %v4080
        %v4082 = vpop.f32.mrb[0].mxu0
        %4083 = vmatprep.mubr.f32.mxu0 0.0
        %4084 = vmatmul.mubr.f32.gmra.mrb[0].mxu0 %v2443
        %v4085 = vpop.f32.mrb[0].mxu0
        %v4086 = vadd.f32 0.0, %v4085
        %v4087 = vpop.f32.mrb[0].mxu0
        %4088 = vmatprep.mubr.f32.mxu0 0.0
        %4089 = vmatmul.mubr.f32.gmra.mrb[0].mxu0 %v2444
        %v4090 = vpop.f32.mrb[0].mxu0
        %v4091 = vadd.f32 0.0, %v4090
        %v4092 = vpop.f32.mrb[0].mxu0
        %4093 = vmatprep.mubr.f32.mxu0 0.0
        %4094 = vmatmul.mubr.f32.gmra.mrb[0].mxu0 %v2445
        %v4095 = vpop.f32.mrb[0].mxu0
        %v4096 = vadd.f32 0.0, %v4095
        %v4097 = vpop.f32.mrb[0].mxu0
        %4098 = vmatprep.mubr.f32.mxu0 0.0
        %4099 = vmatmul.mubr.f32.gmra.mrb[0].mxu0 %v2446
        %v4100 = vpop.f32.mrb[0].mxu0
        %v4101 = vadd.f32 0.0, %v4100
        %v4102 = vpop.f32.mrb[0].mxu0
        %4103 = vmatprep.mubr.f32.mxu0 0.0
        %4104 = vmatmul.mubr.f32.gmra.mrb[0].mxu0 %v2447
        %v4105 = vpop.f32.mrb[0].mxu0
        %v4106 = vadd.f32 0.0, %v4105
        %v4107 = vpop.f32.mrb[0].mxu0
        %4108 = vmatprep.mubr.f32.mxu0 0.0
        %4109 = vmatmul.mubr.f32.gmra.mrb[0].mxu0 %v2448
        %v4110 = vpop.f32.mrb[0].mxu0
        %v4111 = vadd.f32 0.0, %v4110
        %v4112 = vpop.f32.mrb[0].mxu0
        %4113 = vmatprep.mubr.f32.mxu0 0.0
        %4114 = vmatmul.mubr.f32.gmra.mrb[0].mxu0 %v2449
        %v4115 = vpop.f32.mrb[0].mxu0
        %v4116 = vadd.f32 0.0, %v4115
        %v4117 = vpop.f32.mrb[0].mxu0
        %4118 = vmatprep.mubr.f32.mxu0 0.0
        %4119 = vmatmul.mubr.f32.gmra.mrb[0].mxu0 %v2450
        %v4120 = vpop.f32.mrb[0].mxu0
        %v4121 = vadd.f32 0.0, %v4120
        %v4122 = vpop.f32.mrb[0].mxu0
        %4123 = vmatprep.mubr.f32.mxu0 0.0
        %4124 = vmatmul.mubr.f32.gmra.mrb[0].mxu0 %v2451
        %v4125 = vpop.f32.mrb[0].mxu0
        %v4126 = vadd.f32 0.0, %v4125
        %v4127 = vpop.f32.mrb[0].mxu0
        %4128 = vmatprep.mubr.f32.mxu0 0.0
        %4129 = vmatmul.mubr.f32.gmra.mrb[0].mxu0 %v2452
        %v4130 = vpop.f32.mrb[0].mxu0
        %v4131 = vadd.f32 0.0, %v4130
        %v4132 = vpop.f32.mrb[0].mxu0
        %4133 = vdwg.mxu0
        %4134 = vset.pattern.permute.xlu0 0
        %4135 = vperm.xlu0 %4134, %v3701
        %v4136 = vpop.permute.xlu0 %4135
        %4137 = vset.pattern.permute.xlu0 0
        %4138 = vperm.xlu0 %4137, %v3702
        %v4139 = vpop.permute.xlu0 %4138
        %4140 = vset.pattern.permute.xlu0 0
        %4141 = vperm.xlu0 %4140, %v3703
        %v4142 = vpop.permute.xlu0 %4141
        %4143 = vset.pattern.permute.xlu0 0
        %4144 = vperm.xlu0 %4143, %v3704
        %v4145 = vpop.permute.xlu0 %4144
        %4146 = vset.pattern.permute.xlu0 0
        %4147 = vperm.xlu0 %4146, %v3705
        %v4148 = vpop.permute.xlu0 %4147
        %4149 = vset.pattern.permute.xlu0 0
        %4150 = vperm.xlu0 %4149, %v3706
        %v4151 = vpop.permute.xlu0 %4150
        %4152 = vset.pattern.permute.xlu0 0
        %4153 = vperm.xlu0 %4152, %v3707
        %v4154 = vpop.permute.xlu0 %4153
        %4155 = vset.pattern.permute.xlu0 0
        %4156 = vperm.xlu0 %4155, %v3708
        %v4157 = vpop.permute.xlu0 %4156
        %4158 = vset.pattern.permute.xlu0 0
        %4159 = vperm.xlu0 %4158, %v3709
        %v4160 = vpop.permute.xlu0 %4159
        %4161 = vset.pattern.permute.xlu0 0
        %4162 = vperm.xlu0 %4161, %v3710
        %v4163 = vpop.permute.xlu0 %4162
        %4164 = vset.pattern.permute.xlu0 0
        %4165 = vperm.xlu0 %4164, %v3711
        %v4166 = vpop.permute.xlu0 %4165
        %4167 = vset.pattern.permute.xlu0 0
        %4168 = vperm.xlu0 %4167, %v3712
        %v4169 = vpop.permute.xlu0 %4168
        %4170 = vset.pattern.permute.xlu0 0
        %4171 = vperm.xlu0 %4170, %v3713
        %v4172 = vpop.permute.xlu0 %4171
        %4173 = vset.pattern.permute.xlu0 0
        %4174 = vperm.xlu0 %4173, %v3714
        %v4175 = vpop.permute.xlu0 %4174
        %4176 = vset.pattern.permute.xlu0 0
        %4177 = vperm.xlu0 %4176, %v3715
        %v4178 = vpop.permute.xlu0 %4177
        %4179 = vset.pattern.permute.xlu0 0
        %4180 = vperm.xlu0 %4179, %v3716
        %v4181 = vpop.permute.xlu0 %4180
        %4182 = vset.pattern.permute.xlu0 0
        %4183 = vperm.xlu0 %4182, %v3717
        %v4184 = vpop.permute.xlu0 %4183
        %4185 = vset.pattern.permute.xlu0 0
        %4186 = vperm.xlu0 %4185, %v3718
        %v4187 = vpop.permute.xlu0 %4186
        %4188 = vset.pattern.permute.xlu0 0
        %4189 = vperm.xlu0 %4188, %v3719
        %v4190 = vpop.permute.xlu0 %4189
        %4191 = vset.pattern.permute.xlu0 0
        %4192 = vperm.xlu0 %4191, %v3720
        %v4193 = vpop.permute.xlu0 %4192
        %4194 = vset.pattern.permute.xlu0 0
        %4195 = vperm.xlu0 %4194, %v3721
        %v4196 = vpop.permute.xlu0 %4195
        %4197 = vset.pattern.permute.xlu0 0
        %4198 = vperm.xlu0 %4197, %v3722
        %v4199 = vpop.permute.xlu0 %4198
        %4200 = vset.pattern.permute.xlu0 0
        %4201 = vperm.xlu0 %4200, %v3723
        %v4202 = vpop.permute.xlu0 %4201
        %4203 = vset.pattern.permute.xlu0 0
        %4204 = vperm.xlu0 %4203, %v3724
        %v4205 = vpop.permute.xlu0 %4204
        %4206 = vset.pattern.permute.xlu0 0
        %4207 = vperm.xlu0 %4206, %v3725
        %v4208 = vpop.permute.xlu0 %4207
        %4209 = vset.pattern.permute.xlu0 0
        %4210 = vperm.xlu0 %4209, %v3726
        %v4211 = vpop.permute.xlu0 %4210
        %4212 = vset.pattern.permute.xlu0 0
        %4213 = vperm.xlu0 %4212, %v3727
        %v4214 = vpop.permute.xlu0 %4213
        %4215 = vset.pattern.permute.xlu0 0
        %4216 = vperm.xlu0 %4215, %v3728
        %v4217 = vpop.permute.xlu0 %4216
        %4218 = vset.pattern.permute.xlu0 0
        %4219 = vperm.xlu0 %4218, %v3729
        %v4220 = vpop.permute.xlu0 %4219
        %4221 = vset.pattern.permute.xlu0 0
        %4222 = vperm.xlu0 %4221, %v3730
        %v4223 = vpop.permute.xlu0 %4222
        %4224 = vset.pattern.permute.xlu0 0
        %4225 = vperm.xlu0 %4224, %v3731
        %v4226 = vpop.permute.xlu0 %4225
        %4227 = vset.pattern.permute.xlu0 0
        %4228 = vperm.xlu0 %4227, %v3732
        %v4229 = vpop.permute.xlu0 %4228
        %vm4230 = vcmp.eq.s32.totalorder %v4136, %v500
        %vm4231 = vcmp.eq.s32.totalorder %v4139, %v500
        %vm4232 = vcmp.eq.s32.totalorder %v4142, %v500
        %vm4233 = vcmp.eq.s32.totalorder %v4145, %v500
        %vm4234 = vcmp.eq.s32.totalorder %v4148, %v500
        %vm4235 = vcmp.eq.s32.totalorder %v4151, %v500
        %vm4236 = vcmp.eq.s32.totalorder %v4154, %v500
        %vm4237 = vcmp.eq.s32.totalorder %v4157, %v500
        %vm4238 = vcmp.eq.s32.totalorder %v4160, %v500
        %vm4239 = vcmp.eq.s32.totalorder %v4163, %v500
        %vm4240 = vcmp.eq.s32.totalorder %v4166, %v500
        %vm4241 = vcmp.eq.s32.totalorder %v4169, %v500
        %vm4242 = vcmp.eq.s32.totalorder %v4172, %v500
        %vm4243 = vcmp.eq.s32.totalorder %v4175, %v500
        %vm4244 = vcmp.eq.s32.totalorder %v4178, %v500
        %vm4245 = vcmp.eq.s32.totalorder %v4181, %v500
        %vm4246 = vcmp.eq.s32.totalorder %v4184, %v500
        %vm4247 = vcmp.eq.s32.totalorder %v4187, %v500
        %vm4248 = vcmp.eq.s32.totalorder %v4190, %v500
        %vm4249 = vcmp.eq.s32.totalorder %v4193, %v500
        %vm4250 = vcmp.eq.s32.totalorder %v4196, %v500
        %vm4251 = vcmp.eq.s32.totalorder %v4199, %v500
        %vm4252 = vcmp.eq.s32.totalorder %v4202, %v500
        %vm4253 = vcmp.eq.s32.totalorder %v4205, %v500
        %vm4254 = vcmp.eq.s32.totalorder %v4208, %v500
        %vm4255 = vcmp.eq.s32.totalorder %v4211, %v500
        %vm4256 = vcmp.eq.s32.totalorder %v4214, %v500
        %vm4257 = vcmp.eq.s32.totalorder %v4217, %v500
        %vm4258 = vcmp.eq.s32.totalorder %v4220, %v500
        %vm4259 = vcmp.eq.s32.totalorder %v4223, %v500
        %vm4260 = vcmp.eq.s32.totalorder %v4226, %v500
        %vm4261 = vcmp.eq.s32.totalorder %v4229, %v500
        %v4262 = vsel %vm4230, 1, 0
        %v4263 = vsel %vm4231, 1, 0
        %v4264 = vsel %vm4232, 1, 0
        %v4265 = vsel %vm4233, 1, 0
        %v4266 = vsel %vm4234, 1, 0
        %v4267 = vsel %vm4235, 1, 0
        %v4268 = vsel %vm4236, 1, 0
        %v4269 = vsel %vm4237, 1, 0
        %v4270 = vsel %vm4238, 1, 0
        %v4271 = vsel %vm4239, 1, 0
        %v4272 = vsel %vm4240, 1, 0
        %v4273 = vsel %vm4241, 1, 0
        %v4274 = vsel %vm4242, 1, 0
        %v4275 = vsel %vm4243, 1, 0
        %v4276 = vsel %vm4244, 1, 0
        %v4277 = vsel %vm4245, 1, 0
        %v4278 = vsel %vm4246, 1, 0
        %v4279 = vsel %vm4247, 1, 0
        %v4280 = vsel %vm4248, 1, 0
        %v4281 = vsel %vm4249, 1, 0
        %v4282 = vsel %vm4250, 1, 0
        %v4283 = vsel %vm4251, 1, 0
        %v4284 = vsel %vm4252, 1, 0
        %v4285 = vsel %vm4253, 1, 0
        %v4286 = vsel %vm4254, 1, 0
        %v4287 = vsel %vm4255, 1, 0
        %v4288 = vsel %vm4256, 1, 0
        %v4289 = vsel %vm4257, 1, 0
        %v4290 = vsel %vm4258, 1, 0
        %v4291 = vsel %vm4259, 1, 0
        %v4292 = vsel %vm4260, 1, 0
        %v4293 = vsel %vm4261, 1, 0
        %v4294 = vcvt.s32.f32 %v4262
        %v4295 = vcvt.s32.f32 %v4263
        %v4296 = vcvt.s32.f32 %v4264
        %v4297 = vcvt.s32.f32 %v4265
        %v4298 = vcvt.s32.f32 %v4266
        %v4299 = vcvt.s32.f32 %v4267
        %v4300 = vcvt.s32.f32 %v4268
        %v4301 = vcvt.s32.f32 %v4269
        %v4302 = vcvt.s32.f32 %v4270
        %v4303 = vcvt.s32.f32 %v4271
        %v4304 = vcvt.s32.f32 %v4272
        %v4305 = vcvt.s32.f32 %v4273
        %v4306 = vcvt.s32.f32 %v4274
        %v4307 = vcvt.s32.f32 %v4275
        %v4308 = vcvt.s32.f32 %v4276
        %v4309 = vcvt.s32.f32 %v4277
        %v4310 = vcvt.s32.f32 %v4278
        %v4311 = vcvt.s32.f32 %v4279
        %v4312 = vcvt.s32.f32 %v4280
        %v4313 = vcvt.s32.f32 %v4281
        %v4314 = vcvt.s32.f32 %v4282
        %v4315 = vcvt.s32.f32 %v4283
        %v4316 = vcvt.s32.f32 %v4284
        %v4317 = vcvt.s32.f32 %v4285
        %v4318 = vcvt.s32.f32 %v4286
        %v4319 = vcvt.s32.f32 %v4287
        %v4320 = vcvt.s32.f32 %v4288
        %v4321 = vcvt.s32.f32 %v4289
        %v4322 = vcvt.s32.f32 %v4290
        %v4323 = vcvt.s32.f32 %v4291
        %v4324 = vcvt.s32.f32 %v4292
        %v4325 = vcvt.s32.f32 %v4293
        %v4326 = vld [vmem:[%s4] sm:$0xff]
        %v4327 = vld [vmem:[%s4 + $0x8] sm:$0xff]
        %v4328 = vld [vmem:[%s4 + $0x10] sm:$0xff]
        %v4329 = vld [vmem:[%s4 + $0x18] sm:$0xff]
        %v4330 = vld [vmem:[%s4 + $0x20] sm:$0xff]
        %v4331 = vld [vmem:[%s4 + $0x28] sm:$0xff]
        %v4332 = vld [vmem:[%s4 + $0x30] sm:$0xff]
        %v4333 = vld [vmem:[%s4 + $0x38] sm:$0xff]
        %v4334 = vld [vmem:[%s4 + $0x40] sm:$0xff]
        %v4335 = vld [vmem:[%s4 + $0x48] sm:$0xff]
        %v4336 = vld [vmem:[%s4 + $0x50] sm:$0xff]
        %v4337 = vld [vmem:[%s4 + $0x58] sm:$0xff]
        %v4338 = vld [vmem:[%s4 + $0x60] sm:$0xff]
        %v4339 = vld [vmem:[%s4 + $0x68] sm:$0xff]
        %v4340 = vld [vmem:[%s4 + $0x70] sm:$0xff]
        %v4341 = vld [vmem:[%s4 + $0x78] sm:$0xff]
        %4342 = vmatprep.subr.mxu0 0.0
        %4343 = vmatpush1.msra.mxu0 %v4326
        %4344 = vmatprep.subr.mxu0 0.0
        %4345 = vmatpush1.msra.mxu0 %v4327
        %4346 = vmatprep.subr.mxu0 0.0
        %4347 = vmatpush1.msra.mxu0 %v4328
        %4348 = vmatprep.subr.mxu0 0.0
        %4349 = vmatpush1.msra.mxu0 %v4329
        %4350 = vmatprep.subr.mxu0 0.0
        %4351 = vmatpush1.msra.mxu0 %v4330
        %4352 = vmatprep.subr.mxu0 0.0
        %4353 = vmatpush1.msra.mxu0 %v4331
        %4354 = vmatprep.subr.mxu0 0.0
        %4355 = vmatpush1.msra.mxu0 %v4332
        %4356 = vmatprep.subr.mxu0 0.0
        %4357 = vmatpush1.msra.mxu0 %v4333
        %4358 = vmatprep.subr.mxu0 0.0
        %4359 = vmatpush1.msra.mxu0 %v4334
        %4360 = vmatprep.subr.mxu0 0.0
        %4361 = vmatpush1.msra.mxu0 %v4335
        %4362 = vmatprep.subr.mxu0 0.0
        %4363 = vmatpush1.msra.mxu0 %v4336
        %4364 = vmatprep.subr.mxu0 0.0
        %4365 = vmatpush1.msra.mxu0 %v4337
        %4366 = vmatprep.subr.mxu0 0.0
        %4367 = vmatpush1.msra.mxu0 %v4338
        %4368 = vmatprep.subr.mxu0 0.0
        %4369 = vmatpush1.msra.mxu0 %v4339
        %4370 = vmatprep.subr.mxu0 0.0
        %4371 = vmatpush1.msra.mxu0 %v4340
        %4372 = vmatprep.subr.mxu0 0.0
        %4373 = vmatpush1.msra.mxu0 %v4341
        %4374 = vmatprep.subr.mxu0 0.0
        %4375 = vmatpush1.msra.mxu0 0.0
        %4376 = vmatprep.subr.mxu0 0.0
        %4377 = vmatpush1.msra.mxu0 0.0
        %4378 = vmatprep.subr.mxu0 0.0
        %4379 = vmatpush1.msra.mxu0 0.0
        %4380 = vmatprep.subr.mxu0 0.0
        %4381 = vmatpush1.msra.mxu0 0.0
        %4382 = vmatprep.subr.mxu0 0.0
        %4383 = vmatpush1.msra.mxu0 0.0
        %4384 = vmatprep.subr.mxu0 0.0
        %4385 = vmatpush1.msra.mxu0 0.0
        %4386 = vmatprep.subr.mxu0 0.0
        %4387 = vmatpush1.msra.mxu0 0.0
        %4388 = vmatprep.subr.mxu0 0.0
        %4389 = vmatpush1.msra.mxu0 0.0
        %4390 = vmatprep.subr.mxu0 0.0
        %4391 = vmatpush1.msra.mxu0 0.0
        %4392 = vmatprep.subr.mxu0 0.0
        %4393 = vmatpush1.msra.mxu0 0.0
        %4394 = vmatprep.subr.mxu0 0.0
        %4395 = vmatpush1.msra.mxu0 0.0
        %4396 = vmatprep.subr.mxu0 0.0
        %4397 = vmatpush1.msra.mxu0 0.0
        %4398 = vmatprep.subr.mxu0 0.0
        %4399 = vmatpush1.msra.mxu0 0.0
        %4400 = vmatprep.subr.mxu0 0.0
        %4401 = vmatpush1.msra.mxu0 0.0
        %4402 = vmatprep.subr.mxu0 0.0
        %4403 = vmatpush1.msra.mxu0 0.0
        %4404 = vmatprep.subr.mxu0 0.0
        %4405 = vmatpush1.msra.mxu0 0.0
        %4406 = vmatprep.mubr.f32.mxu0 0.0
        %4407 = vmatmul.mubr.f32.gmra.mrb[0].mxu0 %v4294
        %v4408 = vpop.f32.mrb[0].mxu0
        %v4409 = vadd.f32 0.0, %v4408
        %v4410 = vpop.f32.mrb[0].mxu0
        %4411 = vmatprep.mubr.f32.mxu0 0.0
        %4412 = vmatmul.mubr.f32.gmra.mrb[0].mxu0 %v4295
        %v4413 = vpop.f32.mrb[0].mxu0
        %v4414 = vadd.f32 0.0, %v4413
        %v4415 = vpop.f32.mrb[0].mxu0
        %4416 = vmatprep.mubr.f32.mxu0 0.0
        %4417 = vmatmul.mubr.f32.gmra.mrb[0].mxu0 %v4296
        %v4418 = vpop.f32.mrb[0].mxu0
        %v4419 = vadd.f32 0.0, %v4418
        %v4420 = vpop.f32.mrb[0].mxu0
        %4421 = vmatprep.mubr.f32.mxu0 0.0
        %4422 = vmatmul.mubr.f32.gmra.mrb[0].mxu0 %v4297
        %v4423 = vpop.f32.mrb[0].mxu0
        %v4424 = vadd.f32 0.0, %v4423
        %v4425 = vpop.f32.mrb[0].mxu0
        %4426 = vmatprep.mubr.f32.mxu0 0.0
        %4427 = vmatmul.mubr.f32.gmra.mrb[0].mxu0 %v4298
        %v4428 = vpop.f32.mrb[0].mxu0
        %v4429 = vadd.f32 0.0, %v4428
        %v4430 = vpop.f32.mrb[0].mxu0
        %4431 = vmatprep.mubr.f32.mxu0 0.0
        %4432 = vmatmul.mubr.f32.gmra.mrb[0].mxu0 %v4299
        %v4433 = vpop.f32.mrb[0].mxu0
        %v4434 = vadd.f32 0.0, %v4433
        %v4435 = vpop.f32.mrb[0].mxu0
        %4436 = vmatprep.mubr.f32.mxu0 0.0
        %4437 = vmatmul.mubr.f32.gmra.mrb[0].mxu0 %v4300
        %v4438 = vpop.f32.mrb[0].mxu0
        %v4439 = vadd.f32 0.0, %v4438
        %v4440 = vpop.f32.mrb[0].mxu0
        %4441 = vmatprep.mubr.f32.mxu0 0.0
        %4442 = vmatmul.mubr.f32.gmra.mrb[0].mxu0 %v4301
        %v4443 = vpop.f32.mrb[0].mxu0
        %v4444 = vadd.f32 0.0, %v4443
        %v4445 = vpop.f32.mrb[0].mxu0
        %4446 = vmatprep.mubr.f32.mxu0 0.0
        %4447 = vmatmul.mubr.f32.gmra.mrb[0].mxu0 %v4302
        %v4448 = vpop.f32.mrb[0].mxu0
        %v4449 = vadd.f32 0.0, %v4448
        %v4450 = vpop.f32.mrb[0].mxu0
        %4451 = vmatprep.mubr.f32.mxu0 0.0
        %4452 = vmatmul.mubr.f32.gmra.mrb[0].mxu0 %v4303
        %v4453 = vpop.f32.mrb[0].mxu0
        %v4454 = vadd.f32 0.0, %v4453
        %v4455 = vpop.f32.mrb[0].mxu0
        %4456 = vmatprep.mubr.f32.mxu0 0.0
        %4457 = vmatmul.mubr.f32.gmra.mrb[0].mxu0 %v4304
        %v4458 = vpop.f32.mrb[0].mxu0
        %v4459 = vadd.f32 0.0, %v4458
        %v4460 = vpop.f32.mrb[0].mxu0
        %4461 = vmatprep.mubr.f32.mxu0 0.0
        %4462 = vmatmul.mubr.f32.gmra.mrb[0].mxu0 %v4305
        %v4463 = vpop.f32.mrb[0].mxu0
        %v4464 = vadd.f32 0.0, %v4463
        %v4465 = vpop.f32.mrb[0].mxu0
        %4466 = vmatprep.mubr.f32.mxu0 0.0
        %4467 = vmatmul.mubr.f32.gmra.mrb[0].mxu0 %v4306
        %v4468 = vpop.f32.mrb[0].mxu0
        %v4469 = vadd.f32 0.0, %v4468
        %v4470 = vpop.f32.mrb[0].mxu0
        %4471 = vmatprep.mubr.f32.mxu0 0.0
        %4472 = vmatmul.mubr.f32.gmra.mrb[0].mxu0 %v4307
        %v4473 = vpop.f32.mrb[0].mxu0
        %v4474 = vadd.f32 0.0, %v4473
        %v4475 = vpop.f32.mrb[0].mxu0
        %4476 = vmatprep.mubr.f32.mxu0 0.0
        %4477 = vmatmul.mubr.f32.gmra.mrb[0].mxu0 %v4308
        %v4478 = vpop.f32.mrb[0].mxu0
        %v4479 = vadd.f32 0.0, %v4478
        %v4480 = vpop.f32.mrb[0].mxu0
        %4481 = vmatprep.mubr.f32.mxu0 0.0
        %4482 = vmatmul.mubr.f32.gmra.mrb[0].mxu0 %v4309
        %v4483 = vpop.f32.mrb[0].mxu0
        %v4484 = vadd.f32 0.0, %v4483
        %v4485 = vpop.f32.mrb[0].mxu0
        %4486 = vmatprep.mubr.f32.mxu0 0.0
        %4487 = vmatmul.mubr.f32.gmra.mrb[0].mxu0 %v4310
        %v4488 = vpop.f32.mrb[0].mxu0
        %v4489 = vadd.f32 0.0, %v4488
        %v4490 = vpop.f32.mrb[0].mxu0
        %4491 = vmatprep.mubr.f32.mxu0 0.0
        %4492 = vmatmul.mubr.f32.gmra.mrb[0].mxu0 %v4311
        %v4493 = vpop.f32.mrb[0].mxu0
        %v4494 = vadd.f32 0.0, %v4493
        %v4495 = vpop.f32.mrb[0].mxu0
        %4496 = vmatprep.mubr.f32.mxu0 0.0
        %4497 = vmatmul.mubr.f32.gmra.mrb[0].mxu0 %v4312
        %v4498 = vpop.f32.mrb[0].mxu0
        %v4499 = vadd.f32 0.0, %v4498
        %v4500 = vpop.f32.mrb[0].mxu0
        %4501 = vmatprep.mubr.f32.mxu0 0.0
        %4502 = vmatmul.mubr.f32.gmra.mrb[0].mxu0 %v4313
        %v4503 = vpop.f32.mrb[0].mxu0
        %v4504 = vadd.f32 0.0, %v4503
        %v4505 = vpop.f32.mrb[0].mxu0
        %4506 = vmatprep.mubr.f32.mxu0 0.0
        %4507 = vmatmul.mubr.f32.gmra.mrb[0].mxu0 %v4314
        %v4508 = vpop.f32.mrb[0].mxu0
        %v4509 = vadd.f32 0.0, %v4508
        %v4510 = vpop.f32.mrb[0].mxu0
        %4511 = vmatprep.mubr.f32.mxu0 0.0
        %4512 = vmatmul.mubr.f32.gmra.mrb[0].mxu0 %v4315
        %v4513 = vpop.f32.mrb[0].mxu0
        %v4514 = vadd.f32 0.0, %v4513
        %v4515 = vpop.f32.mrb[0].mxu0
        %4516 = vmatprep.mubr.f32.mxu0 0.0
        %4517 = vmatmul.mubr.f32.gmra.mrb[0].mxu0 %v4316
        %v4518 = vpop.f32.mrb[0].mxu0
        %v4519 = vadd.f32 0.0, %v4518
        %v4520 = vpop.f32.mrb[0].mxu0
        %4521 = vmatprep.mubr.f32.mxu0 0.0
        %4522 = vmatmul.mubr.f32.gmra.mrb[0].mxu0 %v4317
        %v4523 = vpop.f32.mrb[0].mxu0
        %v4524 = vadd.f32 0.0, %v4523
        %v4525 = vpop.f32.mrb[0].mxu0
        %4526 = vmatprep.mubr.f32.mxu0 0.0
        %4527 = vmatmul.mubr.f32.gmra.mrb[0].mxu0 %v4318
        %v4528 = vpop.f32.mrb[0].mxu0
        %v4529 = vadd.f32 0.0, %v4528
        %v4530 = vpop.f32.mrb[0].mxu0
        %4531 = vmatprep.mubr.f32.mxu0 0.0
        %4532 = vmatmul.mubr.f32.gmra.mrb[0].mxu0 %v4319
        %v4533 = vpop.f32.mrb[0].mxu0
        %v4534 = vadd.f32 0.0, %v4533
        %v4535 = vpop.f32.mrb[0].mxu0
        %4536 = vmatprep.mubr.f32.mxu0 0.0
        %4537 = vmatmul.mubr.f32.gmra.mrb[0].mxu0 %v4320
        %v4538 = vpop.f32.mrb[0].mxu0
        %v4539 = vadd.f32 0.0, %v4538
        %v4540 = vpop.f32.mrb[0].mxu0
        %4541 = vmatprep.mubr.f32.mxu0 0.0
        %4542 = vmatmul.mubr.f32.gmra.mrb[0].mxu0 %v4321
        %v4543 = vpop.f32.mrb[0].mxu0
        %v4544 = vadd.f32 0.0, %v4543
        %v4545 = vpop.f32.mrb[0].mxu0
        %4546 = vmatprep.mubr.f32.mxu0 0.0
        %4547 = vmatmul.mubr.f32.gmra.mrb[0].mxu0 %v4322
        %v4548 = vpop.f32.mrb[0].mxu0
        %v4549 = vadd.f32 0.0, %v4548
        %v4550 = vpop.f32.mrb[0].mxu0
        %4551 = vmatprep.mubr.f32.mxu0 0.0
        %4552 = vmatmul.mubr.f32.gmra.mrb[0].mxu0 %v4323
        %v4553 = vpop.f32.mrb[0].mxu0
        %v4554 = vadd.f32 0.0, %v4553
        %v4555 = vpop.f32.mrb[0].mxu0
        %4556 = vmatprep.mubr.f32.mxu0 0.0
        %4557 = vmatmul.mubr.f32.gmra.mrb[0].mxu0 %v4324
        %v4558 = vpop.f32.mrb[0].mxu0
        %v4559 = vadd.f32 0.0, %v4558
        %v4560 = vpop.f32.mrb[0].mxu0
        %4561 = vmatprep.mubr.f32.mxu0 0.0
        %4562 = vmatmul.mubr.f32.gmra.mrb[0].mxu0 %v4325
        %v4563 = vpop.f32.mrb[0].mxu0
        %v4564 = vadd.f32 0.0, %v4563
        %v4565 = vpop.f32.mrb[0].mxu0
        %4566 = vdwg.mxu0
        %v4567 = vsub.f32 %v3976, %v4409
        %v4568 = vsub.f32 %v3981, %v4414
        %v4569 = vsub.f32 %v3986, %v4419
        %v4570 = vsub.f32 %v3991, %v4424
        %v4571 = vsub.f32 %v3996, %v4429
        %v4572 = vsub.f32 %v4001, %v4434
        %v4573 = vsub.f32 %v4006, %v4439
        %v4574 = vsub.f32 %v4011, %v4444
        %v4575 = vsub.f32 %v4016, %v4449
        %v4576 = vsub.f32 %v4021, %v4454
        %v4577 = vsub.f32 %v4026, %v4459
        %v4578 = vsub.f32 %v4031, %v4464
        %v4579 = vsub.f32 %v4036, %v4469
        %v4580 = vsub.f32 %v4041, %v4474
        %v4581 = vsub.f32 %v4046, %v4479
        %v4582 = vsub.f32 %v4051, %v4484
        %v4583 = vsub.f32 %v4056, %v4489
        %v4584 = vsub.f32 %v4061, %v4494
        %v4585 = vsub.f32 %v4066, %v4499
        %v4586 = vsub.f32 %v4071, %v4504
        %v4587 = vsub.f32 %v4076, %v4509
        %v4588 = vsub.f32 %v4081, %v4514
        %v4589 = vsub.f32 %v4086, %v4519
        %v4590 = vsub.f32 %v4091, %v4524
        %v4591 = vsub.f32 %v4096, %v4529
        %v4592 = vsub.f32 %v4101, %v4534
        %v4593 = vsub.f32 %v4106, %v4539
        %v4594 = vsub.f32 %v4111, %v4544
        %v4595 = vsub.f32 %v4116, %v4549
        %v4596 = vsub.f32 %v4121, %v4554
        %v4597 = vsub.f32 %v4126, %v4559
        %v4598 = vsub.f32 %v4131, %v4564
        %4599 = vset.pattern.permute.xlu0 0
        %4600 = vperm.xlu0 %4599, %v403
        %v4601 = vpop.permute.xlu0 %4600
        %4602 = vset.pattern.permute.xlu0 0
        %4603 = vperm.xlu0 %4602, %v404
        %v4604 = vpop.permute.xlu0 %4603
        %4605 = vset.pattern.permute.xlu0 0
        %4606 = vperm.xlu0 %4605, %v405
        %v4607 = vpop.permute.xlu0 %4606
        %4608 = vset.pattern.permute.xlu0 0
        %4609 = vperm.xlu0 %4608, %v406
        %v4610 = vpop.permute.xlu0 %4609
        %4611 = vset.pattern.permute.xlu0 0
        %4612 = vperm.xlu0 %4611, %v407
        %v4613 = vpop.permute.xlu0 %4612
        %4614 = vset.pattern.permute.xlu0 0
        %4615 = vperm.xlu0 %4614, %v408
        %v4616 = vpop.permute.xlu0 %4615
        %4617 = vset.pattern.permute.xlu0 0
        %4618 = vperm.xlu0 %4617, %v409
        %v4619 = vpop.permute.xlu0 %4618
        %4620 = vset.pattern.permute.xlu0 0
        %4621 = vperm.xlu0 %4620, %v410
        %v4622 = vpop.permute.xlu0 %4621
        %4623 = vset.pattern.permute.xlu0 0
        %4624 = vperm.xlu0 %4623, %v411
        %v4625 = vpop.permute.xlu0 %4624
        %4626 = vset.pattern.permute.xlu0 0
        %4627 = vperm.xlu0 %4626, %v412
        %v4628 = vpop.permute.xlu0 %4627
        %4629 = vset.pattern.permute.xlu0 0
        %4630 = vperm.xlu0 %4629, %v413
        %v4631 = vpop.permute.xlu0 %4630
        %4632 = vset.pattern.permute.xlu0 0
        %4633 = vperm.xlu0 %4632, %v414
        %v4634 = vpop.permute.xlu0 %4633
        %4635 = vset.pattern.permute.xlu0 0
        %4636 = vperm.xlu0 %4635, %v415
        %v4637 = vpop.permute.xlu0 %4636
        %4638 = vset.pattern.permute.xlu0 0
        %4639 = vperm.xlu0 %4638, %v416
        %v4640 = vpop.permute.xlu0 %4639
        %4641 = vset.pattern.permute.xlu0 0
        %4642 = vperm.xlu0 %4641, %v417
        %v4643 = vpop.permute.xlu0 %4642
        %4644 = vset.pattern.permute.xlu0 0
        %4645 = vperm.xlu0 %4644, %v418
        %v4646 = vpop.permute.xlu0 %4645
        %4647 = vset.pattern.permute.xlu0 0
        %4648 = vperm.xlu0 %4647, %v419
        %v4649 = vpop.permute.xlu0 %4648
        %4650 = vset.pattern.permute.xlu0 0
        %4651 = vperm.xlu0 %4650, %v420
        %v4652 = vpop.permute.xlu0 %4651
        %4653 = vset.pattern.permute.xlu0 0
        %4654 = vperm.xlu0 %4653, %v421
        %v4655 = vpop.permute.xlu0 %4654
        %4656 = vset.pattern.permute.xlu0 0
        %4657 = vperm.xlu0 %4656, %v422
        %v4658 = vpop.permute.xlu0 %4657
        %4659 = vset.pattern.permute.xlu0 0
        %4660 = vperm.xlu0 %4659, %v423
        %v4661 = vpop.permute.xlu0 %4660
        %4662 = vset.pattern.permute.xlu0 0
        %4663 = vperm.xlu0 %4662, %v424
        %v4664 = vpop.permute.xlu0 %4663
        %4665 = vset.pattern.permute.xlu0 0
        %4666 = vperm.xlu0 %4665, %v425
        %v4667 = vpop.permute.xlu0 %4666
        %4668 = vset.pattern.permute.xlu0 0
        %4669 = vperm.xlu0 %4668, %v426
        %v4670 = vpop.permute.xlu0 %4669
        %4671 = vset.pattern.permute.xlu0 0
        %4672 = vperm.xlu0 %4671, %v427
        %v4673 = vpop.permute.xlu0 %4672
        %4674 = vset.pattern.permute.xlu0 0
        %4675 = vperm.xlu0 %4674, %v428
        %v4676 = vpop.permute.xlu0 %4675
        %4677 = vset.pattern.permute.xlu0 0
        %4678 = vperm.xlu0 %4677, %v429
        %v4679 = vpop.permute.xlu0 %4678
        %4680 = vset.pattern.permute.xlu0 0
        %4681 = vperm.xlu0 %4680, %v430
        %v4682 = vpop.permute.xlu0 %4681
        %4683 = vset.pattern.permute.xlu0 0
        %4684 = vperm.xlu0 %4683, %v431
        %v4685 = vpop.permute.xlu0 %4684
        %4686 = vset.pattern.permute.xlu0 0
        %4687 = vperm.xlu0 %4686, %v432
        %v4688 = vpop.permute.xlu0 %4687
        %4689 = vset.pattern.permute.xlu0 0
        %4690 = vperm.xlu0 %4689, %v433
        %v4691 = vpop.permute.xlu0 %4690
        %4692 = vset.pattern.permute.xlu0 0
        %4693 = vperm.xlu0 %4692, %v434
        %v4694 = vpop.permute.xlu0 %4693
        %vm4695 = vcmp.eq.s32.totalorder %v4601, %v500
        %vm4696 = vcmp.eq.s32.totalorder %v4604, %v500
        %vm4697 = vcmp.eq.s32.totalorder %v4607, %v500
        %vm4698 = vcmp.eq.s32.totalorder %v4610, %v500
        %vm4699 = vcmp.eq.s32.totalorder %v4613, %v500
        %vm4700 = vcmp.eq.s32.totalorder %v4616, %v500
        %vm4701 = vcmp.eq.s32.totalorder %v4619, %v500
        %vm4702 = vcmp.eq.s32.totalorder %v4622, %v500
        %vm4703 = vcmp.eq.s32.totalorder %v4625, %v500
        %vm4704 = vcmp.eq.s32.totalorder %v4628, %v500
        %vm4705 = vcmp.eq.s32.totalorder %v4631, %v500
        %vm4706 = vcmp.eq.s32.totalorder %v4634, %v500
        %vm4707 = vcmp.eq.s32.totalorder %v4637, %v500
        %vm4708 = vcmp.eq.s32.totalorder %v4640, %v500
        %vm4709 = vcmp.eq.s32.totalorder %v4643, %v500
        %vm4710 = vcmp.eq.s32.totalorder %v4646, %v500
        %vm4711 = vcmp.eq.s32.totalorder %v4649, %v500
        %vm4712 = vcmp.eq.s32.totalorder %v4652, %v500
        %vm4713 = vcmp.eq.s32.totalorder %v4655, %v500
        %vm4714 = vcmp.eq.s32.totalorder %v4658, %v500
        %vm4715 = vcmp.eq.s32.totalorder %v4661, %v500
        %vm4716 = vcmp.eq.s32.totalorder %v4664, %v500
        %vm4717 = vcmp.eq.s32.totalorder %v4667, %v500
        %vm4718 = vcmp.eq.s32.totalorder %v4670, %v500
        %vm4719 = vcmp.eq.s32.totalorder %v4673, %v500
        %vm4720 = vcmp.eq.s32.totalorder %v4676, %v500
        %vm4721 = vcmp.eq.s32.totalorder %v4679, %v500
        %vm4722 = vcmp.eq.s32.totalorder %v4682, %v500
        %vm4723 = vcmp.eq.s32.totalorder %v4685, %v500
        %vm4724 = vcmp.eq.s32.totalorder %v4688, %v500
        %vm4725 = vcmp.eq.s32.totalorder %v4691, %v500
        %vm4726 = vcmp.eq.s32.totalorder %v4694, %v500
        %v4727 = vsel %vm4695, 1, 0
        %v4728 = vsel %vm4696, 1, 0
        %v4729 = vsel %vm4697, 1, 0
        %v4730 = vsel %vm4698, 1, 0
        %v4731 = vsel %vm4699, 1, 0
        %v4732 = vsel %vm4700, 1, 0
        %v4733 = vsel %vm4701, 1, 0
        %v4734 = vsel %vm4702, 1, 0
        %v4735 = vsel %vm4703, 1, 0
        %v4736 = vsel %vm4704, 1, 0
        %v4737 = vsel %vm4705, 1, 0
        %v4738 = vsel %vm4706, 1, 0
        %v4739 = vsel %vm4707, 1, 0
        %v4740 = vsel %vm4708, 1, 0
        %v4741 = vsel %vm4709, 1, 0
        %v4742 = vsel %vm4710, 1, 0
        %v4743 = vsel %vm4711, 1, 0
        %v4744 = vsel %vm4712, 1, 0
        %v4745 = vsel %vm4713, 1, 0
        %v4746 = vsel %vm4714, 1, 0
        %v4747 = vsel %vm4715, 1, 0
        %v4748 = vsel %vm4716, 1, 0
        %v4749 = vsel %vm4717, 1, 0
        %v4750 = vsel %vm4718, 1, 0
        %v4751 = vsel %vm4719, 1, 0
        %v4752 = vsel %vm4720, 1, 0
        %v4753 = vsel %vm4721, 1, 0
        %v4754 = vsel %vm4722, 1, 0
        %v4755 = vsel %vm4723, 1, 0
        %v4756 = vsel %vm4724, 1, 0
        %v4757 = vsel %vm4725, 1, 0
        %v4758 = vsel %vm4726, 1, 0
        %v4759 = vcvt.s32.f32 %v4727
        %v4760 = vcvt.s32.f32 %v4728
        %v4761 = vcvt.s32.f32 %v4729
        %v4762 = vcvt.s32.f32 %v4730
        %v4763 = vcvt.s32.f32 %v4731
        %v4764 = vcvt.s32.f32 %v4732
        %v4765 = vcvt.s32.f32 %v4733
        %v4766 = vcvt.s32.f32 %v4734
        %v4767 = vcvt.s32.f32 %v4735
        %v4768 = vcvt.s32.f32 %v4736
        %v4769 = vcvt.s32.f32 %v4737
        %v4770 = vcvt.s32.f32 %v4738
        %v4771 = vcvt.s32.f32 %v4739
        %v4772 = vcvt.s32.f32 %v4740
        %v4773 = vcvt.s32.f32 %v4741
        %v4774 = vcvt.s32.f32 %v4742
        %v4775 = vcvt.s32.f32 %v4743
        %v4776 = vcvt.s32.f32 %v4744
        %v4777 = vcvt.s32.f32 %v4745
        %v4778 = vcvt.s32.f32 %v4746
        %v4779 = vcvt.s32.f32 %v4747
        %v4780 = vcvt.s32.f32 %v4748
        %v4781 = vcvt.s32.f32 %v4749
        %v4782 = vcvt.s32.f32 %v4750
        %v4783 = vcvt.s32.f32 %v4751
        %v4784 = vcvt.s32.f32 %v4752
        %v4785 = vcvt.s32.f32 %v4753
        %v4786 = vcvt.s32.f32 %v4754
        %v4787 = vcvt.s32.f32 %v4755
        %v4788 = vcvt.s32.f32 %v4756
        %v4789 = vcvt.s32.f32 %v4757
        %v4790 = vcvt.s32.f32 %v4758
        %4791 = vset.pattern.permute.xlu0 0
        %4792 = vperm.xlu0 %4791, %v3765
        %v4793 = vpop.permute.xlu0 %4792
        %4794 = vset.pattern.permute.xlu0 0
        %4795 = vperm.xlu0 %4794, %v3766
        %v4796 = vpop.permute.xlu0 %4795
        %4797 = vset.pattern.permute.xlu0 0
        %4798 = vperm.xlu0 %4797, %v3767
        %v4799 = vpop.permute.xlu0 %4798
        %4800 = vset.pattern.permute.xlu0 0
        %4801 = vperm.xlu0 %4800, %v3768
        %v4802 = vpop.permute.xlu0 %4801
        %4803 = vset.pattern.permute.xlu0 0
        %4804 = vperm.xlu0 %4803, %v3769
        %v4805 = vpop.permute.xlu0 %4804
        %4806 = vset.pattern.permute.xlu0 0
        %4807 = vperm.xlu0 %4806, %v3770
        %v4808 = vpop.permute.xlu0 %4807
        %4809 = vset.pattern.permute.xlu0 0
        %4810 = vperm.xlu0 %4809, %v3771
        %v4811 = vpop.permute.xlu0 %4810
        %4812 = vset.pattern.permute.xlu0 0
        %4813 = vperm.xlu0 %4812, %v3772
        %v4814 = vpop.permute.xlu0 %4813
        %4815 = vset.pattern.permute.xlu0 0
        %4816 = vperm.xlu0 %4815, %v3773
        %v4817 = vpop.permute.xlu0 %4816
        %4818 = vset.pattern.permute.xlu0 0
        %4819 = vperm.xlu0 %4818, %v3774
        %v4820 = vpop.permute.xlu0 %4819
        %4821 = vset.pattern.permute.xlu0 0
        %4822 = vperm.xlu0 %4821, %v3775
        %v4823 = vpop.permute.xlu0 %4822
        %4824 = vset.pattern.permute.xlu0 0
        %4825 = vperm.xlu0 %4824, %v3776
        %v4826 = vpop.permute.xlu0 %4825
        %4827 = vset.pattern.permute.xlu0 0
        %4828 = vperm.xlu0 %4827, %v3777
        %v4829 = vpop.permute.xlu0 %4828
        %4830 = vset.pattern.permute.xlu0 0
        %4831 = vperm.xlu0 %4830, %v3778
        %v4832 = vpop.permute.xlu0 %4831
        %4833 = vset.pattern.permute.xlu0 0
        %4834 = vperm.xlu0 %4833, %v3779
        %v4835 = vpop.permute.xlu0 %4834
        %4836 = vset.pattern.permute.xlu0 0
        %4837 = vperm.xlu0 %4836, %v3780
        %v4838 = vpop.permute.xlu0 %4837
        %4839 = vset.pattern.permute.xlu0 0
        %4840 = vperm.xlu0 %4839, %v3781
        %v4841 = vpop.permute.xlu0 %4840
        %4842 = vset.pattern.permute.xlu0 0
        %4843 = vperm.xlu0 %4842, %v3782
        %v4844 = vpop.permute.xlu0 %4843
        %4845 = vset.pattern.permute.xlu0 0
        %4846 = vperm.xlu0 %4845, %v3783
        %v4847 = vpop.permute.xlu0 %4846
        %4848 = vset.pattern.permute.xlu0 0
        %4849 = vperm.xlu0 %4848, %v3784
        %v4850 = vpop.permute.xlu0 %4849
        %4851 = vset.pattern.permute.xlu0 0
        %4852 = vperm.xlu0 %4851, %v3785
        %v4853 = vpop.permute.xlu0 %4852
        %4854 = vset.pattern.permute.xlu0 0
        %4855 = vperm.xlu0 %4854, %v3786
        %v4856 = vpop.permute.xlu0 %4855
        %4857 = vset.pattern.permute.xlu0 0
        %4858 = vperm.xlu0 %4857, %v3787
        %v4859 = vpop.permute.xlu0 %4858
        %4860 = vset.pattern.permute.xlu0 0
        %4861 = vperm.xlu0 %4860, %v3788
        %v4862 = vpop.permute.xlu0 %4861
        %4863 = vset.pattern.permute.xlu0 0
        %4864 = vperm.xlu0 %4863, %v3789
        %v4865 = vpop.permute.xlu0 %4864
        %4866 = vset.pattern.permute.xlu0 0
        %4867 = vperm.xlu0 %4866, %v3790
        %v4868 = vpop.permute.xlu0 %4867
        %4869 = vset.pattern.permute.xlu0 0
        %4870 = vperm.xlu0 %4869, %v3791
        %v4871 = vpop.permute.xlu0 %4870
        %4872 = vset.pattern.permute.xlu0 0
        %4873 = vperm.xlu0 %4872, %v3792
        %v4874 = vpop.permute.xlu0 %4873
        %4875 = vset.pattern.permute.xlu0 0
        %4876 = vperm.xlu0 %4875, %v3793
        %v4877 = vpop.permute.xlu0 %4876
        %4878 = vset.pattern.permute.xlu0 0
        %4879 = vperm.xlu0 %4878, %v3794
        %v4880 = vpop.permute.xlu0 %4879
        %4881 = vset.pattern.permute.xlu0 0
        %4882 = vperm.xlu0 %4881, %v3795
        %v4883 = vpop.permute.xlu0 %4882
        %4884 = vset.pattern.permute.xlu0 0
        %4885 = vperm.xlu0 %4884, %v3796
        %v4886 = vpop.permute.xlu0 %4885
        %vm4887 = vcmp.eq.s32.totalorder %v4793, %v500
        %vm4888 = vcmp.eq.s32.totalorder %v4796, %v500
        %vm4889 = vcmp.eq.s32.totalorder %v4799, %v500
        %vm4890 = vcmp.eq.s32.totalorder %v4802, %v500
        %vm4891 = vcmp.eq.s32.totalorder %v4805, %v500
        %vm4892 = vcmp.eq.s32.totalorder %v4808, %v500
        %vm4893 = vcmp.eq.s32.totalorder %v4811, %v500
        %vm4894 = vcmp.eq.s32.totalorder %v4814, %v500
        %vm4895 = vcmp.eq.s32.totalorder %v4817, %v500
        %vm4896 = vcmp.eq.s32.totalorder %v4820, %v500
        %vm4897 = vcmp.eq.s32.totalorder %v4823, %v500
        %vm4898 = vcmp.eq.s32.totalorder %v4826, %v500
        %vm4899 = vcmp.eq.s32.totalorder %v4829, %v500
        %vm4900 = vcmp.eq.s32.totalorder %v4832, %v500
        %vm4901 = vcmp.eq.s32.totalorder %v4835, %v500
        %vm4902 = vcmp.eq.s32.totalorder %v4838, %v500
        %vm4903 = vcmp.eq.s32.totalorder %v4841, %v500
        %vm4904 = vcmp.eq.s32.totalorder %v4844, %v500
        %vm4905 = vcmp.eq.s32.totalorder %v4847, %v500
        %vm4906 = vcmp.eq.s32.totalorder %v4850, %v500
        %vm4907 = vcmp.eq.s32.totalorder %v4853, %v500
        %vm4908 = vcmp.eq.s32.totalorder %v4856, %v500
        %vm4909 = vcmp.eq.s32.totalorder %v4859, %v500
        %vm4910 = vcmp.eq.s32.totalorder %v4862, %v500
        %vm4911 = vcmp.eq.s32.totalorder %v4865, %v500
        %vm4912 = vcmp.eq.s32.totalorder %v4868, %v500
        %vm4913 = vcmp.eq.s32.totalorder %v4871, %v500
        %vm4914 = vcmp.eq.s32.totalorder %v4874, %v500
        %vm4915 = vcmp.eq.s32.totalorder %v4877, %v500
        %vm4916 = vcmp.eq.s32.totalorder %v4880, %v500
        %vm4917 = vcmp.eq.s32.totalorder %v4883, %v500
        %vm4918 = vcmp.eq.s32.totalorder %v4886, %v500
        %v4919 = vsel %vm4887, 1, 0
        %v4920 = vsel %vm4888, 1, 0
        %v4921 = vsel %vm4889, 1, 0
        %v4922 = vsel %vm4890, 1, 0
        %v4923 = vsel %vm4891, 1, 0
        %v4924 = vsel %vm4892, 1, 0
        %v4925 = vsel %vm4893, 1, 0
        %v4926 = vsel %vm4894, 1, 0
        %v4927 = vsel %vm4895, 1, 0
        %v4928 = vsel %vm4896, 1, 0
        %v4929 = vsel %vm4897, 1, 0
        %v4930 = vsel %vm4898, 1, 0
        %v4931 = vsel %vm4899, 1, 0
        %v4932 = vsel %vm4900, 1, 0
        %v4933 = vsel %vm4901, 1, 0
        %v4934 = vsel %vm4902, 1, 0
        %v4935 = vsel %vm4903, 1, 0
        %v4936 = vsel %vm4904, 1, 0
        %v4937 = vsel %vm4905, 1, 0
        %v4938 = vsel %vm4906, 1, 0
        %v4939 = vsel %vm4907, 1, 0
        %v4940 = vsel %vm4908, 1, 0
        %v4941 = vsel %vm4909, 1, 0
        %v4942 = vsel %vm4910, 1, 0
        %v4943 = vsel %vm4911, 1, 0
        %v4944 = vsel %vm4912, 1, 0
        %v4945 = vsel %vm4913, 1, 0
        %v4946 = vsel %vm4914, 1, 0
        %v4947 = vsel %vm4915, 1, 0
        %v4948 = vsel %vm4916, 1, 0
        %v4949 = vsel %vm4917, 1, 0
        %v4950 = vsel %vm4918, 1, 0
        %v4951 = vcvt.s32.f32 %v4919
        %v4952 = vcvt.s32.f32 %v4920
        %v4953 = vcvt.s32.f32 %v4921
        %v4954 = vcvt.s32.f32 %v4922
        %v4955 = vcvt.s32.f32 %v4923
        %v4956 = vcvt.s32.f32 %v4924
        %v4957 = vcvt.s32.f32 %v4925
        %v4958 = vcvt.s32.f32 %v4926
        %v4959 = vcvt.s32.f32 %v4927
        %v4960 = vcvt.s32.f32 %v4928
        %v4961 = vcvt.s32.f32 %v4929
        %v4962 = vcvt.s32.f32 %v4930
        %v4963 = vcvt.s32.f32 %v4931
        %v4964 = vcvt.s32.f32 %v4932
        %v4965 = vcvt.s32.f32 %v4933
        %v4966 = vcvt.s32.f32 %v4934
        %v4967 = vcvt.s32.f32 %v4935
        %v4968 = vcvt.s32.f32 %v4936
        %v4969 = vcvt.s32.f32 %v4937
        %v4970 = vcvt.s32.f32 %v4938
        %v4971 = vcvt.s32.f32 %v4939
        %v4972 = vcvt.s32.f32 %v4940
        %v4973 = vcvt.s32.f32 %v4941
        %v4974 = vcvt.s32.f32 %v4942
        %v4975 = vcvt.s32.f32 %v4943
        %v4976 = vcvt.s32.f32 %v4944
        %v4977 = vcvt.s32.f32 %v4945
        %v4978 = vcvt.s32.f32 %v4946
        %v4979 = vcvt.s32.f32 %v4947
        %v4980 = vcvt.s32.f32 %v4948
        %v4981 = vcvt.s32.f32 %v4949
        %v4982 = vcvt.s32.f32 %v4950
        %4984 = vset.pattern.permute.xlu0 0
        %4985 = vperm.xlu0 %4984, %v3861
        %v4986 = vpop.permute.xlu0 %4985
        %4989 = vset.pattern.permute.xlu0 0
        %4990 = vperm.xlu0 %4989, %v3862
        %v4991 = vpop.permute.xlu0 %4990
        %4994 = vset.pattern.permute.xlu0 0
        %4995 = vperm.xlu0 %4994, %v3863
        %v4996 = vpop.permute.xlu0 %4995
        %4999 = vset.pattern.permute.xlu0 0
        %5000 = vperm.xlu0 %4999, %v3864
        %v5001 = vpop.permute.xlu0 %5000
        %5004 = vset.pattern.permute.xlu0 0
        %5005 = vperm.xlu0 %5004, %v3865
        %v5006 = vpop.permute.xlu0 %5005
        %5009 = vset.pattern.permute.xlu0 0
        %5010 = vperm.xlu0 %5009, %v3866
        %v5011 = vpop.permute.xlu0 %5010
        %5014 = vset.pattern.permute.xlu0 0
        %5015 = vperm.xlu0 %5014, %v3867
        %v5016 = vpop.permute.xlu0 %5015
        %5019 = vset.pattern.permute.xlu0 0
        %5020 = vperm.xlu0 %5019, %v3868
        %v5021 = vpop.permute.xlu0 %5020
        %5024 = vset.pattern.permute.xlu0 0
        %5025 = vperm.xlu0 %5024, %v3869
        %v5026 = vpop.permute.xlu0 %5025
        %5029 = vset.pattern.permute.xlu0 0
        %5030 = vperm.xlu0 %5029, %v3870
        %v5031 = vpop.permute.xlu0 %5030
        %5034 = vset.pattern.permute.xlu0 0
        %5035 = vperm.xlu0 %5034, %v3871
        %v5036 = vpop.permute.xlu0 %5035
        %5039 = vset.pattern.permute.xlu0 0
        %5040 = vperm.xlu0 %5039, %v3872
        %v5041 = vpop.permute.xlu0 %5040
        %5044 = vset.pattern.permute.xlu0 0
        %5045 = vperm.xlu0 %5044, %v3873
        %v5046 = vpop.permute.xlu0 %5045
        %5049 = vset.pattern.permute.xlu0 0
        %5050 = vperm.xlu0 %5049, %v3874
        %v5051 = vpop.permute.xlu0 %5050
        %5054 = vset.pattern.permute.xlu0 0
        %5055 = vperm.xlu0 %5054, %v3875
        %v5056 = vpop.permute.xlu0 %5055
        %5059 = vset.pattern.permute.xlu0 0
        %5060 = vperm.xlu0 %5059, %v3876
        %v5061 = vpop.permute.xlu0 %5060
        %5064 = vset.pattern.permute.xlu0 0
        %5065 = vperm.xlu0 %5064, %v3877
        %v5066 = vpop.permute.xlu0 %5065
        %5069 = vset.pattern.permute.xlu0 0
        %5070 = vperm.xlu0 %5069, %v3878
        %v5071 = vpop.permute.xlu0 %5070
        %5074 = vset.pattern.permute.xlu0 0
        %5075 = vperm.xlu0 %5074, %v3879
        %v5076 = vpop.permute.xlu0 %5075
        %5079 = vset.pattern.permute.xlu0 0
        %5080 = vperm.xlu0 %5079, %v3880
        %v5081 = vpop.permute.xlu0 %5080
        %5084 = vset.pattern.permute.xlu0 0
        %5085 = vperm.xlu0 %5084, %v3881
        %v5086 = vpop.permute.xlu0 %5085
        %5089 = vset.pattern.permute.xlu0 0
        %5090 = vperm.xlu0 %5089, %v3882
        %v5091 = vpop.permute.xlu0 %5090
        %5094 = vset.pattern.permute.xlu0 0
        %5095 = vperm.xlu0 %5094, %v3883
        %v5096 = vpop.permute.xlu0 %5095
        %5099 = vset.pattern.permute.xlu0 0
        %5100 = vperm.xlu0 %5099, %v3884
        %v5101 = vpop.permute.xlu0 %5100
        %5104 = vset.pattern.permute.xlu0 0
        %5105 = vperm.xlu0 %5104, %v3885
        %v5106 = vpop.permute.xlu0 %5105
        %5109 = vset.pattern.permute.xlu0 0
        %5110 = vperm.xlu0 %5109, %v3886
        %v5111 = vpop.permute.xlu0 %5110
        %5114 = vset.pattern.permute.xlu0 0
        %5115 = vperm.xlu0 %5114, %v3887
        %v5116 = vpop.permute.xlu0 %5115
        %5119 = vset.pattern.permute.xlu0 0
        %5120 = vperm.xlu0 %5119, %v3888
        %v5121 = vpop.permute.xlu0 %5120
        %5124 = vset.pattern.permute.xlu0 0
        %5125 = vperm.xlu0 %5124, %v3889
        %v5126 = vpop.permute.xlu0 %5125
        %5129 = vset.pattern.permute.xlu0 0
        %5130 = vperm.xlu0 %5129, %v3890
        %v5131 = vpop.permute.xlu0 %5130
        %5134 = vset.pattern.permute.xlu0 0
        %5135 = vperm.xlu0 %5134, %v3891
        %v5136 = vpop.permute.xlu0 %5135
        %5139 = vset.pattern.permute.xlu0 0
        %5140 = vperm.xlu0 %5139, %v3892
        %v5141 = vpop.permute.xlu0 %5140
        %v5143 = vmul.f32 %v4986, %v4951
        %v5144 = vmul.f32 %v4991, %v4952
        %v5145 = vmul.f32 %v4996, %v4953
        %v5146 = vmul.f32 %v5001, %v4954
        %v5147 = vmul.f32 %v5006, %v4955
        %v5148 = vmul.f32 %v5011, %v4956
        %v5149 = vmul.f32 %v5016, %v4957
        %v5150 = vmul.f32 %v5021, %v4958
        %v5151 = vmul.f32 %v5026, %v4959
        %v5152 = vmul.f32 %v5031, %v4960
        %v5153 = vmul.f32 %v5036, %v4961
        %v5154 = vmul.f32 %v5041, %v4962
        %v5155 = vmul.f32 %v5046, %v4963
        %v5156 = vmul.f32 %v5051, %v4964
        %v5157 = vmul.f32 %v5056, %v4965
        %v5158 = vmul.f32 %v5061, %v4966
        %v5159 = vmul.f32 %v5066, %v4967
        %v5160 = vmul.f32 %v5071, %v4968
        %v5161 = vmul.f32 %v5076, %v4969
        %v5162 = vmul.f32 %v5081, %v4970
        %v5163 = vmul.f32 %v5086, %v4971
        %v5164 = vmul.f32 %v5091, %v4972
        %v5165 = vmul.f32 %v5096, %v4973
        %v5166 = vmul.f32 %v5101, %v4974
        %v5167 = vmul.f32 %v5106, %v4975
        %v5168 = vmul.f32 %v5111, %v4976
        %v5169 = vmul.f32 %v5116, %v4977
        %v5170 = vmul.f32 %v5121, %v4978
        %v5171 = vmul.f32 %v5126, %v4979
        %v5172 = vmul.f32 %v5131, %v4980
        %v5173 = vmul.f32 %v5136, %v4981
        %v5174 = vmul.f32 %v5141, %v4982
        %v5175 = vsub.f32 %v4759, %v5143
        %v5176 = vsub.f32 %v4760, %v5144
        %v5177 = vsub.f32 %v4761, %v5145
        %v5178 = vsub.f32 %v4762, %v5146
        %v5179 = vsub.f32 %v4763, %v5147
        %v5180 = vsub.f32 %v4764, %v5148
        %v5181 = vsub.f32 %v4765, %v5149
        %v5182 = vsub.f32 %v4766, %v5150
        %v5183 = vsub.f32 %v4767, %v5151
        %v5184 = vsub.f32 %v4768, %v5152
        %v5185 = vsub.f32 %v4769, %v5153
        %v5186 = vsub.f32 %v4770, %v5154
        %v5187 = vsub.f32 %v4771, %v5155
        %v5188 = vsub.f32 %v4772, %v5156
        %v5189 = vsub.f32 %v4773, %v5157
        %v5190 = vsub.f32 %v4774, %v5158
        %v5191 = vsub.f32 %v4775, %v5159
        %v5192 = vsub.f32 %v4776, %v5160
        %v5193 = vsub.f32 %v4777, %v5161
        %v5194 = vsub.f32 %v4778, %v5162
        %v5195 = vsub.f32 %v4779, %v5163
        %v5196 = vsub.f32 %v4780, %v5164
        %v5197 = vsub.f32 %v4781, %v5165
        %v5198 = vsub.f32 %v4782, %v5166
        %v5199 = vsub.f32 %v4783, %v5167
        %v5200 = vsub.f32 %v4784, %v5168
        %v5201 = vsub.f32 %v4785, %v5169
        %v5202 = vsub.f32 %v4786, %v5170
        %v5203 = vsub.f32 %v4787, %v5171
        %v5204 = vsub.f32 %v4788, %v5172
        %v5205 = vsub.f32 %v4789, %v5173
        %v5206 = vsub.f32 %v4790, %v5174
        %v5207 = vld [vmem:[#allocation2] sm:$0xff]
        %v5208 = vld [vmem:[#allocation2 + $0x8] sm:$0xff]
        %v5209 = vld [vmem:[#allocation2 + $0x10] sm:$0xff]
        %v5210 = vld [vmem:[#allocation2 + $0x18] sm:$0xff]
        %v5211 = vld [vmem:[#allocation2 + $0x20] sm:$0xff]
        %v5212 = vld [vmem:[#allocation2 + $0x28] sm:$0xff]
        %v5213 = vld [vmem:[#allocation2 + $0x30] sm:$0xff]
        %v5214 = vld [vmem:[#allocation2 + $0x38] sm:$0xff]
        %v5215 = vld [vmem:[#allocation2 + $0x40] sm:$0xff]
        %v5216 = vld [vmem:[#allocation2 + $0x48] sm:$0xff]
        %v5217 = vld [vmem:[#allocation2 + $0x50] sm:$0xff]
        %v5218 = vld [vmem:[#allocation2 + $0x58] sm:$0xff]
        %v5219 = vld [vmem:[#allocation2 + $0x60] sm:$0xff]
        %v5220 = vld [vmem:[#allocation2 + $0x68] sm:$0xff]
        %v5221 = vld [vmem:[#allocation2 + $0x70] sm:$0xff]
        %v5222 = vld [vmem:[#allocation2 + $0x78] sm:$0xff]
        %5223 = vmatprep.subr.mxu0 0.0
        %5224 = vmatpush1.msra.mxu0 %v5207
        %5225 = vmatprep.subr.mxu0 0.0
        %5226 = vmatpush1.msra.mxu0 %v5208
        %5227 = vmatprep.subr.mxu0 0.0
        %5228 = vmatpush1.msra.mxu0 %v5209
        %5229 = vmatprep.subr.mxu0 0.0
        %5230 = vmatpush1.msra.mxu0 %v5210
        %5231 = vmatprep.subr.mxu0 0.0
        %5232 = vmatpush1.msra.mxu0 %v5211
        %5233 = vmatprep.subr.mxu0 0.0
        %5234 = vmatpush1.msra.mxu0 %v5212
        %5235 = vmatprep.subr.mxu0 0.0
        %5236 = vmatpush1.msra.mxu0 %v5213
        %5237 = vmatprep.subr.mxu0 0.0
        %5238 = vmatpush1.msra.mxu0 %v5214
        %5239 = vmatprep.subr.mxu0 0.0
        %5240 = vmatpush1.msra.mxu0 %v5215
        %5241 = vmatprep.subr.mxu0 0.0
        %5242 = vmatpush1.msra.mxu0 %v5216
        %5243 = vmatprep.subr.mxu0 0.0
        %5244 = vmatpush1.msra.mxu0 %v5217
        %5245 = vmatprep.subr.mxu0 0.0
        %5246 = vmatpush1.msra.mxu0 %v5218
        %5247 = vmatprep.subr.mxu0 0.0
        %5248 = vmatpush1.msra.mxu0 %v5219
        %5249 = vmatprep.subr.mxu0 0.0
        %5250 = vmatpush1.msra.mxu0 %v5220
        %5251 = vmatprep.subr.mxu0 0.0
        %5252 = vmatpush1.msra.mxu0 %v5221
        %5253 = vmatprep.subr.mxu0 0.0
        %5254 = vmatpush1.msra.mxu0 %v5222
        %5255 = vmatprep.subr.mxu0 0.0
        %5256 = vmatpush1.msra.mxu0 0.0
        %5257 = vmatprep.subr.mxu0 0.0
        %5258 = vmatpush1.msra.mxu0 0.0
        %5259 = vmatprep.subr.mxu0 0.0
        %5260 = vmatpush1.msra.mxu0 0.0
        %5261 = vmatprep.subr.mxu0 0.0
        %5262 = vmatpush1.msra.mxu0 0.0
        %5263 = vmatprep.subr.mxu0 0.0
        %5264 = vmatpush1.msra.mxu0 0.0
        %5265 = vmatprep.subr.mxu0 0.0
        %5266 = vmatpush1.msra.mxu0 0.0
        %5267 = vmatprep.subr.mxu0 0.0
        %5268 = vmatpush1.msra.mxu0 0.0
        %5269 = vmatprep.subr.mxu0 0.0
        %5270 = vmatpush1.msra.mxu0 0.0
        %5271 = vmatprep.subr.mxu0 0.0
        %5272 = vmatpush1.msra.mxu0 0.0
        %5273 = vmatprep.subr.mxu0 0.0
        %5274 = vmatpush1.msra.mxu0 0.0
        %5275 = vmatprep.subr.mxu0 0.0
        %5276 = vmatpush1.msra.mxu0 0.0
        %5277 = vmatprep.subr.mxu0 0.0
        %5278 = vmatpush1.msra.mxu0 0.0
        %5279 = vmatprep.subr.mxu0 0.0
        %5280 = vmatpush1.msra.mxu0 0.0
        %5281 = vmatprep.subr.mxu0 0.0
        %5282 = vmatpush1.msra.mxu0 0.0
        %5283 = vmatprep.subr.mxu0 0.0
        %5284 = vmatpush1.msra.mxu0 0.0
        %5285 = vmatprep.subr.mxu0 0.0
        %5286 = vmatpush1.msra.mxu0 0.0
        %5287 = vmatprep.mubr.f32.mxu0 0.0
        %5288 = vmatmul.mubr.f32.gmra.mrb[0].mxu0 %v5175
        %v5289 = vpop.f32.mrb[0].mxu0
        %v5290 = vadd.f32 0.0, %v5289
        %v5291 = vpop.f32.mrb[0].mxu0
        %5292 = vmatprep.mubr.f32.mxu0 0.0
        %5293 = vmatmul.mubr.f32.gmra.mrb[0].mxu0 %v5176
        %v5294 = vpop.f32.mrb[0].mxu0
        %v5295 = vadd.f32 0.0, %v5294
        %v5296 = vpop.f32.mrb[0].mxu0
        %5297 = vmatprep.mubr.f32.mxu0 0.0
        %5298 = vmatmul.mubr.f32.gmra.mrb[0].mxu0 %v5177
        %v5299 = vpop.f32.mrb[0].mxu0
        %v5300 = vadd.f32 0.0, %v5299
        %v5301 = vpop.f32.mrb[0].mxu0
        %5302 = vmatprep.mubr.f32.mxu0 0.0
        %5303 = vmatmul.mubr.f32.gmra.mrb[0].mxu0 %v5178
        %v5304 = vpop.f32.mrb[0].mxu0
        %v5305 = vadd.f32 0.0, %v5304
        %v5306 = vpop.f32.mrb[0].mxu0
        %5307 = vmatprep.mubr.f32.mxu0 0.0
        %5308 = vmatmul.mubr.f32.gmra.mrb[0].mxu0 %v5179
        %v5309 = vpop.f32.mrb[0].mxu0
        %v5310 = vadd.f32 0.0, %v5309
        %v5311 = vpop.f32.mrb[0].mxu0
        %5312 = vmatprep.mubr.f32.mxu0 0.0
        %5313 = vmatmul.mubr.f32.gmra.mrb[0].mxu0 %v5180
        %v5314 = vpop.f32.mrb[0].mxu0
        %v5315 = vadd.f32 0.0, %v5314
        %v5316 = vpop.f32.mrb[0].mxu0
        %5317 = vmatprep.mubr.f32.mxu0 0.0
        %5318 = vmatmul.mubr.f32.gmra.mrb[0].mxu0 %v5181
        %v5319 = vpop.f32.mrb[0].mxu0
        %v5320 = vadd.f32 0.0, %v5319
        %v5321 = vpop.f32.mrb[0].mxu0
        %5322 = vmatprep.mubr.f32.mxu0 0.0
        %5323 = vmatmul.mubr.f32.gmra.mrb[0].mxu0 %v5182
        %v5324 = vpop.f32.mrb[0].mxu0
        %v5325 = vadd.f32 0.0, %v5324
        %v5326 = vpop.f32.mrb[0].mxu0
        %5327 = vmatprep.mubr.f32.mxu0 0.0
        %5328 = vmatmul.mubr.f32.gmra.mrb[0].mxu0 %v5183
        %v5329 = vpop.f32.mrb[0].mxu0
        %v5330 = vadd.f32 0.0, %v5329
        %v5331 = vpop.f32.mrb[0].mxu0
        %5332 = vmatprep.mubr.f32.mxu0 0.0
        %5333 = vmatmul.mubr.f32.gmra.mrb[0].mxu0 %v5184
        %v5334 = vpop.f32.mrb[0].mxu0
        %v5335 = vadd.f32 0.0, %v5334
        %v5336 = vpop.f32.mrb[0].mxu0
        %5337 = vmatprep.mubr.f32.mxu0 0.0
        %5338 = vmatmul.mubr.f32.gmra.mrb[0].mxu0 %v5185
        %v5339 = vpop.f32.mrb[0].mxu0
        %v5340 = vadd.f32 0.0, %v5339
        %v5341 = vpop.f32.mrb[0].mxu0
        %5342 = vmatprep.mubr.f32.mxu0 0.0
        %5343 = vmatmul.mubr.f32.gmra.mrb[0].mxu0 %v5186
        %v5344 = vpop.f32.mrb[0].mxu0
        %v5345 = vadd.f32 0.0, %v5344
        %v5346 = vpop.f32.mrb[0].mxu0
        %5347 = vmatprep.mubr.f32.mxu0 0.0
        %5348 = vmatmul.mubr.f32.gmra.mrb[0].mxu0 %v5187
        %v5349 = vpop.f32.mrb[0].mxu0
        %v5350 = vadd.f32 0.0, %v5349
        %v5351 = vpop.f32.mrb[0].mxu0
        %5352 = vmatprep.mubr.f32.mxu0 0.0
        %5353 = vmatmul.mubr.f32.gmra.mrb[0].mxu0 %v5188
        %v5354 = vpop.f32.mrb[0].mxu0
        %v5355 = vadd.f32 0.0, %v5354
        %v5356 = vpop.f32.mrb[0].mxu0
        %5357 = vmatprep.mubr.f32.mxu0 0.0
        %5358 = vmatmul.mubr.f32.gmra.mrb[0].mxu0 %v5189
        %v5359 = vpop.f32.mrb[0].mxu0
        %v5360 = vadd.f32 0.0, %v5359
        %v5361 = vpop.f32.mrb[0].mxu0
        %5362 = vmatprep.mubr.f32.mxu0 0.0
        %5363 = vmatmul.mubr.f32.gmra.mrb[0].mxu0 %v5190
        %v5364 = vpop.f32.mrb[0].mxu0
        %v5365 = vadd.f32 0.0, %v5364
        %v5366 = vpop.f32.mrb[0].mxu0
        %5367 = vmatprep.mubr.f32.mxu0 0.0
        %5368 = vmatmul.mubr.f32.gmra.mrb[0].mxu0 %v5191
        %v5369 = vpop.f32.mrb[0].mxu0
        %v5370 = vadd.f32 0.0, %v5369
        %v5371 = vpop.f32.mrb[0].mxu0
        %5372 = vmatprep.mubr.f32.mxu0 0.0
        %5373 = vmatmul.mubr.f32.gmra.mrb[0].mxu0 %v5192
        %v5374 = vpop.f32.mrb[0].mxu0
        %v5375 = vadd.f32 0.0, %v5374
        %v5376 = vpop.f32.mrb[0].mxu0
        %5377 = vmatprep.mubr.f32.mxu0 0.0
        %5378 = vmatmul.mubr.f32.gmra.mrb[0].mxu0 %v5193
        %v5379 = vpop.f32.mrb[0].mxu0
        %v5380 = vadd.f32 0.0, %v5379
        %v5381 = vpop.f32.mrb[0].mxu0
        %5382 = vmatprep.mubr.f32.mxu0 0.0
        %5383 = vmatmul.mubr.f32.gmra.mrb[0].mxu0 %v5194
        %v5384 = vpop.f32.mrb[0].mxu0
        %v5385 = vadd.f32 0.0, %v5384
        %v5386 = vpop.f32.mrb[0].mxu0
        %5387 = vmatprep.mubr.f32.mxu0 0.0
        %5388 = vmatmul.mubr.f32.gmra.mrb[0].mxu0 %v5195
        %v5389 = vpop.f32.mrb[0].mxu0
        %v5390 = vadd.f32 0.0, %v5389
        %v5391 = vpop.f32.mrb[0].mxu0
        %5392 = vmatprep.mubr.f32.mxu0 0.0
        %5393 = vmatmul.mubr.f32.gmra.mrb[0].mxu0 %v5196
        %v5394 = vpop.f32.mrb[0].mxu0
        %v5395 = vadd.f32 0.0, %v5394
        %v5396 = vpop.f32.mrb[0].mxu0
        %5397 = vmatprep.mubr.f32.mxu0 0.0
        %5398 = vmatmul.mubr.f32.gmra.mrb[0].mxu0 %v5197
        %v5399 = vpop.f32.mrb[0].mxu0
        %v5400 = vadd.f32 0.0, %v5399
        %v5401 = vpop.f32.mrb[0].mxu0
        %5402 = vmatprep.mubr.f32.mxu0 0.0
        %5403 = vmatmul.mubr.f32.gmra.mrb[0].mxu0 %v5198
        %v5404 = vpop.f32.mrb[0].mxu0
        %v5405 = vadd.f32 0.0, %v5404
        %v5406 = vpop.f32.mrb[0].mxu0
        %5407 = vmatprep.mubr.f32.mxu0 0.0
        %5408 = vmatmul.mubr.f32.gmra.mrb[0].mxu0 %v5199
        %v5409 = vpop.f32.mrb[0].mxu0
        %v5410 = vadd.f32 0.0, %v5409
        %v5411 = vpop.f32.mrb[0].mxu0
        %5412 = vmatprep.mubr.f32.mxu0 0.0
        %5413 = vmatmul.mubr.f32.gmra.mrb[0].mxu0 %v5200
        %v5414 = vpop.f32.mrb[0].mxu0
        %v5415 = vadd.f32 0.0, %v5414
        %v5416 = vpop.f32.mrb[0].mxu0
        %5417 = vmatprep.mubr.f32.mxu0 0.0
        %5418 = vmatmul.mubr.f32.gmra.mrb[0].mxu0 %v5201
        %v5419 = vpop.f32.mrb[0].mxu0
        %v5420 = vadd.f32 0.0, %v5419
        %v5421 = vpop.f32.mrb[0].mxu0
        %5422 = vmatprep.mubr.f32.mxu0 0.0
        %5423 = vmatmul.mubr.f32.gmra.mrb[0].mxu0 %v5202
        %v5424 = vpop.f32.mrb[0].mxu0
        %v5425 = vadd.f32 0.0, %v5424
        %v5426 = vpop.f32.mrb[0].mxu0
        %5427 = vmatprep.mubr.f32.mxu0 0.0
        %5428 = vmatmul.mubr.f32.gmra.mrb[0].mxu0 %v5203
        %v5429 = vpop.f32.mrb[0].mxu0
        %v5430 = vadd.f32 0.0, %v5429
        %v5431 = vpop.f32.mrb[0].mxu0
        %5432 = vmatprep.mubr.f32.mxu0 0.0
        %5433 = vmatmul.mubr.f32.gmra.mrb[0].mxu0 %v5204
        %v5434 = vpop.f32.mrb[0].mxu0
        %v5435 = vadd.f32 0.0, %v5434
        %v5436 = vpop.f32.mrb[0].mxu0
        %5437 = vmatprep.mubr.f32.mxu0 0.0
        %5438 = vmatmul.mubr.f32.gmra.mrb[0].mxu0 %v5205
        %v5439 = vpop.f32.mrb[0].mxu0
        %v5440 = vadd.f32 0.0, %v5439
        %v5441 = vpop.f32.mrb[0].mxu0
        %5442 = vmatprep.mubr.f32.mxu0 0.0
        %5443 = vmatmul.mubr.f32.gmra.mrb[0].mxu0 %v5206
        %v5444 = vpop.f32.mrb[0].mxu0
        %v5445 = vadd.f32 0.0, %v5444
        %v5446 = vpop.f32.mrb[0].mxu0
        %5447 = vdwg.mxu0
        %v5448 = vsub.f32 %v4567, %v5290
        %v5449 = vsub.f32 %v4568, %v5295
        %v5450 = vsub.f32 %v4569, %v5300
        %v5451 = vsub.f32 %v4570, %v5305
        %v5452 = vsub.f32 %v4571, %v5310
        %v5453 = vsub.f32 %v4572, %v5315
        %v5454 = vsub.f32 %v4573, %v5320
        %v5455 = vsub.f32 %v4574, %v5325
        %v5456 = vsub.f32 %v4575, %v5330
        %v5457 = vsub.f32 %v4576, %v5335
        %v5458 = vsub.f32 %v4577, %v5340
        %v5459 = vsub.f32 %v4578, %v5345
        %v5460 = vsub.f32 %v4579, %v5350
        %v5461 = vsub.f32 %v4580, %v5355
        %v5462 = vsub.f32 %v4581, %v5360
        %v5463 = vsub.f32 %v4582, %v5365
        %v5464 = vsub.f32 %v4583, %v5370
        %v5465 = vsub.f32 %v4584, %v5375
        %v5466 = vsub.f32 %v4585, %v5380
        %v5467 = vsub.f32 %v4586, %v5385
        %v5468 = vsub.f32 %v4587, %v5390
        %v5469 = vsub.f32 %v4588, %v5395
        %v5470 = vsub.f32 %v4589, %v5400
        %v5471 = vsub.f32 %v4590, %v5405
        %v5472 = vsub.f32 %v4591, %v5410
        %v5473 = vsub.f32 %v4592, %v5415
        %v5474 = vsub.f32 %v4593, %v5420
        %v5475 = vsub.f32 %v4594, %v5425
        %v5476 = vsub.f32 %v4595, %v5430
        %v5477 = vsub.f32 %v4596, %v5435
        %v5478 = vsub.f32 %v4597, %v5440
        %v5479 = vsub.f32 %v4598, %v5445
        %v5480 = vrcp.pop %v435
        %v5481 = vrcp.pop %v436
        %v5482 = vrcp.pop %v437
        %v5483 = vrcp.pop %v438
        %v5484 = vrcp.pop %v439
        %v5485 = vrcp.pop %v440
        %v5486 = vrcp.pop %v441
        %v5487 = vrcp.pop %v442
        %v5488 = vrcp.pop %v443
        %v5489 = vrcp.pop %v444
        %v5490 = vrcp.pop %v445
        %v5491 = vrcp.pop %v446
        %v5492 = vrcp.pop %v447
        %v5493 = vrcp.pop %v448
        %v5494 = vrcp.pop %v449
        %v5495 = vrcp.pop %v450
        %v5496 = vrcp.pop %v451
        %v5497 = vrcp.pop %v452
        %v5498 = vrcp.pop %v453
        %v5499 = vrcp.pop %v454
        %v5500 = vrcp.pop %v455
        %v5501 = vrcp.pop %v456
        %v5502 = vrcp.pop %v457
        %v5503 = vrcp.pop %v458
        %v5504 = vrcp.pop %v459
        %v5505 = vrcp.pop %v460
        %v5506 = vrcp.pop %v461
        %v5507 = vrcp.pop %v462
        %v5508 = vrcp.pop %v463
        %v5509 = vrcp.pop %v464
        %v5510 = vrcp.pop %v465
        %v5511 = vrcp.pop %v466
        %5513 = vset.pattern.permute.xlu0 0
        %5514 = vperm.xlu0 %5513, %v5480
        %v5515 = vpop.permute.xlu0 %5514
        %5518 = vset.pattern.permute.xlu0 0
        %5519 = vperm.xlu0 %5518, %v5481
        %v5520 = vpop.permute.xlu0 %5519
        %5523 = vset.pattern.permute.xlu0 0
        %5524 = vperm.xlu0 %5523, %v5482
        %v5525 = vpop.permute.xlu0 %5524
        %5528 = vset.pattern.permute.xlu0 0
        %5529 = vperm.xlu0 %5528, %v5483
        %v5530 = vpop.permute.xlu0 %5529
        %5533 = vset.pattern.permute.xlu0 0
        %5534 = vperm.xlu0 %5533, %v5484
        %v5535 = vpop.permute.xlu0 %5534
        %5538 = vset.pattern.permute.xlu0 0
        %5539 = vperm.xlu0 %5538, %v5485
        %v5540 = vpop.permute.xlu0 %5539
        %5543 = vset.pattern.permute.xlu0 0
        %5544 = vperm.xlu0 %5543, %v5486
        %v5545 = vpop.permute.xlu0 %5544
        %5548 = vset.pattern.permute.xlu0 0
        %5549 = vperm.xlu0 %5548, %v5487
        %v5550 = vpop.permute.xlu0 %5549
        %5553 = vset.pattern.permute.xlu0 0
        %5554 = vperm.xlu0 %5553, %v5488
        %v5555 = vpop.permute.xlu0 %5554
        %5558 = vset.pattern.permute.xlu0 0
        %5559 = vperm.xlu0 %5558, %v5489
        %v5560 = vpop.permute.xlu0 %5559
        %5563 = vset.pattern.permute.xlu0 0
        %5564 = vperm.xlu0 %5563, %v5490
        %v5565 = vpop.permute.xlu0 %5564
        %5568 = vset.pattern.permute.xlu0 0
        %5569 = vperm.xlu0 %5568, %v5491
        %v5570 = vpop.permute.xlu0 %5569
        %5573 = vset.pattern.permute.xlu0 0
        %5574 = vperm.xlu0 %5573, %v5492
        %v5575 = vpop.permute.xlu0 %5574
        %5578 = vset.pattern.permute.xlu0 0
        %5579 = vperm.xlu0 %5578, %v5493
        %v5580 = vpop.permute.xlu0 %5579
        %5583 = vset.pattern.permute.xlu0 0
        %5584 = vperm.xlu0 %5583, %v5494
        %v5585 = vpop.permute.xlu0 %5584
        %5588 = vset.pattern.permute.xlu0 0
        %5589 = vperm.xlu0 %5588, %v5495
        %v5590 = vpop.permute.xlu0 %5589
        %5593 = vset.pattern.permute.xlu0 0
        %5594 = vperm.xlu0 %5593, %v5496
        %v5595 = vpop.permute.xlu0 %5594
        %5598 = vset.pattern.permute.xlu0 0
        %5599 = vperm.xlu0 %5598, %v5497
        %v5600 = vpop.permute.xlu0 %5599
        %5603 = vset.pattern.permute.xlu0 0
        %5604 = vperm.xlu0 %5603, %v5498
        %v5605 = vpop.permute.xlu0 %5604
        %5608 = vset.pattern.permute.xlu0 0
        %5609 = vperm.xlu0 %5608, %v5499
        %v5610 = vpop.permute.xlu0 %5609
        %5613 = vset.pattern.permute.xlu0 0
        %5614 = vperm.xlu0 %5613, %v5500
        %v5615 = vpop.permute.xlu0 %5614
        %5618 = vset.pattern.permute.xlu0 0
        %5619 = vperm.xlu0 %5618, %v5501
        %v5620 = vpop.permute.xlu0 %5619
        %5623 = vset.pattern.permute.xlu0 0
        %5624 = vperm.xlu0 %5623, %v5502
        %v5625 = vpop.permute.xlu0 %5624
        %5628 = vset.pattern.permute.xlu0 0
        %5629 = vperm.xlu0 %5628, %v5503
        %v5630 = vpop.permute.xlu0 %5629
        %5633 = vset.pattern.permute.xlu0 0
        %5634 = vperm.xlu0 %5633, %v5504
        %v5635 = vpop.permute.xlu0 %5634
        %5638 = vset.pattern.permute.xlu0 0
        %5639 = vperm.xlu0 %5638, %v5505
        %v5640 = vpop.permute.xlu0 %5639
        %5643 = vset.pattern.permute.xlu0 0
        %5644 = vperm.xlu0 %5643, %v5506
        %v5645 = vpop.permute.xlu0 %5644
        %5648 = vset.pattern.permute.xlu0 0
        %5649 = vperm.xlu0 %5648, %v5507
        %v5650 = vpop.permute.xlu0 %5649
        %5653 = vset.pattern.permute.xlu0 0
        %5654 = vperm.xlu0 %5653, %v5508
        %v5655 = vpop.permute.xlu0 %5654
        %5658 = vset.pattern.permute.xlu0 0
        %5659 = vperm.xlu0 %5658, %v5509
        %v5660 = vpop.permute.xlu0 %5659
        %5663 = vset.pattern.permute.xlu0 0
        %5664 = vperm.xlu0 %5663, %v5510
        %v5665 = vpop.permute.xlu0 %5664
        %5668 = vset.pattern.permute.xlu0 0
        %5669 = vperm.xlu0 %5668, %v5511
        %v5670 = vpop.permute.xlu0 %5669
        %v5672 = vmul.f32 %v5448, %v5515
        %v5673 = vmul.f32 %v5449, %v5520
        %v5674 = vmul.f32 %v5450, %v5525
        %v5675 = vmul.f32 %v5451, %v5530
        %v5676 = vmul.f32 %v5452, %v5535
        %v5677 = vmul.f32 %v5453, %v5540
        %v5678 = vmul.f32 %v5454, %v5545
        %v5679 = vmul.f32 %v5455, %v5550
        %v5680 = vmul.f32 %v5456, %v5555
        %v5681 = vmul.f32 %v5457, %v5560
        %v5682 = vmul.f32 %v5458, %v5565
        %v5683 = vmul.f32 %v5459, %v5570
        %v5684 = vmul.f32 %v5460, %v5575
        %v5685 = vmul.f32 %v5461, %v5580
        %v5686 = vmul.f32 %v5462, %v5585
        %v5687 = vmul.f32 %v5463, %v5590
        %v5688 = vmul.f32 %v5464, %v5595
        %v5689 = vmul.f32 %v5465, %v5600
        %v5690 = vmul.f32 %v5466, %v5605
        %v5691 = vmul.f32 %v5467, %v5610
        %v5692 = vmul.f32 %v5468, %v5615
        %v5693 = vmul.f32 %v5469, %v5620
        %v5694 = vmul.f32 %v5470, %v5625
        %v5695 = vmul.f32 %v5471, %v5630
        %v5696 = vmul.f32 %v5472, %v5635
        %v5697 = vmul.f32 %v5473, %v5640
        %v5698 = vmul.f32 %v5474, %v5645
        %v5699 = vmul.f32 %v5475, %v5650
        %v5700 = vmul.f32 %v5476, %v5655
        %v5701 = vmul.f32 %v5477, %v5660
        %v5702 = vmul.f32 %v5478, %v5665
        %v5703 = vmul.f32 %v5479, %v5670
        %v5704 = vld [vmem:[%s6] sm:$0x1]
        %v5706 = vlaneseq
        %v5707 = vshrl.u32 %v5706, 7
        %v5708 = vsub.s32 0, %v5707
        %v5709 = vrot.slane %v5704, %v5708
        %v5711 = vadd.f32 %v5672, %v5709
        %v5712 = vadd.f32 %v5673, %v5709
        %v5713 = vadd.f32 %v5674, %v5709
        %v5714 = vadd.f32 %v5675, %v5709
        %v5715 = vadd.f32 %v5676, %v5709
        %v5716 = vadd.f32 %v5677, %v5709
        %v5717 = vadd.f32 %v5678, %v5709
        %v5718 = vadd.f32 %v5679, %v5709
        %v5719 = vadd.f32 %v5680, %v5709
        %v5720 = vadd.f32 %v5681, %v5709
        %v5721 = vadd.f32 %v5682, %v5709
        %v5722 = vadd.f32 %v5683, %v5709
        %v5723 = vadd.f32 %v5684, %v5709
        %v5724 = vadd.f32 %v5685, %v5709
        %v5725 = vadd.f32 %v5686, %v5709
        %v5726 = vadd.f32 %v5687, %v5709
        %v5727 = vadd.f32 %v5688, %v5709
        %v5728 = vadd.f32 %v5689, %v5709
        %v5729 = vadd.f32 %v5690, %v5709
        %v5730 = vadd.f32 %v5691, %v5709
        %v5731 = vadd.f32 %v5692, %v5709
        %v5732 = vadd.f32 %v5693, %v5709
        %v5733 = vadd.f32 %v5694, %v5709
        %v5734 = vadd.f32 %v5695, %v5709
        %v5735 = vadd.f32 %v5696, %v5709
        %v5736 = vadd.f32 %v5697, %v5709
        %v5737 = vadd.f32 %v5698, %v5709
        %v5738 = vadd.f32 %v5699, %v5709
        %v5739 = vadd.f32 %v5700, %v5709
        %v5740 = vadd.f32 %v5701, %v5709
        %v5741 = vadd.f32 %v5702, %v5709
        %v5742 = vadd.f32 %v5703, %v5709
        %v5743 = vld [vmem:[%s392] sm:$0xff]
        %v5744 = vld [vmem:[%s392 + $0x8] sm:$0xff]
        %v5745 = vld [vmem:[%s392 + $0x10] sm:$0xff]
        %v5746 = vld [vmem:[%s392 + $0x18] sm:$0xff]
        %v5747 = vld [vmem:[%s392 + $0x20] sm:$0xff]
        %v5748 = vld [vmem:[%s392 + $0x28] sm:$0xff]
        %v5749 = vld [vmem:[%s392 + $0x30] sm:$0xff]
        %v5750 = vld [vmem:[%s392 + $0x38] sm:$0xff]
        %v5751 = vld [vmem:[%s392 + $0x40] sm:$0xff]
        %v5752 = vld [vmem:[%s392 + $0x48] sm:$0xff]
        %v5753 = vld [vmem:[%s392 + $0x50] sm:$0xff]
        %v5754 = vld [vmem:[%s392 + $0x58] sm:$0xff]
        %v5755 = vld [vmem:[%s392 + $0x60] sm:$0xff]
        %v5756 = vld [vmem:[%s392 + $0x68] sm:$0xff]
        %v5757 = vld [vmem:[%s392 + $0x70] sm:$0xff]
        %v5758 = vld [vmem:[%s392 + $0x78] sm:$0xff]
        %v5759 = vld [vmem:[%s392 + $0x80] sm:$0xff]
        %v5760 = vld [vmem:[%s392 + $0x88] sm:$0xff]
        %v5761 = vld [vmem:[%s392 + $0x90] sm:$0xff]
        %v5762 = vld [vmem:[%s392 + $0x98] sm:$0xff]
        %v5763 = vld [vmem:[%s392 + $0xa0] sm:$0xff]
        %v5764 = vld [vmem:[%s392 + $0xa8] sm:$0xff]
        %v5765 = vld [vmem:[%s392 + $0xb0] sm:$0xff]
        %v5766 = vld [vmem:[%s392 + $0xb8] sm:$0xff]
        %v5767 = vld [vmem:[%s392 + $0xc0] sm:$0xff]
        %v5768 = vld [vmem:[%s392 + $0xc8] sm:$0xff]
        %v5769 = vld [vmem:[%s392 + $0xd0] sm:$0xff]
        %v5770 = vld [vmem:[%s392 + $0xd8] sm:$0xff]
        %v5771 = vld [vmem:[%s392 + $0xe0] sm:$0xff]
        %v5772 = vld [vmem:[%s392 + $0xe8] sm:$0xff]
        %v5773 = vld [vmem:[%s392 + $0xf0] sm:$0xff]
        %v5774 = vld [vmem:[%s392 + $0xf8] sm:$0xff]
        %v5775 = vadd.f32 %v5743, %v5711
        %v5776 = vadd.f32 %v5744, %v5712
        %v5777 = vadd.f32 %v5745, %v5713
        %v5778 = vadd.f32 %v5746, %v5714
        %v5779 = vadd.f32 %v5747, %v5715
        %v5780 = vadd.f32 %v5748, %v5716
        %v5781 = vadd.f32 %v5749, %v5717
        %v5782 = vadd.f32 %v5750, %v5718
        %v5783 = vadd.f32 %v5751, %v5719
        %v5784 = vadd.f32 %v5752, %v5720
        %v5785 = vadd.f32 %v5753, %v5721
        %v5786 = vadd.f32 %v5754, %v5722
        %v5787 = vadd.f32 %v5755, %v5723
        %v5788 = vadd.f32 %v5756, %v5724
        %v5789 = vadd.f32 %v5757, %v5725
        %v5790 = vadd.f32 %v5758, %v5726
        %v5791 = vadd.f32 %v5759, %v5727
        %v5792 = vadd.f32 %v5760, %v5728
        %v5793 = vadd.f32 %v5761, %v5729
        %v5794 = vadd.f32 %v5762, %v5730
        %v5795 = vadd.f32 %v5763, %v5731
        %v5796 = vadd.f32 %v5764, %v5732
        %v5797 = vadd.f32 %v5765, %v5733
        %v5798 = vadd.f32 %v5766, %v5734
        %v5799 = vadd.f32 %v5767, %v5735
        %v5800 = vadd.f32 %v5768, %v5736
        %v5801 = vadd.f32 %v5769, %v5737
        %v5802 = vadd.f32 %v5770, %v5738
        %v5803 = vadd.f32 %v5771, %v5739
        %v5804 = vadd.f32 %v5772, %v5740
        %v5805 = vadd.f32 %v5773, %v5741
        %v5806 = vadd.f32 %v5774, %v5742
        %5807 = vst [vmem:[%s355] sm:$0xff] %v5775
        %5808 = vst [vmem:[%s355 + $0x8] sm:$0xff] %v5776
        %5809 = vst [vmem:[%s355 + $0x10] sm:$0xff] %v5777
        %5810 = vst [vmem:[%s355 + $0x18] sm:$0xff] %v5778
        %5811 = vst [vmem:[%s355 + $0x20] sm:$0xff] %v5779
        %5812 = vst [vmem:[%s355 + $0x28] sm:$0xff] %v5780
        %5813 = vst [vmem:[%s355 + $0x30] sm:$0xff] %v5781
        %5814 = vst [vmem:[%s355 + $0x38] sm:$0xff] %v5782
        %5815 = vst [vmem:[%s355 + $0x40] sm:$0xff] %v5783
        %5816 = vst [vmem:[%s355 + $0x48] sm:$0xff] %v5784
        %5817 = vst [vmem:[%s355 + $0x50] sm:$0xff] %v5785
        %5818 = vst [vmem:[%s355 + $0x58] sm:$0xff] %v5786
        %5819 = vst [vmem:[%s355 + $0x60] sm:$0xff] %v5787
        %5820 = vst [vmem:[%s355 + $0x68] sm:$0xff] %v5788
        %5821 = vst [vmem:[%s355 + $0x70] sm:$0xff] %v5789
        %5822 = vst [vmem:[%s355 + $0x78] sm:$0xff] %v5790
        %5823 = vst [vmem:[%s355 + $0x80] sm:$0xff] %v5791
        %5824 = vst [vmem:[%s355 + $0x88] sm:$0xff] %v5792
        %5825 = vst [vmem:[%s355 + $0x90] sm:$0xff] %v5793
        %5826 = vst [vmem:[%s355 + $0x98] sm:$0xff] %v5794
        %5827 = vst [vmem:[%s355 + $0xa0] sm:$0xff] %v5795
        %5828 = vst [vmem:[%s355 + $0xa8] sm:$0xff] %v5796
        %5829 = vst [vmem:[%s355 + $0xb0] sm:$0xff] %v5797
        %5830 = vst [vmem:[%s355 + $0xb8] sm:$0xff] %v5798
        %5831 = vst [vmem:[%s355 + $0xc0] sm:$0xff] %v5799
        %5832 = vst [vmem:[%s355 + $0xc8] sm:$0xff] %v5800
        %5833 = vst [vmem:[%s355 + $0xd0] sm:$0xff] %v5801
        %5834 = vst [vmem:[%s355 + $0xd8] sm:$0xff] %v5802
        %5835 = vst [vmem:[%s355 + $0xe0] sm:$0xff] %v5803
        %5836 = vst [vmem:[%s355 + $0xe8] sm:$0xff] %v5804
        %5837 = vst [vmem:[%s355 + $0xf0] sm:$0xff] %v5805
        %5838 = vst [vmem:[%s355 + $0xf8] sm:$0xff] %v5806
        %s5839 = sand.u32 %s192, 1
        %s5840 = scalar_lea.sflag [#allocation4], %s5839
        %s5841 = sand.u32 %s192, 1
        %s5842 = smul.addr %s5841, 256
        %s5843 = scalar_lea.vmem [#allocation5], %s5842
        // Predicated region
        $region53: #{tpu_custom_call.1} parent=47 // pred_check
          %p5844 = pneg %p202
        $region54: #{tpu_custom_call.1} parent=47 // pred_check_branch
          %5846 = sbr.rel (%p5844) target = $region56
        $region55: #{tpu_custom_call.1} parent=47 // pred_region
          %s5847 = smul.u32 32, %s22
          %s5848 = ssub.s32 38, %s5847
          %p5849 = scmp.lt.s32.totalorder %s5848, 32
          %s5850 = scalar_select %p5849, %s5848, 32
          %s5851 = smul.u32 128, %s5850
          %s5853 = ssub.s32 4096, %s5851
          %5854 = vsyncadd %s5840, %s5853
          %p5855 = scmp.ne.s32.totalorder 0, %s5851
          %s5856 = smul.addr %s5847, 128
          %s5857 = scalar_lea.hbm %s7, %s5856
          %s5858 = smul.u32 8, %s5850
          %s5859 = sshll.u32 %s5843, 4
          %s5860 = int_to_ptr.vmem [resolvable:$true] %s5859
          %s5861 = sshll.u32 %s5858, 4
          %5865 = dma.vmem_to_hbm [thread:$0]  (%p5855), %s5860, %s5861, %s5857, %s5840, 128, 128, 8
        $region56: #{tpu_custom_call.1} parent=47 // pred_fallthru
          _
      $region48: #{tpu_custom_call.1} parent=5 // pred_fallthru
        _
      %p5866 = scmp.le.s32.totalorder 2, %s17
      // Predicated region
      $region57: #{tpu_custom_call.1} parent=5 // pred_check
        %p5867 = pneg %p5866
      $region58: #{tpu_custom_call.1} parent=5 // pred_check_branch
        %5869 = sbr.rel (%p5867) target = $region60
      $region59: #{tpu_custom_call.1} parent=5 // pred_region
        %s5870 = ssub.s32 %s17, 2
        // Predicated region
        $region61: #{tpu_custom_call.1} parent=59 // pred_check
          %p5871 = pneg %p208
        $region62: #{tpu_custom_call.1} parent=59 // pred_check_branch
          %5873 = sbr.rel (%p5871) target = $region64
        $region63: #{tpu_custom_call.1} parent=59 // pred_region
          %s5874 = sand.u32 %s193, 1
          %s5875 = scalar_lea.sflag [#allocation4], %s5874
          %s5876 = sand.u32 %s193, 1
          %s5877 = smul.addr %s5876, 256
          %s5878 = scalar_lea.vmem [#allocation5], %s5877
          %5879 = dma.done %s5875, 4096
        $region64: #{tpu_custom_call.1} parent=59 // pred_fallthru
          _
      $region60: #{tpu_custom_call.1} parent=5 // pred_fallthru
        _
    $region6: #{tpu_custom_call.1} parent=1 // loop_footer
      %s21 = sadd.s32 1, %s17
    $region7: #{tpu_custom_call.1} parent=1 // loop_footer_branch
      %16 = sbr.rel target = $region3
    $region8: #{tpu_custom_call.1} parent=1 // loop_exit
      _
    %5880 = vsyncpa [#allocation3], 1
    %s5881 = scalar_lea.sflag [#allocation3], 1
    %5882 = vsyncpa %s5881, 1
    %5883 = vsyncpa [#allocation4], 1
    %s5884 = scalar_lea.sflag [#allocation4], 1
    %5885 = vsyncpa %s5884, 1

</llo_original>
